<compile_context>
chip_gen: v7x
topology: tpu7x:2x2x1
jax: 0.10.0
libtpu: 0.0.40
codegen_flags: <defaults>
</compile_context>

<pallas_src>
import functools
import math

import jax
import jax.numpy as jnp
from jax.experimental import pallas as pl
from jax.experimental.pallas import tpu as pltpu


# ----------------------------------------------------------------------------
# Pallas kernels
# ----------------------------------------------------------------------------
def _stage_kernel(adj_ref, x_ref, w_conv_ref, b_conv_ref, w_sc_ref, b_sc_ref,
                  h_ref, s_ref, *readout_refs, batch: int, with_readout: bool):
    """One stage for the whole batch (no grid):

      (optional) readout of the incoming (already pooled) x:  max / mean over nodes
      h     = relu( [mean_nb(x) | x] @ [W_l ; W_r] + b )        (SAGEConv)
      score = [sum_nb(h) | h] @ [W_rel ; W_root] + b_rel        (SAGPool GraphConv)
    """
    for b in range(batch):                               # B is tiny & static -> unrolled
        adj = adj_ref[b]                                 # (N, N)
        x = x_ref[b]                                     # (N, Cin)

        if with_readout:
            mx_ref, mn_ref = readout_refs
            mx_ref[b] = jnp.max(x, axis=0, keepdims=True).astype(mx_ref.dtype)
            mn_ref[b] = jnp.mean(x, axis=0, keepdims=True).astype(mn_ref.dtype)

        # SAGEConv (mean aggregation): scale AFTER the matmul.
        deg = jnp.sum(adj, axis=-1, keepdims=True)       # (N, 1)
        inv_deg = 1.0 / jnp.maximum(deg, 1.0)            # exact (no approx recip)
        agg = jnp.dot(adj, x, preferred_element_type=jnp.float32) * inv_deg
        cat = jnp.concatenate([agg, x], axis=-1)         # (N, 2*Cin)
        h = (jnp.dot(cat, w_conv_ref[...], preferred_element_type=jnp.float32)
             + b_conv_ref[...])
        h = jnp.maximum(h, 0.0)                          # ReLU
        h_ref[b] = h.astype(h_ref.dtype)

        # SAGPool score layer: GraphConv(H, 1), SUM aggregation, no activation.
        agg_s = jnp.dot(adj, h, preferred_element_type=jnp.float32)
        cat_s = jnp.concatenate([agg_s, h], axis=-1)     # (N, 2*H)
        s = (jnp.dot(cat_s, w_sc_ref[...], preferred_element_type=jnp.float32)
             + b_sc_ref[...])                            # (N, 1)
        s_ref[b] = s.astype(s_ref.dtype)


def _head_kernel(x_ref, mx1_ref, mn1_ref, mx2_ref, mn2_ref,
                 w1m_ref, w1n_ref, b1_ref, w2_ref, b2_ref, w3_ref, b3_ref,
                 o_ref, *, batch: int):
    """Readout of the last pooled x + x1+x2+x3 accumulation + MLP head.

    lin1's weight is pre-split into the rows that multiply the max-pool part
    (w1m) and the mean-pool part (w1n), so the [max || mean] lane concat is
    never materialized.
    """
    mx_parts, mn_parts = [], []
    for b in range(batch):
        xb = x_ref[b]                                    # (k3, H)
        mx_parts.append(jnp.max(xb, axis=0, keepdims=True))
        mn_parts.append(jnp.mean(xb, axis=0, keepdims=True))
    mx3 = jnp.concatenate(mx_parts, axis=0)              # (B, H)
    mn3 = jnp.concatenate(mn_parts, axis=0)              # (B, H)

    msum = mx1_ref[...] + mx2_ref[...] + mx3             # sum of the max halves
    nsum = mn1_ref[...] + mn2_ref[...] + mn3             # sum of the mean halves

    h = jnp.maximum(
        jnp.dot(msum, w1m_ref[...], preferred_element_type=jnp.float32)
        + jnp.dot(nsum, w1n_ref[...], preferred_element_type=jnp.float32)
        + b1_ref[...], 0.0)
    # F.dropout(p, training=False) is identity (eval mode).
    h = jnp.maximum(
        jnp.dot(h, w2_ref[...], preferred_element_type=jnp.float32) + b2_ref[...],
        0.0)
    o_ref[...] = (jnp.dot(h, w3_ref[...], preferred_element_type=jnp.float32)
                  + b3_ref[...]).astype(o_ref.dtype)


# ----------------------------------------------------------------------------
# Pallas wrappers (whole batch per call, whole arrays resident in VMEM)
# ----------------------------------------------------------------------------
def stage(adj, x, conv_p, score_p, *, with_readout: bool):
    B, N, Cin = x.shape
    H = conv_p["w_nb"].shape[1]
    # Merge neighbor/root transforms into a single K-concatenated weight.
    w_conv = jnp.concatenate([conv_p["w_nb"], conv_p["w_root"]], axis=0)   # (2Cin, H)
    w_sc = jnp.concatenate([score_p["w_nb"], score_p["w_root"]], axis=0)   # (2H, 1)

    out_shapes = [jax.ShapeDtypeStruct((B, N, H), x.dtype),                # h
                  jax.ShapeDtypeStruct((B, N, 1), x.dtype)]                # score
    if with_readout:
        out_shapes += [jax.ShapeDtypeStruct((B, 1, Cin), x.dtype),         # max pool
                       jax.ShapeDtypeStruct((B, 1, Cin), x.dtype)]         # mean pool

    kern = functools.partial(_stage_kernel, batch=B, with_readout=with_readout)
    return pl.pallas_call(kern, out_shape=tuple(out_shapes))(
        adj, x, w_conv, conv_p["b"], w_sc, score_p["b"])


def mlp_head(x3, mx1, mn1, mx2, mn2, p):
    B, _, H = x3.shape
    w1m, w1n = p["w1"][:H], p["w1"][H:]                  # split lin1 (max/mean halves)
    kern = functools.partial(_head_kernel, batch=B)
    return pl.pallas_call(
        kern, out_shape=jax.ShapeDtypeStruct((B, 1), x3.dtype),
    )(x3, mx1, mn1, mx2, mn2, w1m, w1n, p["b1"], p["w2"], p["b2"], p["w3"], p["b3"])


# ----------------------------------------------------------------------------
# SAGPool top-k / gather glue (JAX)
# ----------------------------------------------------------------------------
def topk_pool(adj, x, score, ratio):
    """score: (B, N). Returns pooled (adj_new, x_new) with k = ceil(ratio*N)."""
    B, N, H = x.shape
    k = max(int(math.ceil(ratio * N)), 1)
    # TODO(synk): per-graph top-k node selection & edge filtering are
    # data-dependent gathers with no clean static Pallas equivalent; kept in JAX.
    top_scores, idx = jax.lax.top_k(score, k)                         # (B, k)
    x_sel = jnp.take_along_axis(x, idx[:, :, None], axis=1)           # (B, k, H)
    x_new = x_sel * jnp.tanh(top_scores)[:, :, None]                  # SAGPool gating
    adj_rows = jnp.take_along_axis(adj, idx[:, :, None], axis=1)      # (B, k, N)
    adj_new = jnp.take_along_axis(adj_rows, idx[:, None, :], axis=2)  # (B, k, k)
    return adj_new, x_new


# ----------------------------------------------------------------------------
# Parameter init (deterministic, torch.nn.Linear-style uniform bounds)
# ----------------------------------------------------------------------------
def _linear_params(key, fan_in, fan_out, bias=True):
    kw, kb = jax.random.split(key)
    bound = 1.0 / math.sqrt(fan_in)
    w = jax.random.uniform(kw, (fan_in, fan_out), jnp.float32, -bound, bound)
    if bias:
        b = jax.random.uniform(kb, (1, fan_out), jnp.float32, -bound, bound)
    else:
        b = jnp.zeros((1, fan_out), jnp.float32)
    return w, b


def init_params(key, num_features, nhid):
    keys = jax.random.split(key, 16)
    params = {}

    def sage(k, cin, cout):
        # SAGEConv: lin_l (mean-aggregated neighbours, has bias), lin_r (root, no bias)
        wl, bl = _linear_params(k, cin, cout, bias=True)
        wr, _ = _linear_params(jax.random.fold_in(k, 1), cin, cout, bias=False)
        return {"w_nb": wl, "w_root": wr, "b": bl}

    def gconv_score(k, cin):
        # GraphConv(cin, 1): lin_rel (sum-aggregated, has bias), lin_root (no bias)
        wrel, brel = _linear_params(k, cin, 1, bias=True)
        wroot, _ = _linear_params(jax.random.fold_in(k, 1), cin, 1, bias=False)
        return {"w_nb": wrel, "w_root": wroot, "b": brel}

    params["conv1"] = sage(keys[0], num_features, nhid)
    params["pool1"] = gconv_score(keys[1], nhid)
    params["conv2"] = sage(keys[2], nhid, nhid)
    params["pool2"] = gconv_score(keys[3], nhid)
    params["conv3"] = sage(keys[4], nhid, nhid)
    params["pool3"] = gconv_score(keys[5], nhid)

    w1, b1 = _linear_params(keys[6], nhid * 2, nhid)
    w2, b2 = _linear_params(keys[7], nhid, nhid // 2)
    w3, b3 = _linear_params(keys[8], nhid // 2, 1)
    params["mlp"] = {"w1": w1, "b1": b1, "w2": w2, "b2": b2, "w3": w3, "b3": b3}
    return params


# ----------------------------------------------------------------------------
# Full forward pass (eval mode) — 4 Pallas launches total
# ----------------------------------------------------------------------------
def net_forward(params, x, adj, *, pooling_ratio):
    # Stage 1: conv1 + pool1 score (fused); pool in JAX.
    h1, s1 = stage(adj, x, params["conv1"], params["pool1"], with_readout=False)
    adj1, xp1 = topk_pool(adj, h1, s1[..., 0], pooling_ratio)

    # Stage 2: readout(xp1) + conv2 + pool2 score (fused).
    h2, s2, mx1, mn1 = stage(adj1, xp1, params["conv2"], params["pool2"],
                             with_readout=True)
    adj2, xp2 = topk_pool(adj1, h2, s2[..., 0], pooling_ratio)

    # Stage 3: readout(xp2) + conv3 + pool3 score (fused).
    h3, s3, mx2, mn2 = stage(adj2, xp2, params["conv3"], params["pool3"],
                             with_readout=True)
    _, xp3 = topk_pool(adj2, h3, s3[..., 0], pooling_ratio)

    # Final: readout(xp3) + x1+x2+x3 + MLP head (fused).
    return mlp_head(xp3, mx1[:, 0], mn1[:, 0], mx2[:, 0], mn2[:, 0],
                    params["mlp"])                                    # (B, 1)


# ----------------------------------------------------------------------------
if __name__ == "__main__":
    # args-equivalent config
    num_features = 8
    nhid = 32
    num_classes = 2          # unused by forward (lin3 outputs 1), kept for parity
    pooling_ratio = 0.5
    dropout_ratio = 0.5      # eval mode -> identity

    B, N = 2, 16             # B graphs, N nodes per graph

    key = jax.random.PRNGKey(0)
    k_x, k_adj, k_par = jax.random.split(key, 3)

    x = jax.random.normal(k_x, (B, N, num_features), jnp.float32)
    adj = jax.random.bernoulli(k_adj, 0.3, (B, N, N)).astype(jnp.float32)
    adj = adj * (1.0 - jnp.eye(N, dtype=jnp.float32))   # drop self-loops

    params = init_params(k_par, num_features, nhid)

    fwd = jax.jit(functools.partial(net_forward, pooling_ratio=pooling_ratio))
    out = fwd(params, x, adj)
    jax.block_until_ready(out)

    assert out.shape == (B, 1), out.shape
    assert jnp.all(jnp.isfinite(out))
    print("KERNEL_OK")
</pallas_src>

<mosaic_0001>
module attributes {stable_mosaic.version = 11 : i64} {
  func.func @_stage_kernel(%arg0: memref<2x16x16xf32, #tpu.memory_space<vmem>>, %arg1: memref<2x16x8xf32, #tpu.memory_space<vmem>>, %arg2: memref<16x32xf32, #tpu.memory_space<vmem>>, %arg3: memref<1x32xf32, #tpu.memory_space<vmem>>, %arg4: memref<64x1xf32, #tpu.memory_space<vmem>>, %arg5: memref<1x1xf32, #tpu.memory_space<vmem>>, %arg6: memref<2x16x32xf32, #tpu.memory_space<vmem>>, %arg7: memref<2x16x1xf32, #tpu.memory_space<vmem>>) attributes {dimension_semantics = [], scalar_prefetch = 0 : i64, scratch_operands = 0 : i64, tpu.core_type = #tpu.core_type<tc>} {
    %c0 = arith.constant 0 : index
    %c0_0 = arith.constant 0 : index
    %c0_1 = arith.constant 0 : index
    %0 = vector.load %arg0[%c0, %c0_0, %c0_1] : memref<2x16x16xf32, #tpu.memory_space<vmem>>, vector<1x16x16xf32>
    %1 = vector.shape_cast %0 : vector<1x16x16xf32> to vector<16x16xf32>
    %c0_2 = arith.constant 0 : index
    %c0_3 = arith.constant 0 : index
    %c0_4 = arith.constant 0 : index
    %2 = vector.load %arg1[%c0_2, %c0_3, %c0_4] : memref<2x16x8xf32, #tpu.memory_space<vmem>>, vector<1x16x8xf32>
    %3 = vector.shape_cast %2 : vector<1x16x8xf32> to vector<16x8xf32>
    %cst = arith.constant dense<0.000000e+00> : vector<16xf32>
    %4 = vector.multi_reduction <add>, %1, %cst [1] : vector<16x16xf32> to vector<16xf32>
    %5 = vector.shape_cast %4 : vector<16xf32> to vector<16x1xf32>
    %cst_5 = arith.constant 1.000000e+00 : f32
    %6 = vector.broadcast %cst_5 : f32 to vector<16x1xf32>
    %7 = arith.maximumf %5, %6 : vector<16x1xf32>
    %cst_6 = arith.constant 1.000000e+00 : f32
    %8 = vector.broadcast %cst_6 : f32 to vector<16x1xf32>
    %9 = arith.divf %8, %7 : vector<16x1xf32>
    %cst_7 = arith.constant dense<0.000000e+00> : vector<16x8xf32>
    %10 = tpu.matmul %1, %3, %cst_7 {dimension_numbers = #tpu.dot_dimension_numbers<[1], [0], [0], [1], [0, 0, 1, 1], [], []>} : vector<16x16xf32>, vector<16x8xf32>, vector<16x8xf32> -> vector<16x8xf32>
    %11 = vector.broadcast %9 : vector<16x1xf32> to vector<16x8xf32>
    %12 = arith.mulf %10, %11 : vector<16x8xf32>
    %13 = tpu.concatenate %12, %3 in 1 : vector<16x8xf32>, vector<16x8xf32> -> vector<16x16xf32>
    %c0_8 = arith.constant 0 : index
    %c0_9 = arith.constant 0 : index
    %14 = vector.load %arg2[%c0_8, %c0_9] : memref<16x32xf32, #tpu.memory_space<vmem>>, vector<16x32xf32>
    %cst_10 = arith.constant dense<0.000000e+00> : vector<16x32xf32>
    %15 = tpu.matmul %13, %14, %cst_10 {dimension_numbers = #tpu.dot_dimension_numbers<[1], [0], [0], [1], [0, 0, 1, 1], [], []>} : vector<16x16xf32>, vector<16x32xf32>, vector<16x32xf32> -> vector<16x32xf32>
    %c0_11 = arith.constant 0 : index
    %c0_12 = arith.constant 0 : index
    %16 = vector.load %arg3[%c0_11, %c0_12] : memref<1x32xf32, #tpu.memory_space<vmem>>, vector<1x32xf32>
    %17 = vector.broadcast %16 : vector<1x32xf32> to vector<16x32xf32>
    %18 = arith.addf %15, %17 : vector<16x32xf32>
    %cst_13 = arith.constant 0.000000e+00 : f32
    %19 = vector.broadcast %cst_13 : f32 to vector<16x32xf32>
    %20 = arith.maximumf %18, %19 : vector<16x32xf32>
    %c0_14 = arith.constant 0 : index
    %c0_15 = arith.constant 0 : index
    %c0_16 = arith.constant 0 : index
    %21 = vector.load %arg6[%c0_14, %c0_15, %c0_16] : memref<2x16x32xf32, #tpu.memory_space<vmem>>, vector<1x16x32xf32>
    %22 = vector.shape_cast %21 : vector<1x16x32xf32> to vector<16x32xf32>
    %23 = vector.shape_cast %20 : vector<16x32xf32> to vector<1x16x32xf32>
    tpu.vector_store %arg6[%c0_14, %c0_15, %c0_16], %23 {strides = array<i32>} : memref<2x16x32xf32, #tpu.memory_space<vmem>>, vector<1x16x32xf32>,
    %cst_17 = arith.constant dense<0.000000e+00> : vector<16x32xf32>
    %24 = tpu.matmul %1, %20, %cst_17 {dimension_numbers = #tpu.dot_dimension_numbers<[1], [0], [0], [1], [0, 0, 1, 1], [], []>} : vector<16x16xf32>, vector<16x32xf32>, vector<16x32xf32> -> vector<16x32xf32>
    %25 = tpu.concatenate %24, %20 in 1 : vector<16x32xf32>, vector<16x32xf32> -> vector<16x64xf32>
    %c0_18 = arith.constant 0 : index
    %c0_19 = arith.constant 0 : index
    %26 = vector.load %arg4[%c0_18, %c0_19] : memref<64x1xf32, #tpu.memory_space<vmem>>, vector<64x1xf32>
    %cst_20 = arith.constant dense<0.000000e+00> : vector<16x1xf32>
    %27 = tpu.matmul %25, %26, %cst_20 {dimension_numbers = #tpu.dot_dimension_numbers<[1], [0], [0], [1], [0, 0, 1, 1], [], []>} : vector<16x64xf32>, vector<64x1xf32>, vector<16x1xf32> -> vector<16x1xf32>
    %c0_21 = arith.constant 0 : index
    %c0_22 = arith.constant 0 : index
    %28 = vector.load %arg5[%c0_21, %c0_22] : memref<1x1xf32, #tpu.memory_space<vmem>>, vector<1x1xf32>
    %29 = vector.broadcast %28 : vector<1x1xf32> to vector<16x1xf32>
    %30 = arith.addf %27, %29 : vector<16x1xf32>
    %c0_23 = arith.constant 0 : index
    %c0_24 = arith.constant 0 : index
    %c0_25 = arith.constant 0 : index
    %31 = vector.load %arg7[%c0_23, %c0_24, %c0_25] : memref<2x16x1xf32, #tpu.memory_space<vmem>>, vector<1x16x1xf32>
    %32 = vector.shape_cast %31 : vector<1x16x1xf32> to vector<16x1xf32>
    %33 = vector.shape_cast %30 : vector<16x1xf32> to vector<1x16x1xf32>
    tpu.vector_store %arg7[%c0_23, %c0_24, %c0_25], %33 {strides = array<i32>} : memref<2x16x1xf32, #tpu.memory_space<vmem>>, vector<1x16x1xf32>,
    %c1 = arith.constant 1 : index
    %c0_26 = arith.constant 0 : index
    %c0_27 = arith.constant 0 : index
    %34 = vector.load %arg0[%c1, %c0_26, %c0_27] : memref<2x16x16xf32, #tpu.memory_space<vmem>>, vector<1x16x16xf32>
    %35 = vector.shape_cast %34 : vector<1x16x16xf32> to vector<16x16xf32>
    %c1_28 = arith.constant 1 : index
    %c0_29 = arith.constant 0 : index
    %c0_30 = arith.constant 0 : index
    %36 = vector.load %arg1[%c1_28, %c0_29, %c0_30] : memref<2x16x8xf32, #tpu.memory_space<vmem>>, vector<1x16x8xf32>
    %37 = vector.shape_cast %36 : vector<1x16x8xf32> to vector<16x8xf32>
    %cst_31 = arith.constant dense<0.000000e+00> : vector<16xf32>
    %38 = vector.multi_reduction <add>, %35, %cst_31 [1] : vector<16x16xf32> to vector<16xf32>
    %39 = vector.shape_cast %38 : vector<16xf32> to vector<16x1xf32>
    %cst_32 = arith.constant 1.000000e+00 : f32
    %40 = vector.broadcast %cst_32 : f32 to vector<16x1xf32>
    %41 = arith.maximumf %39, %40 : vector<16x1xf32>
    %cst_33 = arith.constant 1.000000e+00 : f32
    %42 = vector.broadcast %cst_33 : f32 to vector<16x1xf32>
    %43 = arith.divf %42, %41 : vector<16x1xf32>
    %cst_34 = arith.constant dense<0.000000e+00> : vector<16x8xf32>
    %44 = tpu.matmul %35, %37, %cst_34 {dimension_numbers = #tpu.dot_dimension_numbers<[1], [0], [0], [1], [0, 0, 1, 1], [], []>} : vector<16x16xf32>, vector<16x8xf32>, vector<16x8xf32> -> vector<16x8xf32>
    %45 = vector.broadcast %43 : vector<16x1xf32> to vector<16x8xf32>
    %46 = arith.mulf %44, %45 : vector<16x8xf32>
    %47 = tpu.concatenate %46, %37 in 1 : vector<16x8xf32>, vector<16x8xf32> -> vector<16x16xf32>
    %c0_35 = arith.constant 0 : index
    %c0_36 = arith.constant 0 : index
    %48 = vector.load %arg2[%c0_35, %c0_36] : memref<16x32xf32, #tpu.memory_space<vmem>>, vector<16x32xf32>
    %cst_37 = arith.constant dense<0.000000e+00> : vector<16x32xf32>
    %49 = tpu.matmul %47, %48, %cst_37 {dimension_numbers = #tpu.dot_dimension_numbers<[1], [0], [0], [1], [0, 0, 1, 1], [], []>} : vector<16x16xf32>, vector<16x32xf32>, vector<16x32xf32> -> vector<16x32xf32>
    %c0_38 = arith.constant 0 : index
    %c0_39 = arith.constant 0 : index
    %50 = vector.load %arg3[%c0_38, %c0_39] : memref<1x32xf32, #tpu.memory_space<vmem>>, vector<1x32xf32>
    %51 = vector.broadcast %50 : vector<1x32xf32> to vector<16x32xf32>
    %52 = arith.addf %49, %51 : vector<16x32xf32>
    %cst_40 = arith.constant 0.000000e+00 : f32
    %53 = vector.broadcast %cst_40 : f32 to vector<16x32xf32>
    %54 = arith.maximumf %52, %53 : vector<16x32xf32>
    %c1_41 = arith.constant 1 : index
    %c0_42 = arith.constant 0 : index
    %c0_43 = arith.constant 0 : index
    %55 = vector.load %arg6[%c1_41, %c0_42, %c0_43] : memref<2x16x32xf32, #tpu.memory_space<vmem>>, vector<1x16x32xf32>
    %56 = vector.shape_cast %55 : vector<1x16x32xf32> to vector<16x32xf32>
    %57 = vector.shape_cast %54 : vector<16x32xf32> to vector<1x16x32xf32>
    tpu.vector_store %arg6[%c1_41, %c0_42, %c0_43], %57 {strides = array<i32>} : memref<2x16x32xf32, #tpu.memory_space<vmem>>, vector<1x16x32xf32>,
    %cst_44 = arith.constant dense<0.000000e+00> : vector<16x32xf32>
    %58 = tpu.matmul %35, %54, %cst_44 {dimension_numbers = #tpu.dot_dimension_numbers<[1], [0], [0], [1], [0, 0, 1, 1], [], []>} : vector<16x16xf32>, vector<16x32xf32>, vector<16x32xf32> -> vector<16x32xf32>
    %59 = tpu.concatenate %58, %54 in 1 : vector<16x32xf32>, vector<16x32xf32> -> vector<16x64xf32>
    %c0_45 = arith.constant 0 : index
    %c0_46 = arith.constant 0 : index
    %60 = vector.load %arg4[%c0_45, %c0_46] : memref<64x1xf32, #tpu.memory_space<vmem>>, vector<64x1xf32>
    %cst_47 = arith.constant dense<0.000000e+00> : vector<16x1xf32>
    %61 = tpu.matmul %59, %60, %cst_47 {dimension_numbers = #tpu.dot_dimension_numbers<[1], [0], [0], [1], [0, 0, 1, 1], [], []>} : vector<16x64xf32>, vector<64x1xf32>, vector<16x1xf32> -> vector<16x1xf32>
    %c0_48 = arith.constant 0 : index
    %c0_49 = arith.constant 0 : index
    %62 = vector.load %arg5[%c0_48, %c0_49] : memref<1x1xf32, #tpu.memory_space<vmem>>, vector<1x1xf32>
    %63 = vector.broadcast %62 : vector<1x1xf32> to vector<16x1xf32>
    %64 = arith.addf %61, %63 : vector<16x1xf32>
    %c1_50 = arith.constant 1 : index
    %c0_51 = arith.constant 0 : index
    %c0_52 = arith.constant 0 : index
    %65 = vector.load %arg7[%c1_50, %c0_51, %c0_52] : memref<2x16x1xf32, #tpu.memory_space<vmem>>, vector<1x16x1xf32>
    %66 = vector.shape_cast %65 : vector<1x16x1xf32> to vector<16x1xf32>
    %67 = vector.shape_cast %64 : vector<16x1xf32> to vector<1x16x1xf32>
    tpu.vector_store %arg7[%c1_50, %c0_51, %c0_52], %67 {strides = array<i32>} : memref<2x16x1xf32, #tpu.memory_space<vmem>>, vector<1x16x1xf32>,
    return
  }
}

module attributes {stable_mosaic.version = 11 : i64} {
  func.func @_stage_kernel(%arg0: memref<2x8x8xf32, #tpu.memory_space<vmem>>, %arg1: memref<2x8x32xf32, #tpu.memory_space<vmem>>, %arg2: memref<64x32xf32, #tpu.memory_space<vmem>>, %arg3: memref<1x32xf32, #tpu.memory_space<vmem>>, %arg4: memref<64x1xf32, #tpu.memory_space<vmem>>, %arg5: memref<1x1xf32, #tpu.memory_space<vmem>>, %arg6: memref<2x8x32xf32, #tpu.memory_space<vmem>>, %arg7: memref<2x8x1xf32, #tpu.memory_space<vmem>>, %arg8: memref<2x1x32xf32, #tpu.memory_space<vmem>>, %arg9: memref<2x1x32xf32, #tpu.memory_space<vmem>>) attributes {dimension_semantics = [], scalar_prefetch = 0 : i64, scratch_operands = 0 : i64, tpu.core_type = #tpu.core_type<tc>} {
    %c0 = arith.constant 0 : index
    %c0_0 = arith.constant 0 : index
    %c0_1 = arith.constant 0 : index
    %0 = vector.load %arg0[%c0, %c0_0, %c0_1] : memref<2x8x8xf32, #tpu.memory_space<vmem>>, vector<1x8x8xf32>
    %1 = vector.shape_cast %0 : vector<1x8x8xf32> to vector<8x8xf32>
    %c0_2 = arith.constant 0 : index
    %c0_3 = arith.constant 0 : index
    %c0_4 = arith.constant 0 : index
    %2 = vector.load %arg1[%c0_2, %c0_3, %c0_4] : memref<2x8x32xf32, #tpu.memory_space<vmem>>, vector<1x8x32xf32>
    %3 = vector.shape_cast %2 : vector<1x8x32xf32> to vector<8x32xf32>
    %cst = arith.constant dense<0xFF800000> : vector<32xf32>
    %4 = vector.multi_reduction <maximumf>, %3, %cst [0] : vector<8x32xf32> to vector<32xf32>
    %5 = vector.shape_cast %4 : vector<32xf32> to vector<1x32xf32>
    %c0_5 = arith.constant 0 : index
    %c0_6 = arith.constant 0 : index
    %c0_7 = arith.constant 0 : index
    %6 = vector.load %arg8[%c0_5, %c0_6, %c0_7] : memref<2x1x32xf32, #tpu.memory_space<vmem>>, vector<1x1x32xf32>
    %7 = vector.shape_cast %6 : vector<1x1x32xf32> to vector<1x32xf32>
    %8 = vector.shape_cast %5 : vector<1x32xf32> to vector<1x1x32xf32>
    tpu.vector_store %arg8[%c0_5, %c0_6, %c0_7], %8 {strides = array<i32>} : memref<2x1x32xf32, #tpu.memory_space<vmem>>, vector<1x1x32xf32>,
    %cst_8 = arith.constant dense<0.000000e+00> : vector<32xf32>
    %9 = vector.multi_reduction <add>, %3, %cst_8 [0] : vector<8x32xf32> to vector<32xf32>
    %10 = vector.shape_cast %9 : vector<32xf32> to vector<1x32xf32>
    %cst_9 = arith.constant 8.000000e+00 : f32
    %11 = vector.broadcast %cst_9 : f32 to vector<1x32xf32>
    %12 = arith.divf %10, %11 : vector<1x32xf32>
    %c0_10 = arith.constant 0 : index
    %c0_11 = arith.constant 0 : index
    %c0_12 = arith.constant 0 : index
    %13 = vector.load %arg9[%c0_10, %c0_11, %c0_12] : memref<2x1x32xf32, #tpu.memory_space<vmem>>, vector<1x1x32xf32>
    %14 = vector.shape_cast %13 : vector<1x1x32xf32> to vector<1x32xf32>
    %15 = vector.shape_cast %12 : vector<1x32xf32> to vector<1x1x32xf32>
    tpu.vector_store %arg9[%c0_10, %c0_11, %c0_12], %15 {strides = array<i32>} : memref<2x1x32xf32, #tpu.memory_space<vmem>>, vector<1x1x32xf32>,
    %cst_13 = arith.constant dense<0.000000e+00> : vector<8xf32>
    %16 = vector.multi_reduction <add>, %1, %cst_13 [1] : vector<8x8xf32> to vector<8xf32>
    %17 = vector.shape_cast %16 : vector<8xf32> to vector<8x1xf32>
    %cst_14 = arith.constant 1.000000e+00 : f32
    %18 = vector.broadcast %cst_14 : f32 to vector<8x1xf32>
    %19 = arith.maximumf %17, %18 : vector<8x1xf32>
    %cst_15 = arith.constant 1.000000e+00 : f32
    %20 = vector.broadcast %cst_15 : f32 to vector<8x1xf32>
    %21 = arith.divf %20, %19 : vector<8x1xf32>
    %cst_16 = arith.constant dense<0.000000e+00> : vector<8x32xf32>
    %22 = tpu.matmul %1, %3, %cst_16 {dimension_numbers = #tpu.dot_dimension_numbers<[1], [0], [0], [1], [0, 0, 1, 1], [], []>} : vector<8x8xf32>, vector<8x32xf32>, vector<8x32xf32> -> vector<8x32xf32>
    %23 = vector.broadcast %21 : vector<8x1xf32> to vector<8x32xf32>
    %24 = arith.mulf %22, %23 : vector<8x32xf32>
    %25 = tpu.concatenate %24, %3 in 1 : vector<8x32xf32>, vector<8x32xf32> -> vector<8x64xf32>
    %c0_17 = arith.constant 0 : index
    %c0_18 = arith.constant 0 : index
    %26 = vector.load %arg2[%c0_17, %c0_18] : memref<64x32xf32, #tpu.memory_space<vmem>>, vector<64x32xf32>
    %cst_19 = arith.constant dense<0.000000e+00> : vector<8x32xf32>
    %27 = tpu.matmul %25, %26, %cst_19 {dimension_numbers = #tpu.dot_dimension_numbers<[1], [0], [0], [1], [0, 0, 1, 1], [], []>} : vector<8x64xf32>, vector<64x32xf32>, vector<8x32xf32> -> vector<8x32xf32>
    %c0_20 = arith.constant 0 : index
    %c0_21 = arith.constant 0 : index
    %28 = vector.load %arg3[%c0_20, %c0_21] : memref<1x32xf32, #tpu.memory_space<vmem>>, vector<1x32xf32>
    %29 = vector.broadcast %28 : vector<1x32xf32> to vector<8x32xf32>
    %30 = arith.addf %27, %29 : vector<8x32xf32>
    %cst_22 = arith.constant 0.000000e+00 : f32
    %31 = vector.broadcast %cst_22 : f32 to vector<8x32xf32>
    %32 = arith.maximumf %30, %31 : vector<8x32xf32>
    %c0_23 = arith.constant 0 : index
    %c0_24 = arith.constant 0 : index
    %c0_25 = arith.constant 0 : index
    %33 = vector.load %arg6[%c0_23, %c0_24, %c0_25] : memref<2x8x32xf32, #tpu.memory_space<vmem>>, vector<1x8x32xf32>
    %34 = vector.shape_cast %33 : vector<1x8x32xf32> to vector<8x32xf32>
    %35 = vector.shape_cast %32 : vector<8x32xf32> to vector<1x8x32xf32>
    tpu.vector_store %arg6[%c0_23, %c0_24, %c0_25], %35 {strides = array<i32>} : memref<2x8x32xf32, #tpu.memory_space<vmem>>, vector<1x8x32xf32>,
    %cst_26 = arith.constant dense<0.000000e+00> : vector<8x32xf32>
    %36 = tpu.matmul %1, %32, %cst_26 {dimension_numbers = #tpu.dot_dimension_numbers<[1], [0], [0], [1], [0, 0, 1, 1], [], []>} : vector<8x8xf32>, vector<8x32xf32>, vector<8x32xf32> -> vector<8x32xf32>
    %37 = tpu.concatenate %36, %32 in 1 : vector<8x32xf32>, vector<8x32xf32> -> vector<8x64xf32>
    %c0_27 = arith.constant 0 : index
    %c0_28 = arith.constant 0 : index
    %38 = vector.load %arg4[%c0_27, %c0_28] : memref<64x1xf32, #tpu.memory_space<vmem>>, vector<64x1xf32>
    %cst_29 = arith.constant dense<0.000000e+00> : vector<8x1xf32>
    %39 = tpu.matmul %37, %38, %cst_29 {dimension_numbers = #tpu.dot_dimension_numbers<[1], [0], [0], [1], [0, 0, 1, 1], [], []>} : vector<8x64xf32>, vector<64x1xf32>, vector<8x1xf32> -> vector<8x1xf32>
    %c0_30 = arith.constant 0 : index
    %c0_31 = arith.constant 0 : index
    %40 = vector.load %arg5[%c0_30, %c0_31] : memref<1x1xf32, #tpu.memory_space<vmem>>, vector<1x1xf32>
    %41 = vector.broadcast %40 : vector<1x1xf32> to vector<8x1xf32>
    %42 = arith.addf %39, %41 : vector<8x1xf32>
    %c0_32 = arith.constant 0 : index
    %c0_33 = arith.constant 0 : index
    %c0_34 = arith.constant 0 : index
    %43 = vector.load %arg7[%c0_32, %c0_33, %c0_34] : memref<2x8x1xf32, #tpu.memory_space<vmem>>, vector<1x8x1xf32>
    %44 = vector.shape_cast %43 : vector<1x8x1xf32> to vector<8x1xf32>
    %45 = vector.shape_cast %42 : vector<8x1xf32> to vector<1x8x1xf32>
    tpu.vector_store %arg7[%c0_32, %c0_33, %c0_34], %45 {strides = array<i32>} : memref<2x8x1xf32, #tpu.memory_space<vmem>>, vector<1x8x1xf32>,
    %c1 = arith.constant 1 : index
    %c0_35 = arith.constant 0 : index
    %c0_36 = arith.constant 0 : index
    %46 = vector.load %arg0[%c1, %c0_35, %c0_36] : memref<2x8x8xf32, #tpu.memory_space<vmem>>, vector<1x8x8xf32>
    %47 = vector.shape_cast %46 : vector<1x8x8xf32> to vector<8x8xf32>
    %c1_37 = arith.constant 1 : index
    %c0_38 = arith.constant 0 : index
    %c0_39 = arith.constant 0 : index
    %48 = vector.load %arg1[%c1_37, %c0_38, %c0_39] : memref<2x8x32xf32, #tpu.memory_space<vmem>>, vector<1x8x32xf32>
    %49 = vector.shape_cast %48 : vector<1x8x32xf32> to vector<8x32xf32>
    %cst_40 = arith.constant dense<0xFF800000> : vector<32xf32>
    %50 = vector.multi_reduction <maximumf>, %49, %cst_40 [0] : vector<8x32xf32> to vector<32xf32>
    %51 = vector.shape_cast %50 : vector<32xf32> to vector<1x32xf32>
    %c1_41 = arith.constant 1 : index
    %c0_42 = arith.constant 0 : index
    %c0_43 = arith.constant 0 : index
    %52 = vector.load %arg8[%c1_41, %c0_42, %c0_43] : memref<2x1x32xf32, #tpu.memory_space<vmem>>, vector<1x1x32xf32>
    %53 = vector.shape_cast %52 : vector<1x1x32xf32> to vector<1x32xf32>
    %54 = vector.shape_cast %51 : vector<1x32xf32> to vector<1x1x32xf32>
    tpu.vector_store %arg8[%c1_41, %c0_42, %c0_43], %54 {strides = array<i32>} : memref<2x1x32xf32, #tpu.memory_space<vmem>>, vector<1x1x32xf32>,
    %cst_44 = arith.constant dense<0.000000e+00> : vector<32xf32>
    %55 = vector.multi_reduction <add>, %49, %cst_44 [0] : vector<8x32xf32> to vector<32xf32>
    %56 = vector.shape_cast %55 : vector<32xf32> to vector<1x32xf32>
    %cst_45 = arith.constant 8.000000e+00 : f32
    %57 = vector.broadcast %cst_45 : f32 to vector<1x32xf32>
    %58 = arith.divf %56, %57 : vector<1x32xf32>
    %c1_46 = arith.constant 1 : index
    %c0_47 = arith.constant 0 : index
    %c0_48 = arith.constant 0 : index
    %59 = vector.load %arg9[%c1_46, %c0_47, %c0_48] : memref<2x1x32xf32, #tpu.memory_space<vmem>>, vector<1x1x32xf32>
    %60 = vector.shape_cast %59 : vector<1x1x32xf32> to vector<1x32xf32>
    %61 = vector.shape_cast %58 : vector<1x32xf32> to vector<1x1x32xf32>
    tpu.vector_store %arg9[%c1_46, %c0_47, %c0_48], %61 {strides = array<i32>} : memref<2x1x32xf32, #tpu.memory_space<vmem>>, vector<1x1x32xf32>,
    %cst_49 = arith.constant dense<0.000000e+00> : vector<8xf32>
    %62 = vector.multi_reduction <add>, %47, %cst_49 [1] : vector<8x8xf32> to vector<8xf32>
    %63 = vector.shape_cast %62 : vector<8xf32> to vector<8x1xf32>
    %cst_50 = arith.constant 1.000000e+00 : f32
    %64 = vector.broadcast %cst_50 : f32 to vector<8x1xf32>
    %65 = arith.maximumf %63, %64 : vector<8x1xf32>
    %cst_51 = arith.constant 1.000000e+00 : f32
    %66 = vector.broadcast %cst_51 : f32 to vector<8x1xf32>
    %67 = arith.divf %66, %65 : vector<8x1xf32>
    %cst_52 = arith.constant dense<0.000000e+00> : vector<8x32xf32>
    %68 = tpu.matmul %47, %49, %cst_52 {dimension_numbers = #tpu.dot_dimension_numbers<[1], [0], [0], [1], [0, 0, 1, 1], [], []>} : vector<8x8xf32>, vector<8x32xf32>, vector<8x32xf32> -> vector<8x32xf32>
    %69 = vector.broadcast %67 : vector<8x1xf32> to vector<8x32xf32>
    %70 = arith.mulf %68, %69 : vector<8x32xf32>
    %71 = tpu.concatenate %70, %49 in 1 : vector<8x32xf32>, vector<8x32xf32> -> vector<8x64xf32>
    %c0_53 = arith.constant 0 : index
    %c0_54 = arith.constant 0 : index
    %72 = vector.load %arg2[%c0_53, %c0_54] : memref<64x32xf32, #tpu.memory_space<vmem>>, vector<64x32xf32>
    %cst_55 = arith.constant dense<0.000000e+00> : vector<8x32xf32>
    %73 = tpu.matmul %71, %72, %cst_55 {dimension_numbers = #tpu.dot_dimension_numbers<[1], [0], [0], [1], [0, 0, 1, 1], [], []>} : vector<8x64xf32>, vector<64x32xf32>, vector<8x32xf32> -> vector<8x32xf32>
    %c0_56 = arith.constant 0 : index
    %c0_57 = arith.constant 0 : index
    %74 = vector.load %arg3[%c0_56, %c0_57] : memref<1x32xf32, #tpu.memory_space<vmem>>, vector<1x32xf32>
    %75 = vector.broadcast %74 : vector<1x32xf32> to vector<8x32xf32>
    %76 = arith.addf %73, %75 : vector<8x32xf32>
    %cst_58 = arith.constant 0.000000e+00 : f32
    %77 = vector.broadcast %cst_58 : f32 to vector<8x32xf32>
    %78 = arith.maximumf %76, %77 : vector<8x32xf32>
    %c1_59 = arith.constant 1 : index
    %c0_60 = arith.constant 0 : index
    %c0_61 = arith.constant 0 : index
    %79 = vector.load %arg6[%c1_59, %c0_60, %c0_61] : memref<2x8x32xf32, #tpu.memory_space<vmem>>, vector<1x8x32xf32>
    %80 = vector.shape_cast %79 : vector<1x8x32xf32> to vector<8x32xf32>
    %81 = vector.shape_cast %78 : vector<8x32xf32> to vector<1x8x32xf32>
    tpu.vector_store %arg6[%c1_59, %c0_60, %c0_61], %81 {strides = array<i32>} : memref<2x8x32xf32, #tpu.memory_space<vmem>>, vector<1x8x32xf32>,
    %cst_62 = arith.constant dense<0.000000e+00> : vector<8x32xf32>
    %82 = tpu.matmul %47, %78, %cst_62 {dimension_numbers = #tpu.dot_dimension_numbers<[1], [0], [0], [1], [0, 0, 1, 1], [], []>} : vector<8x8xf32>, vector<8x32xf32>, vector<8x32xf32> -> vector<8x32xf32>
    %83 = tpu.concatenate %82, %78 in 1 : vector<8x32xf32>, vector<8x32xf32> -> vector<8x64xf32>
    %c0_63 = arith.constant 0 : index
    %c0_64 = arith.constant 0 : index
    %84 = vector.load %arg4[%c0_63, %c0_64] : memref<64x1xf32, #tpu.memory_space<vmem>>, vector<64x1xf32>
    %cst_65 = arith.constant dense<0.000000e+00> : vector<8x1xf32>
    %85 = tpu.matmul %83, %84, %cst_65 {dimension_numbers = #tpu.dot_dimension_numbers<[1], [0], [0], [1], [0, 0, 1, 1], [], []>} : vector<8x64xf32>, vector<64x1xf32>, vector<8x1xf32> -> vector<8x1xf32>
    %c0_66 = arith.constant 0 : index
    %c0_67 = arith.constant 0 : index
    %86 = vector.load %arg5[%c0_66, %c0_67] : memref<1x1xf32, #tpu.memory_space<vmem>>, vector<1x1xf32>
    %87 = vector.broadcast %86 : vector<1x1xf32> to vector<8x1xf32>
    %88 = arith.addf %85, %87 : vector<8x1xf32>
    %c1_68 = arith.constant 1 : index
    %c0_69 = arith.constant 0 : index
    %c0_70 = arith.constant 0 : index
    %89 = vector.load %arg7[%c1_68, %c0_69, %c0_70] : memref<2x8x1xf32, #tpu.memory_space<vmem>>, vector<1x8x1xf32>
    %90 = vector.shape_cast %89 : vector<1x8x1xf32> to vector<8x1xf32>
    %91 = vector.shape_cast %88 : vector<8x1xf32> to vector<1x8x1xf32>
    tpu.vector_store %arg7[%c1_68, %c0_69, %c0_70], %91 {strides = array<i32>} : memref<2x8x1xf32, #tpu.memory_space<vmem>>, vector<1x8x1xf32>,
    return
  }
}

module attributes {stable_mosaic.version = 11 : i64} {
  func.func @_stage_kernel(%arg0: memref<2x4x4xf32, #tpu.memory_space<vmem>>, %arg1: memref<2x4x32xf32, #tpu.memory_space<vmem>>, %arg2: memref<64x32xf32, #tpu.memory_space<vmem>>, %arg3: memref<1x32xf32, #tpu.memory_space<vmem>>, %arg4: memref<64x1xf32, #tpu.memory_space<vmem>>, %arg5: memref<1x1xf32, #tpu.memory_space<vmem>>, %arg6: memref<2x4x32xf32, #tpu.memory_space<vmem>>, %arg7: memref<2x4x1xf32, #tpu.memory_space<vmem>>, %arg8: memref<2x1x32xf32, #tpu.memory_space<vmem>>, %arg9: memref<2x1x32xf32, #tpu.memory_space<vmem>>) attributes {dimension_semantics = [], scalar_prefetch = 0 : i64, scratch_operands = 0 : i64, tpu.core_type = #tpu.core_type<tc>} {
    %c0 = arith.constant 0 : index
    %c0_0 = arith.constant 0 : index
    %c0_1 = arith.constant 0 : index
    %0 = vector.load %arg0[%c0, %c0_0, %c0_1] : memref<2x4x4xf32, #tpu.memory_space<vmem>>, vector<1x4x4xf32>
    %1 = vector.shape_cast %0 : vector<1x4x4xf32> to vector<4x4xf32>
    %c0_2 = arith.constant 0 : index
    %c0_3 = arith.constant 0 : index
    %c0_4 = arith.constant 0 : index
    %2 = vector.load %arg1[%c0_2, %c0_3, %c0_4] : memref<2x4x32xf32, #tpu.memory_space<vmem>>, vector<1x4x32xf32>
    %3 = vector.shape_cast %2 : vector<1x4x32xf32> to vector<4x32xf32>
    %cst = arith.constant dense<0xFF800000> : vector<32xf32>
    %4 = vector.multi_reduction <maximumf>, %3, %cst [0] : vector<4x32xf32> to vector<32xf32>
    %5 = vector.shape_cast %4 : vector<32xf32> to vector<1x32xf32>
    %c0_5 = arith.constant 0 : index
    %c0_6 = arith.constant 0 : index
    %c0_7 = arith.constant 0 : index
    %6 = vector.load %arg8[%c0_5, %c0_6, %c0_7] : memref<2x1x32xf32, #tpu.memory_space<vmem>>, vector<1x1x32xf32>
    %7 = vector.shape_cast %6 : vector<1x1x32xf32> to vector<1x32xf32>
    %8 = vector.shape_cast %5 : vector<1x32xf32> to vector<1x1x32xf32>
    tpu.vector_store %arg8[%c0_5, %c0_6, %c0_7], %8 {strides = array<i32>} : memref<2x1x32xf32, #tpu.memory_space<vmem>>, vector<1x1x32xf32>,
    %cst_8 = arith.constant dense<0.000000e+00> : vector<32xf32>
    %9 = vector.multi_reduction <add>, %3, %cst_8 [0] : vector<4x32xf32> to vector<32xf32>
    %10 = vector.shape_cast %9 : vector<32xf32> to vector<1x32xf32>
    %cst_9 = arith.constant 4.000000e+00 : f32
    %11 = vector.broadcast %cst_9 : f32 to vector<1x32xf32>
    %12 = arith.divf %10, %11 : vector<1x32xf32>
    %c0_10 = arith.constant 0 : index
    %c0_11 = arith.constant 0 : index
    %c0_12 = arith.constant 0 : index
    %13 = vector.load %arg9[%c0_10, %c0_11, %c0_12] : memref<2x1x32xf32, #tpu.memory_space<vmem>>, vector<1x1x32xf32>
    %14 = vector.shape_cast %13 : vector<1x1x32xf32> to vector<1x32xf32>
    %15 = vector.shape_cast %12 : vector<1x32xf32> to vector<1x1x32xf32>
    tpu.vector_store %arg9[%c0_10, %c0_11, %c0_12], %15 {strides = array<i32>} : memref<2x1x32xf32, #tpu.memory_space<vmem>>, vector<1x1x32xf32>,
    %cst_13 = arith.constant dense<0.000000e+00> : vector<4xf32>
    %16 = vector.multi_reduction <add>, %1, %cst_13 [1] : vector<4x4xf32> to vector<4xf32>
    %17 = vector.shape_cast %16 : vector<4xf32> to vector<4x1xf32>
    %cst_14 = arith.constant 1.000000e+00 : f32
    %18 = vector.broadcast %cst_14 : f32 to vector<4x1xf32>
    %19 = arith.maximumf %17, %18 : vector<4x1xf32>
    %cst_15 = arith.constant 1.000000e+00 : f32
    %20 = vector.broadcast %cst_15 : f32 to vector<4x1xf32>
    %21 = arith.divf %20, %19 : vector<4x1xf32>
    %cst_16 = arith.constant dense<0.000000e+00> : vector<4x32xf32>
    %22 = tpu.matmul %1, %3, %cst_16 {dimension_numbers = #tpu.dot_dimension_numbers<[1], [0], [0], [1], [0, 0, 1, 1], [], []>} : vector<4x4xf32>, vector<4x32xf32>, vector<4x32xf32> -> vector<4x32xf32>
    %23 = vector.broadcast %21 : vector<4x1xf32> to vector<4x32xf32>
    %24 = arith.mulf %22, %23 : vector<4x32xf32>
    %25 = tpu.concatenate %24, %3 in 1 : vector<4x32xf32>, vector<4x32xf32> -> vector<4x64xf32>
    %c0_17 = arith.constant 0 : index
    %c0_18 = arith.constant 0 : index
    %26 = vector.load %arg2[%c0_17, %c0_18] : memref<64x32xf32, #tpu.memory_space<vmem>>, vector<64x32xf32>
    %cst_19 = arith.constant dense<0.000000e+00> : vector<4x32xf32>
    %27 = tpu.matmul %25, %26, %cst_19 {dimension_numbers = #tpu.dot_dimension_numbers<[1], [0], [0], [1], [0, 0, 1, 1], [], []>} : vector<4x64xf32>, vector<64x32xf32>, vector<4x32xf32> -> vector<4x32xf32>
    %c0_20 = arith.constant 0 : index
    %c0_21 = arith.constant 0 : index
    %28 = vector.load %arg3[%c0_20, %c0_21] : memref<1x32xf32, #tpu.memory_space<vmem>>, vector<1x32xf32>
    %29 = vector.broadcast %28 : vector<1x32xf32> to vector<4x32xf32>
    %30 = arith.addf %27, %29 : vector<4x32xf32>
    %cst_22 = arith.constant 0.000000e+00 : f32
    %31 = vector.broadcast %cst_22 : f32 to vector<4x32xf32>
    %32 = arith.maximumf %30, %31 : vector<4x32xf32>
    %c0_23 = arith.constant 0 : index
    %c0_24 = arith.constant 0 : index
    %c0_25 = arith.constant 0 : index
    %33 = vector.load %arg6[%c0_23, %c0_24, %c0_25] : memref<2x4x32xf32, #tpu.memory_space<vmem>>, vector<1x4x32xf32>
    %34 = vector.shape_cast %33 : vector<1x4x32xf32> to vector<4x32xf32>
    %35 = vector.shape_cast %32 : vector<4x32xf32> to vector<1x4x32xf32>
    tpu.vector_store %arg6[%c0_23, %c0_24, %c0_25], %35 {strides = array<i32>} : memref<2x4x32xf32, #tpu.memory_space<vmem>>, vector<1x4x32xf32>,
    %cst_26 = arith.constant dense<0.000000e+00> : vector<4x32xf32>
    %36 = tpu.matmul %1, %32, %cst_26 {dimension_numbers = #tpu.dot_dimension_numbers<[1], [0], [0], [1], [0, 0, 1, 1], [], []>} : vector<4x4xf32>, vector<4x32xf32>, vector<4x32xf32> -> vector<4x32xf32>
    %37 = tpu.concatenate %36, %32 in 1 : vector<4x32xf32>, vector<4x32xf32> -> vector<4x64xf32>
    %c0_27 = arith.constant 0 : index
    %c0_28 = arith.constant 0 : index
    %38 = vector.load %arg4[%c0_27, %c0_28] : memref<64x1xf32, #tpu.memory_space<vmem>>, vector<64x1xf32>
    %cst_29 = arith.constant dense<0.000000e+00> : vector<4x1xf32>
    %39 = tpu.matmul %37, %38, %cst_29 {dimension_numbers = #tpu.dot_dimension_numbers<[1], [0], [0], [1], [0, 0, 1, 1], [], []>} : vector<4x64xf32>, vector<64x1xf32>, vector<4x1xf32> -> vector<4x1xf32>
    %c0_30 = arith.constant 0 : index
    %c0_31 = arith.constant 0 : index
    %40 = vector.load %arg5[%c0_30, %c0_31] : memref<1x1xf32, #tpu.memory_space<vmem>>, vector<1x1xf32>
    %41 = vector.broadcast %40 : vector<1x1xf32> to vector<4x1xf32>
    %42 = arith.addf %39, %41 : vector<4x1xf32>
    %c0_32 = arith.constant 0 : index
    %c0_33 = arith.constant 0 : index
    %c0_34 = arith.constant 0 : index
    %43 = vector.load %arg7[%c0_32, %c0_33, %c0_34] : memref<2x4x1xf32, #tpu.memory_space<vmem>>, vector<1x4x1xf32>
    %44 = vector.shape_cast %43 : vector<1x4x1xf32> to vector<4x1xf32>
    %45 = vector.shape_cast %42 : vector<4x1xf32> to vector<1x4x1xf32>
    tpu.vector_store %arg7[%c0_32, %c0_33, %c0_34], %45 {strides = array<i32>} : memref<2x4x1xf32, #tpu.memory_space<vmem>>, vector<1x4x1xf32>,
    %c1 = arith.constant 1 : index
    %c0_35 = arith.constant 0 : index
    %c0_36 = arith.constant 0 : index
    %46 = vector.load %arg0[%c1, %c0_35, %c0_36] : memref<2x4x4xf32, #tpu.memory_space<vmem>>, vector<1x4x4xf32>
    %47 = vector.shape_cast %46 : vector<1x4x4xf32> to vector<4x4xf32>
    %c1_37 = arith.constant 1 : index
    %c0_38 = arith.constant 0 : index
    %c0_39 = arith.constant 0 : index
    %48 = vector.load %arg1[%c1_37, %c0_38, %c0_39] : memref<2x4x32xf32, #tpu.memory_space<vmem>>, vector<1x4x32xf32>
    %49 = vector.shape_cast %48 : vector<1x4x32xf32> to vector<4x32xf32>
    %cst_40 = arith.constant dense<0xFF800000> : vector<32xf32>
    %50 = vector.multi_reduction <maximumf>, %49, %cst_40 [0] : vector<4x32xf32> to vector<32xf32>
    %51 = vector.shape_cast %50 : vector<32xf32> to vector<1x32xf32>
    %c1_41 = arith.constant 1 : index
    %c0_42 = arith.constant 0 : index
    %c0_43 = arith.constant 0 : index
    %52 = vector.load %arg8[%c1_41, %c0_42, %c0_43] : memref<2x1x32xf32, #tpu.memory_space<vmem>>, vector<1x1x32xf32>
    %53 = vector.shape_cast %52 : vector<1x1x32xf32> to vector<1x32xf32>
    %54 = vector.shape_cast %51 : vector<1x32xf32> to vector<1x1x32xf32>
    tpu.vector_store %arg8[%c1_41, %c0_42, %c0_43], %54 {strides = array<i32>} : memref<2x1x32xf32, #tpu.memory_space<vmem>>, vector<1x1x32xf32>,
    %cst_44 = arith.constant dense<0.000000e+00> : vector<32xf32>
    %55 = vector.multi_reduction <add>, %49, %cst_44 [0] : vector<4x32xf32> to vector<32xf32>
    %56 = vector.shape_cast %55 : vector<32xf32> to vector<1x32xf32>
    %cst_45 = arith.constant 4.000000e+00 : f32
    %57 = vector.broadcast %cst_45 : f32 to vector<1x32xf32>
    %58 = arith.divf %56, %57 : vector<1x32xf32>
    %c1_46 = arith.constant 1 : index
    %c0_47 = arith.constant 0 : index
    %c0_48 = arith.constant 0 : index
    %59 = vector.load %arg9[%c1_46, %c0_47, %c0_48] : memref<2x1x32xf32, #tpu.memory_space<vmem>>, vector<1x1x32xf32>
    %60 = vector.shape_cast %59 : vector<1x1x32xf32> to vector<1x32xf32>
    %61 = vector.shape_cast %58 : vector<1x32xf32> to vector<1x1x32xf32>
    tpu.vector_store %arg9[%c1_46, %c0_47, %c0_48], %61 {strides = array<i32>} : memref<2x1x32xf32, #tpu.memory_space<vmem>>, vector<1x1x32xf32>,
    %cst_49 = arith.constant dense<0.000000e+00> : vector<4xf32>
    %62 = vector.multi_reduction <add>, %47, %cst_49 [1] : vector<4x4xf32> to vector<4xf32>
    %63 = vector.shape_cast %62 : vector<4xf32> to vector<4x1xf32>
    %cst_50 = arith.constant 1.000000e+00 : f32
    %64 = vector.broadcast %cst_50 : f32 to vector<4x1xf32>
    %65 = arith.maximumf %63, %64 : vector<4x1xf32>
    %cst_51 = arith.constant 1.000000e+00 : f32
    %66 = vector.broadcast %cst_51 : f32 to vector<4x1xf32>
    %67 = arith.divf %66, %65 : vector<4x1xf32>
    %cst_52 = arith.constant dense<0.000000e+00> : vector<4x32xf32>
    %68 = tpu.matmul %47, %49, %cst_52 {dimension_numbers = #tpu.dot_dimension_numbers<[1], [0], [0], [1], [0, 0, 1, 1], [], []>} : vector<4x4xf32>, vector<4x32xf32>, vector<4x32xf32> -> vector<4x32xf32>
    %69 = vector.broadcast %67 : vector<4x1xf32> to vector<4x32xf32>
    %70 = arith.mulf %68, %69 : vector<4x32xf32>
    %71 = tpu.concatenate %70, %49 in 1 : vector<4x32xf32>, vector<4x32xf32> -> vector<4x64xf32>
    %c0_53 = arith.constant 0 : index
    %c0_54 = arith.constant 0 : index
    %72 = vector.load %arg2[%c0_53, %c0_54] : memref<64x32xf32, #tpu.memory_space<vmem>>, vector<64x32xf32>
    %cst_55 = arith.constant dense<0.000000e+00> : vector<4x32xf32>
    %73 = tpu.matmul %71, %72, %cst_55 {dimension_numbers = #tpu.dot_dimension_numbers<[1], [0], [0], [1], [0, 0, 1, 1], [], []>} : vector<4x64xf32>, vector<64x32xf32>, vector<4x32xf32> -> vector<4x32xf32>
    %c0_56 = arith.constant 0 : index
    %c0_57 = arith.constant 0 : index
    %74 = vector.load %arg3[%c0_56, %c0_57] : memref<1x32xf32, #tpu.memory_space<vmem>>, vector<1x32xf32>
    %75 = vector.broadcast %74 : vector<1x32xf32> to vector<4x32xf32>
    %76 = arith.addf %73, %75 : vector<4x32xf32>
    %cst_58 = arith.constant 0.000000e+00 : f32
    %77 = vector.broadcast %cst_58 : f32 to vector<4x32xf32>
    %78 = arith.maximumf %76, %77 : vector<4x32xf32>
    %c1_59 = arith.constant 1 : index
    %c0_60 = arith.constant 0 : index
    %c0_61 = arith.constant 0 : index
    %79 = vector.load %arg6[%c1_59, %c0_60, %c0_61] : memref<2x4x32xf32, #tpu.memory_space<vmem>>, vector<1x4x32xf32>
    %80 = vector.shape_cast %79 : vector<1x4x32xf32> to vector<4x32xf32>
    %81 = vector.shape_cast %78 : vector<4x32xf32> to vector<1x4x32xf32>
    tpu.vector_store %arg6[%c1_59, %c0_60, %c0_61], %81 {strides = array<i32>} : memref<2x4x32xf32, #tpu.memory_space<vmem>>, vector<1x4x32xf32>,
    %cst_62 = arith.constant dense<0.000000e+00> : vector<4x32xf32>
    %82 = tpu.matmul %47, %78, %cst_62 {dimension_numbers = #tpu.dot_dimension_numbers<[1], [0], [0], [1], [0, 0, 1, 1], [], []>} : vector<4x4xf32>, vector<4x32xf32>, vector<4x32xf32> -> vector<4x32xf32>
    %83 = tpu.concatenate %82, %78 in 1 : vector<4x32xf32>, vector<4x32xf32> -> vector<4x64xf32>
    %c0_63 = arith.constant 0 : index
    %c0_64 = arith.constant 0 : index
    %84 = vector.load %arg4[%c0_63, %c0_64] : memref<64x1xf32, #tpu.memory_space<vmem>>, vector<64x1xf32>
    %cst_65 = arith.constant dense<0.000000e+00> : vector<4x1xf32>
    %85 = tpu.matmul %83, %84, %cst_65 {dimension_numbers = #tpu.dot_dimension_numbers<[1], [0], [0], [1], [0, 0, 1, 1], [], []>} : vector<4x64xf32>, vector<64x1xf32>, vector<4x1xf32> -> vector<4x1xf32>
    %c0_66 = arith.constant 0 : index
    %c0_67 = arith.constant 0 : index
    %86 = vector.load %arg5[%c0_66, %c0_67] : memref<1x1xf32, #tpu.memory_space<vmem>>, vector<1x1xf32>
    %87 = vector.broadcast %86 : vector<1x1xf32> to vector<4x1xf32>
    %88 = arith.addf %85, %87 : vector<4x1xf32>
    %c1_68 = arith.constant 1 : index
    %c0_69 = arith.constant 0 : index
    %c0_70 = arith.constant 0 : index
    %89 = vector.load %arg7[%c1_68, %c0_69, %c0_70] : memref<2x4x1xf32, #tpu.memory_space<vmem>>, vector<1x4x1xf32>
    %90 = vector.shape_cast %89 : vector<1x4x1xf32> to vector<4x1xf32>
    %91 = vector.shape_cast %88 : vector<4x1xf32> to vector<1x4x1xf32>
    tpu.vector_store %arg7[%c1_68, %c0_69, %c0_70], %91 {strides = array<i32>} : memref<2x4x1xf32, #tpu.memory_space<vmem>>, vector<1x4x1xf32>,
    return
  }
}

module attributes {stable_mosaic.version = 11 : i64} {
  func.func @_head_kernel(%arg0: memref<2x2x32xf32, #tpu.memory_space<vmem>>, %arg1: memref<2x32xf32, #tpu.memory_space<vmem>>, %arg2: memref<2x32xf32, #tpu.memory_space<vmem>>, %arg3: memref<2x32xf32, #tpu.memory_space<vmem>>, %arg4: memref<2x32xf32, #tpu.memory_space<vmem>>, %arg5: memref<32x32xf32, #tpu.memory_space<vmem>>, %arg6: memref<32x32xf32, #tpu.memory_space<vmem>>, %arg7: memref<1x32xf32, #tpu.memory_space<vmem>>, %arg8: memref<32x16xf32, #tpu.memory_space<vmem>>, %arg9: memref<1x16xf32, #tpu.memory_space<vmem>>, %arg10: memref<16x1xf32, #tpu.memory_space<vmem>>, %arg11: memref<1x1xf32, #tpu.memory_space<vmem>>, %arg12: memref<2x1xf32, #tpu.memory_space<vmem>>) attributes {dimension_semantics = [], scalar_prefetch = 0 : i64, scratch_operands = 0 : i64, tpu.core_type = #tpu.core_type<tc>} {
    %c0 = arith.constant 0 : index
    %c0_0 = arith.constant 0 : index
    %c0_1 = arith.constant 0 : index
    %0 = vector.load %arg0[%c0, %c0_0, %c0_1] : memref<2x2x32xf32, #tpu.memory_space<vmem>>, vector<1x2x32xf32>
    %1 = vector.shape_cast %0 : vector<1x2x32xf32> to vector<2x32xf32>
    %cst = arith.constant dense<0xFF800000> : vector<32xf32>
    %2 = vector.multi_reduction <maximumf>, %1, %cst [0] : vector<2x32xf32> to vector<32xf32>
    %3 = vector.shape_cast %2 : vector<32xf32> to vector<1x32xf32>
    %cst_2 = arith.constant dense<0.000000e+00> : vector<32xf32>
    %4 = vector.multi_reduction <add>, %1, %cst_2 [0] : vector<2x32xf32> to vector<32xf32>
    %5 = vector.shape_cast %4 : vector<32xf32> to vector<1x32xf32>
    %cst_3 = arith.constant 2.000000e+00 : f32
    %6 = vector.broadcast %cst_3 : f32 to vector<1x32xf32>
    %7 = arith.divf %5, %6 : vector<1x32xf32>
    %c1 = arith.constant 1 : index
    %c0_4 = arith.constant 0 : index
    %c0_5 = arith.constant 0 : index
    %8 = vector.load %arg0[%c1, %c0_4, %c0_5] : memref<2x2x32xf32, #tpu.memory_space<vmem>>, vector<1x2x32xf32>
    %9 = vector.shape_cast %8 : vector<1x2x32xf32> to vector<2x32xf32>
    %cst_6 = arith.constant dense<0xFF800000> : vector<32xf32>
    %10 = vector.multi_reduction <maximumf>, %9, %cst_6 [0] : vector<2x32xf32> to vector<32xf32>
    %11 = vector.shape_cast %10 : vector<32xf32> to vector<1x32xf32>
    %cst_7 = arith.constant dense<0.000000e+00> : vector<32xf32>
    %12 = vector.multi_reduction <add>, %9, %cst_7 [0] : vector<2x32xf32> to vector<32xf32>
    %13 = vector.shape_cast %12 : vector<32xf32> to vector<1x32xf32>
    %cst_8 = arith.constant 2.000000e+00 : f32
    %14 = vector.broadcast %cst_8 : f32 to vector<1x32xf32>
    %15 = arith.divf %13, %14 : vector<1x32xf32>
    %16 = tpu.concatenate %3, %11 in 0 : vector<1x32xf32>, vector<1x32xf32> -> vector<2x32xf32>
    %17 = tpu.concatenate %7, %15 in 0 : vector<1x32xf32>, vector<1x32xf32> -> vector<2x32xf32>
    %c0_9 = arith.constant 0 : index
    %c0_10 = arith.constant 0 : index
    %18 = vector.load %arg1[%c0_9, %c0_10] : memref<2x32xf32, #tpu.memory_space<vmem>>, vector<2x32xf32>
    %c0_11 = arith.constant 0 : index
    %c0_12 = arith.constant 0 : index
    %19 = vector.load %arg3[%c0_11, %c0_12] : memref<2x32xf32, #tpu.memory_space<vmem>>, vector<2x32xf32>
    %20 = arith.addf %18, %19 : vector<2x32xf32>
    %21 = arith.addf %20, %16 : vector<2x32xf32>
    %c0_13 = arith.constant 0 : index
    %c0_14 = arith.constant 0 : index
    %22 = vector.load %arg2[%c0_13, %c0_14] : memref<2x32xf32, #tpu.memory_space<vmem>>, vector<2x32xf32>
    %c0_15 = arith.constant 0 : index
    %c0_16 = arith.constant 0 : index
    %23 = vector.load %arg4[%c0_15, %c0_16] : memref<2x32xf32, #tpu.memory_space<vmem>>, vector<2x32xf32>
    %24 = arith.addf %22, %23 : vector<2x32xf32>
    %25 = arith.addf %24, %17 : vector<2x32xf32>
    %c0_17 = arith.constant 0 : index
    %c0_18 = arith.constant 0 : index
    %26 = vector.load %arg5[%c0_17, %c0_18] : memref<32x32xf32, #tpu.memory_space<vmem>>, vector<32x32xf32>
    %cst_19 = arith.constant dense<0.000000e+00> : vector<2x32xf32>
    %27 = tpu.matmul %21, %26, %cst_19 {dimension_numbers = #tpu.dot_dimension_numbers<[1], [0], [0], [1], [0, 0, 1, 1], [], []>} : vector<2x32xf32>, vector<32x32xf32>, vector<2x32xf32> -> vector<2x32xf32>
    %c0_20 = arith.constant 0 : index
    %c0_21 = arith.constant 0 : index
    %28 = vector.load %arg6[%c0_20, %c0_21] : memref<32x32xf32, #tpu.memory_space<vmem>>, vector<32x32xf32>
    %cst_22 = arith.constant dense<0.000000e+00> : vector<2x32xf32>
    %29 = tpu.matmul %25, %28, %cst_22 {dimension_numbers = #tpu.dot_dimension_numbers<[1], [0], [0], [1], [0, 0, 1, 1], [], []>} : vector<2x32xf32>, vector<32x32xf32>, vector<2x32xf32> -> vector<2x32xf32>
    %30 = arith.addf %27, %29 : vector<2x32xf32>
    %c0_23 = arith.constant 0 : index
    %c0_24 = arith.constant 0 : index
    %31 = vector.load %arg7[%c0_23, %c0_24] : memref<1x32xf32, #tpu.memory_space<vmem>>, vector<1x32xf32>
    %32 = vector.broadcast %31 : vector<1x32xf32> to vector<2x32xf32>
    %33 = arith.addf %30, %32 : vector<2x32xf32>
    %cst_25 = arith.constant 0.000000e+00 : f32
    %34 = vector.broadcast %cst_25 : f32 to vector<2x32xf32>
    %35 = arith.maximumf %33, %34 : vector<2x32xf32>
    %c0_26 = arith.constant 0 : index
    %c0_27 = arith.constant 0 : index
    %36 = vector.load %arg8[%c0_26, %c0_27] : memref<32x16xf32, #tpu.memory_space<vmem>>, vector<32x16xf32>
    %cst_28 = arith.constant dense<0.000000e+00> : vector<2x16xf32>
    %37 = tpu.matmul %35, %36, %cst_28 {dimension_numbers = #tpu.dot_dimension_numbers<[1], [0], [0], [1], [0, 0, 1, 1], [], []>} : vector<2x32xf32>, vector<32x16xf32>, vector<2x16xf32> -> vector<2x16xf32>
    %c0_29 = arith.constant 0 : index
    %c0_30 = arith.constant 0 : index
    %38 = vector.load %arg9[%c0_29, %c0_30] : memref<1x16xf32, #tpu.memory_space<vmem>>, vector<1x16xf32>
    %39 = vector.broadcast %38 : vector<1x16xf32> to vector<2x16xf32>
    %40 = arith.addf %37, %39 : vector<2x16xf32>
    %cst_31 = arith.constant 0.000000e+00 : f32
    %41 = vector.broadcast %cst_31 : f32 to vector<2x16xf32>
    %42 = arith.maximumf %40, %41 : vector<2x16xf32>
    %c0_32 = arith.constant 0 : index
    %c0_33 = arith.constant 0 : index
    %43 = vector.load %arg10[%c0_32, %c0_33] : memref<16x1xf32, #tpu.memory_space<vmem>>, vector<16x1xf32>
    %cst_34 = arith.constant dense<0.000000e+00> : vector<2x1xf32>
    %44 = tpu.matmul %42, %43, %cst_34 {dimension_numbers = #tpu.dot_dimension_numbers<[1], [0], [0], [1], [0, 0, 1, 1], [], []>} : vector<2x16xf32>, vector<16x1xf32>, vector<2x1xf32> -> vector<2x1xf32>
    %c0_35 = arith.constant 0 : index
    %c0_36 = arith.constant 0 : index
    %45 = vector.load %arg11[%c0_35, %c0_36] : memref<1x1xf32, #tpu.memory_space<vmem>>, vector<1x1xf32>
    %46 = vector.broadcast %45 : vector<1x1xf32> to vector<2x1xf32>
    %47 = arith.addf %44, %46 : vector<2x1xf32>
    %c0_37 = arith.constant 0 : index
    %c0_38 = arith.constant 0 : index
    %48 = vector.load %arg12[%c0_37, %c0_38] : memref<2x1xf32, #tpu.memory_space<vmem>>, vector<2x1xf32>
    tpu.vector_store %arg12[%c0_37, %c0_38], %47 {strides = array<i32>} : memref<2x1xf32, #tpu.memory_space<vmem>>, vector<2x1xf32>,
    return
  }
}

</mosaic_0001>

<llo_original>
// kernel: net_forward.4
$region0: #{net_forward.4}
  #allocation0 [shape = 'u32[]', space=smem, size = 0x4, offset = 0x4, fixed_abs, tag = 'smem constant byte address 0x4 - core index']
  #allocation1 [shape = 'u32[144,128]{1,0:T(1,128)}', space=vmem, size = 0x12000, scoped, tag = 'internal scratch']
  #allocation2 [shape = 'f32[1,1]{1,0:T(1,128)S(1)}', space=vmem, size = 0x200, scoped, tag = 'scoped memory for net_forward.4']
  %s0 = inlined_call_operand.vmem [shape: f32[2,16,16], index: 0, kind: input, shape index: {}]
  %s1 = inlined_call_operand.vmem [shape: f32[2,16,8], index: 1, kind: input, shape index: {}]
  %s2 = inlined_call_operand.vmem [shape: f32[16,32], index: 2, kind: input, shape index: {}]
  %s3 = inlined_call_operand.vmem [shape: f32[1,32], index: 3, kind: input, shape index: {}]
  %s4 = inlined_call_operand.vmem [shape: f32[64,1], index: 4, kind: input, shape index: {}]
  %s5 = inlined_call_operand.<no memory space> [shape: f32[1,1], index: 5, kind: input, shape index: {}]
  %s6 = inlined_call_operand.vmem [shape: f32[2,16,32], index: 6, kind: output, shape index: {0}]
  %s7 = inlined_call_operand.vmem [shape: f32[2,16,1], index: 7, kind: output, shape index: {1}]
  %8 = xla_tuple %s6, %s7
  %s9 = sld [smem:[#allocation0]]
  $region42: #{net_forward.4} parent=0
    _
  %s11 = ssub.s32 1, %s9
  %s12 = scalar_select 0, %s11, %s9
  %v13 = vstv %s5
  %14 = vst [vmem:[#allocation2] sm:$0x1] %v13
  // Predicated region
  $region2: #{net_forward.4} parent=0 // pred_check
    _
  $region3: #{net_forward.4} parent=0 // pred_check_branch
    %16 = sbr.rel (0) target = $region5
  $region4: #{net_forward.4} parent=0 // pred_region
    _
  $region5: #{net_forward.4} parent=0 // pred_fallthru
    _
  // Predicated region
  $region6: #{net_forward.4} parent=0 // pred_check
    _
  $region7: #{net_forward.4} parent=0 // pred_check_branch
    %18 = sbr.rel (0) target = $region9
  $region8: #{net_forward.4} parent=0 // pred_region
    _
  $region9: #{net_forward.4} parent=0 // pred_fallthru
    _
  // Predicated region
  $region10: #{net_forward.4} parent=0 // pred_check
    _
  $region11: #{net_forward.4} parent=0 // pred_check_branch
    %20 = sbr.rel (0) target = $region13
  $region12: #{net_forward.4} parent=0 // pred_region
    _
  $region13: #{net_forward.4} parent=0 // pred_fallthru
    _
  // Predicated region
  $region14: #{net_forward.4} parent=0 // pred_check
    _
  $region15: #{net_forward.4} parent=0 // pred_check_branch
    %22 = sbr.rel (0) target = $region17
  $region16: #{net_forward.4} parent=0 // pred_region
    _
  $region17: #{net_forward.4} parent=0 // pred_fallthru
    _
  // Predicated region
  $region18: #{net_forward.4} parent=0 // pred_check
    _
  $region19: #{net_forward.4} parent=0 // pred_check_branch
    %24 = sbr.rel (0) target = $region21
  $region20: #{net_forward.4} parent=0 // pred_region
    _
  $region21: #{net_forward.4} parent=0 // pred_fallthru
    _
  // Predicated region
  $region22: #{net_forward.4} parent=0 // pred_check
    _
  $region23: #{net_forward.4} parent=0 // pred_check_branch
    %26 = sbr.rel (0) target = $region25
  $region24: #{net_forward.4} parent=0 // pred_region
    _
  $region25: #{net_forward.4} parent=0 // pred_fallthru
    _
  %v27 = vld [vmem:[%s0] sm:$0xff]
  %v28 = vld [vmem:[%s0 + $0x8] sm:$0xff]
  %v29 = vld [vmem:[%s1] sm:$0xff]
  %v30 = vld [vmem:[%s1 + $0x8] sm:$0xff]
  %vm31 = vcmask 130048
  %v32 = vsel %vm31, %v27, 0.0
  %33 = vadd.xlane.f32.xlu0 %v32
  %v34 = vpop.xlane.xlu0 %33
  %v35 = vsel %vm31, %v28, 0.0
  %36 = vadd.xlane.f32.xlu0 %v35
  %v37 = vpop.xlane.xlu0 %36
  %v38 = vmax.f32 %v34, 1.0
  %v39 = vmax.f32 %v37, 1.0
  %v40 = vrcp.pop %v38
  %v41 = vmul.f32 1.0, %v40
  %v42 = vrcp.pop %v39
  %v43 = vmul.f32 1.0, %v42
  %v45 = vsel %vm31, %v27, 0
  %v48 = vsel %vm31, %v28, 0
  %50 = vmatprep.subr.mxu0 0.0
  %51 = vmatpush1.msra.mxu0 %v29
  %52 = vmatprep.subr.mxu0 0.0
  %53 = vmatpush1.msra.mxu0 %v30
  %54 = vmatprep.subr.mxu0 0.0
  %55 = vmatpush1.msra.mxu0 0.0
  %56 = vmatprep.subr.mxu0 0.0
  %57 = vmatpush1.msra.mxu0 0.0
  %58 = vmatprep.subr.mxu0 0.0
  %59 = vmatpush1.msra.mxu0 0.0
  %60 = vmatprep.subr.mxu0 0.0
  %61 = vmatpush1.msra.mxu0 0.0
  %62 = vmatprep.subr.mxu0 0.0
  %63 = vmatpush1.msra.mxu0 0.0
  %64 = vmatprep.subr.mxu0 0.0
  %65 = vmatpush1.msra.mxu0 0.0
  %66 = vmatprep.subr.mxu0 0.0
  %67 = vmatpush1.msra.mxu0 0.0
  %68 = vmatprep.subr.mxu0 0.0
  %69 = vmatpush1.msra.mxu0 0.0
  %70 = vmatprep.subr.mxu0 0.0
  %71 = vmatpush1.msra.mxu0 0.0
  %72 = vmatprep.subr.mxu0 0.0
  %73 = vmatpush1.msra.mxu0 0.0
  %74 = vmatprep.subr.mxu0 0.0
  %75 = vmatpush1.msra.mxu0 0.0
  %76 = vmatprep.subr.mxu0 0.0
  %77 = vmatpush1.msra.mxu0 0.0
  %78 = vmatprep.subr.mxu0 0.0
  %79 = vmatpush1.msra.mxu0 0.0
  %80 = vmatprep.subr.mxu0 0.0
  %81 = vmatpush1.msra.mxu0 0.0
  %82 = vmatprep.subr.mxu0 0.0
  %83 = vmatpush1.msra.mxu0 0.0
  %84 = vmatprep.subr.mxu0 0.0
  %85 = vmatpush1.msra.mxu0 0.0
  %86 = vmatprep.subr.mxu0 0.0
  %87 = vmatpush1.msra.mxu0 0.0
  %88 = vmatprep.subr.mxu0 0.0
  %89 = vmatpush1.msra.mxu0 0.0
  %90 = vmatprep.subr.mxu0 0.0
  %91 = vmatpush1.msra.mxu0 0.0
  %92 = vmatprep.subr.mxu0 0.0
  %93 = vmatpush1.msra.mxu0 0.0
  %94 = vmatprep.subr.mxu0 0.0
  %95 = vmatpush1.msra.mxu0 0.0
  %96 = vmatprep.subr.mxu0 0.0
  %97 = vmatpush1.msra.mxu0 0.0
  %98 = vmatprep.subr.mxu0 0.0
  %99 = vmatpush1.msra.mxu0 0.0
  %100 = vmatprep.subr.mxu0 0.0
  %101 = vmatpush1.msra.mxu0 0.0
  %102 = vmatprep.subr.mxu0 0.0
  %103 = vmatpush1.msra.mxu0 0.0
  %104 = vmatprep.subr.mxu0 0.0
  %105 = vmatpush1.msra.mxu0 0.0
  %106 = vmatprep.subr.mxu0 0.0
  %107 = vmatpush1.msra.mxu0 0.0
  %108 = vmatprep.subr.mxu0 0.0
  %109 = vmatpush1.msra.mxu0 0.0
  %110 = vmatprep.subr.mxu0 0.0
  %111 = vmatpush1.msra.mxu0 0.0
  %112 = vmatprep.subr.mxu0 0.0
  %113 = vmatpush1.msra.mxu0 0.0
  %114 = vmatprep.mubr.f32.mxu0 0.0
  %115 = vmatmul.mubr.f32.gmra.mrb[0].mxu0 %v45
  %v116 = vpop.f32.mrb[0].mxu0
  %v117 = vadd.f32 0.0, %v116
  %v118 = vpop.f32.mrb[0].mxu0
  %119 = vmatprep.mubr.f32.mxu0 0.0
  %120 = vmatmul.mubr.f32.gmra.mrb[0].mxu0 %v48
  %v121 = vpop.f32.mrb[0].mxu0
  %v122 = vadd.f32 0.0, %v121
  %v123 = vpop.f32.mrb[0].mxu0
  %124 = vdwg.mxu0
  %v125 = vmul.f32 %v117, %v41
  %v126 = vmul.f32 %v122, %v43
  %129 = vrot.lane.b32.xlu0 %v29, 8
  %v130 = vpop.permute.xlu0 %129
  %131 = vrot.lane.b32.xlu0 %v30, 8
  %v132 = vpop.permute.xlu0 %131
  %vm135 = vcmask 64512
  %v136 = vsel %vm135, %v125, %v130
  %v137 = vsel %vm135, %v126, %v132
  %v138 = vld [vmem:[%s2] sm:$0xff]
  %v139 = vld [vmem:[%s2 + $0x8] sm:$0xff]
  %v140 = vld [vmem:[%s3] sm:$0x1]
  %v142 = vlaneseq
  %v143 = vshrl.u32 %v142, 7
  %v144 = vsub.s32 0, %v143
  %v145 = vrot.slane %v140, %v144
  %v148 = vsel %vm31, %v136, 0
  %v151 = vsel %vm31, %v137, 0
  %153 = vmatprep.subr.mxu0 0.0
  %154 = vmatpush1.msra.mxu0 %v138
  %155 = vmatprep.subr.mxu0 0.0
  %156 = vmatpush1.msra.mxu0 %v139
  %157 = vmatprep.subr.mxu0 0.0
  %158 = vmatpush1.msra.mxu0 0.0
  %159 = vmatprep.subr.mxu0 0.0
  %160 = vmatpush1.msra.mxu0 0.0
  %161 = vmatprep.subr.mxu0 0.0
  %162 = vmatpush1.msra.mxu0 0.0
  %163 = vmatprep.subr.mxu0 0.0
  %164 = vmatpush1.msra.mxu0 0.0
  %165 = vmatprep.subr.mxu0 0.0
  %166 = vmatpush1.msra.mxu0 0.0
  %167 = vmatprep.subr.mxu0 0.0
  %168 = vmatpush1.msra.mxu0 0.0
  %169 = vmatprep.subr.mxu0 0.0
  %170 = vmatpush1.msra.mxu0 0.0
  %171 = vmatprep.subr.mxu0 0.0
  %172 = vmatpush1.msra.mxu0 0.0
  %173 = vmatprep.subr.mxu0 0.0
  %174 = vmatpush1.msra.mxu0 0.0
  %175 = vmatprep.subr.mxu0 0.0
  %176 = vmatpush1.msra.mxu0 0.0
  %177 = vmatprep.subr.mxu0 0.0
  %178 = vmatpush1.msra.mxu0 0.0
  %179 = vmatprep.subr.mxu0 0.0
  %180 = vmatpush1.msra.mxu0 0.0
  %181 = vmatprep.subr.mxu0 0.0
  %182 = vmatpush1.msra.mxu0 0.0
  %183 = vmatprep.subr.mxu0 0.0
  %184 = vmatpush1.msra.mxu0 0.0
  %185 = vmatprep.subr.mxu0 0.0
  %186 = vmatpush1.msra.mxu0 0.0
  %187 = vmatprep.subr.mxu0 0.0
  %188 = vmatpush1.msra.mxu0 0.0
  %189 = vmatprep.subr.mxu0 0.0
  %190 = vmatpush1.msra.mxu0 0.0
  %191 = vmatprep.subr.mxu0 0.0
  %192 = vmatpush1.msra.mxu0 0.0
  %193 = vmatprep.subr.mxu0 0.0
  %194 = vmatpush1.msra.mxu0 0.0
  %195 = vmatprep.subr.mxu0 0.0
  %196 = vmatpush1.msra.mxu0 0.0
  %197 = vmatprep.subr.mxu0 0.0
  %198 = vmatpush1.msra.mxu0 0.0
  %199 = vmatprep.subr.mxu0 0.0
  %200 = vmatpush1.msra.mxu0 0.0
  %201 = vmatprep.subr.mxu0 0.0
  %202 = vmatpush1.msra.mxu0 0.0
  %203 = vmatprep.subr.mxu0 0.0
  %204 = vmatpush1.msra.mxu0 0.0
  %205 = vmatprep.subr.mxu0 0.0
  %206 = vmatpush1.msra.mxu0 0.0
  %207 = vmatprep.subr.mxu0 0.0
  %208 = vmatpush1.msra.mxu0 0.0
  %209 = vmatprep.subr.mxu0 0.0
  %210 = vmatpush1.msra.mxu0 0.0
  %211 = vmatprep.subr.mxu0 0.0
  %212 = vmatpush1.msra.mxu0 0.0
  %213 = vmatprep.subr.mxu0 0.0
  %214 = vmatpush1.msra.mxu0 0.0
  %215 = vmatprep.subr.mxu0 0.0
  %216 = vmatpush1.msra.mxu0 0.0
  %217 = vmatprep.mubr.f32.mxu0 0.0
  %218 = vmatmul.mubr.f32.gmra.mrb[0].mxu0 %v148
  %v219 = vpop.f32.mrb[0].mxu0
  %v220 = vadd.f32 %v145, %v219
  %v221 = vpop.f32.mrb[0].mxu0
  %222 = vmatprep.mubr.f32.mxu0 0.0
  %223 = vmatmul.mubr.f32.gmra.mrb[0].mxu0 %v151
  %v224 = vpop.f32.mrb[0].mxu0
  %v225 = vadd.f32 %v145, %v224
  %v226 = vpop.f32.mrb[0].mxu0
  %227 = vdwg.mxu0
  %v228 = vmax.f32 %v220, 0.0
  %v229 = vmax.f32 %v225, 0.0
  %vm230 = vcmask 261120
  %231 = vst.msk [vmem:[%s6] sm:$0xff] %vm230, %v228
  %232 = vst.msk [vmem:[%s6 + $0x8] sm:$0xff] %vm230, %v229
  %233 = vmatprep.subr.mxu0 0.0
  %234 = vmatpush1.msra.mxu0 %v228
  %235 = vmatprep.subr.mxu0 0.0
  %236 = vmatpush1.msra.mxu0 %v229
  %237 = vmatprep.subr.mxu0 0.0
  %238 = vmatpush1.msra.mxu0 0.0
  %239 = vmatprep.subr.mxu0 0.0
  %240 = vmatpush1.msra.mxu0 0.0
  %241 = vmatprep.subr.mxu0 0.0
  %242 = vmatpush1.msra.mxu0 0.0
  %243 = vmatprep.subr.mxu0 0.0
  %244 = vmatpush1.msra.mxu0 0.0
  %245 = vmatprep.subr.mxu0 0.0
  %246 = vmatpush1.msra.mxu0 0.0
  %247 = vmatprep.subr.mxu0 0.0
  %248 = vmatpush1.msra.mxu0 0.0
  %249 = vmatprep.subr.mxu0 0.0
  %250 = vmatpush1.msra.mxu0 0.0
  %251 = vmatprep.subr.mxu0 0.0
  %252 = vmatpush1.msra.mxu0 0.0
  %253 = vmatprep.subr.mxu0 0.0
  %254 = vmatpush1.msra.mxu0 0.0
  %255 = vmatprep.subr.mxu0 0.0
  %256 = vmatpush1.msra.mxu0 0.0
  %257 = vmatprep.subr.mxu0 0.0
  %258 = vmatpush1.msra.mxu0 0.0
  %259 = vmatprep.subr.mxu0 0.0
  %260 = vmatpush1.msra.mxu0 0.0
  %261 = vmatprep.subr.mxu0 0.0
  %262 = vmatpush1.msra.mxu0 0.0
  %263 = vmatprep.subr.mxu0 0.0
  %264 = vmatpush1.msra.mxu0 0.0
  %265 = vmatprep.subr.mxu0 0.0
  %266 = vmatpush1.msra.mxu0 0.0
  %267 = vmatprep.subr.mxu0 0.0
  %268 = vmatpush1.msra.mxu0 0.0
  %269 = vmatprep.subr.mxu0 0.0
  %270 = vmatpush1.msra.mxu0 0.0
  %271 = vmatprep.subr.mxu0 0.0
  %272 = vmatpush1.msra.mxu0 0.0
  %273 = vmatprep.subr.mxu0 0.0
  %274 = vmatpush1.msra.mxu0 0.0
  %275 = vmatprep.subr.mxu0 0.0
  %276 = vmatpush1.msra.mxu0 0.0
  %277 = vmatprep.subr.mxu0 0.0
  %278 = vmatpush1.msra.mxu0 0.0
  %279 = vmatprep.subr.mxu0 0.0
  %280 = vmatpush1.msra.mxu0 0.0
  %281 = vmatprep.subr.mxu0 0.0
  %282 = vmatpush1.msra.mxu0 0.0
  %283 = vmatprep.subr.mxu0 0.0
  %284 = vmatpush1.msra.mxu0 0.0
  %285 = vmatprep.subr.mxu0 0.0
  %286 = vmatpush1.msra.mxu0 0.0
  %287 = vmatprep.subr.mxu0 0.0
  %288 = vmatpush1.msra.mxu0 0.0
  %289 = vmatprep.subr.mxu0 0.0
  %290 = vmatpush1.msra.mxu0 0.0
  %291 = vmatprep.subr.mxu0 0.0
  %292 = vmatpush1.msra.mxu0 0.0
  %293 = vmatprep.subr.mxu0 0.0
  %294 = vmatpush1.msra.mxu0 0.0
  %295 = vmatprep.subr.mxu0 0.0
  %296 = vmatpush1.msra.mxu0 0.0
  %297 = vmatprep.mubr.f32.mxu0 0.0
  %298 = vmatmul.mubr.f32.gmra.mrb[0].mxu0 %v45
  %v299 = vpop.f32.mrb[0].mxu0
  %v300 = vadd.f32 0.0, %v299
  %v301 = vpop.f32.mrb[0].mxu0
  %302 = vmatprep.mubr.f32.mxu0 0.0
  %303 = vmatmul.mubr.f32.gmra.mrb[0].mxu0 %v48
  %v304 = vpop.f32.mrb[0].mxu0
  %v305 = vadd.f32 0.0, %v304
  %v306 = vpop.f32.mrb[0].mxu0
  %307 = vdwg.mxu0
  %310 = vrot.lane.b32.xlu0 %v228, 32
  %v311 = vpop.permute.xlu0 %310
  %312 = vrot.lane.b32.xlu0 %v229, 32
  %v313 = vpop.permute.xlu0 %312
  %v316 = vsel %vm230, %v300, %v311
  %v317 = vsel %vm230, %v305, %v313
  %v318 = vld [vmem:[%s4] sm:$0xff]
  %v319 = vld [vmem:[%s4 + $0x8] sm:$0xff]
  %v320 = vld [vmem:[%s4 + $0x10] sm:$0xff]
  %v321 = vld [vmem:[%s4 + $0x18] sm:$0xff]
  %v322 = vld [vmem:[%s4 + $0x20] sm:$0xff]
  %v323 = vld [vmem:[%s4 + $0x28] sm:$0xff]
  %v324 = vld [vmem:[%s4 + $0x30] sm:$0xff]
  %v325 = vld [vmem:[%s4 + $0x38] sm:$0xff]
  %v326 = vld [vmem:[#allocation2] sm:$0x1]
  %v328 = vlaneseq
  %v329 = vshrl.u32 %v328, 7
  %v330 = vsub.s32 0, %v329
  %v331 = vrot.slane %v326, %v330
  %vm333 = vcmask 523264
  %v335 = vsel %vm333, %v316, 0
  %v338 = vsel %vm333, %v317, 0
  %340 = vmatprep.subr.mxu0 0.0
  %341 = vmatpush1.msra.mxu0 %v318
  %342 = vmatprep.subr.mxu0 0.0
  %343 = vmatpush1.msra.mxu0 %v319
  %344 = vmatprep.subr.mxu0 0.0
  %345 = vmatpush1.msra.mxu0 %v320
  %346 = vmatprep.subr.mxu0 0.0
  %347 = vmatpush1.msra.mxu0 %v321
  %348 = vmatprep.subr.mxu0 0.0
  %349 = vmatpush1.msra.mxu0 %v322
  %350 = vmatprep.subr.mxu0 0.0
  %351 = vmatpush1.msra.mxu0 %v323
  %352 = vmatprep.subr.mxu0 0.0
  %353 = vmatpush1.msra.mxu0 %v324
  %354 = vmatprep.subr.mxu0 0.0
  %355 = vmatpush1.msra.mxu0 %v325
  %356 = vmatprep.subr.mxu0 0.0
  %357 = vmatpush1.msra.mxu0 0.0
  %358 = vmatprep.subr.mxu0 0.0
  %359 = vmatpush1.msra.mxu0 0.0
  %360 = vmatprep.subr.mxu0 0.0
  %361 = vmatpush1.msra.mxu0 0.0
  %362 = vmatprep.subr.mxu0 0.0
  %363 = vmatpush1.msra.mxu0 0.0
  %364 = vmatprep.subr.mxu0 0.0
  %365 = vmatpush1.msra.mxu0 0.0
  %366 = vmatprep.subr.mxu0 0.0
  %367 = vmatpush1.msra.mxu0 0.0
  %368 = vmatprep.subr.mxu0 0.0
  %369 = vmatpush1.msra.mxu0 0.0
  %370 = vmatprep.subr.mxu0 0.0
  %371 = vmatpush1.msra.mxu0 0.0
  %372 = vmatprep.subr.mxu0 0.0
  %373 = vmatpush1.msra.mxu0 0.0
  %374 = vmatprep.subr.mxu0 0.0
  %375 = vmatpush1.msra.mxu0 0.0
  %376 = vmatprep.subr.mxu0 0.0
  %377 = vmatpush1.msra.mxu0 0.0
  %378 = vmatprep.subr.mxu0 0.0
  %379 = vmatpush1.msra.mxu0 0.0
  %380 = vmatprep.subr.mxu0 0.0
  %381 = vmatpush1.msra.mxu0 0.0
  %382 = vmatprep.subr.mxu0 0.0
  %383 = vmatpush1.msra.mxu0 0.0
  %384 = vmatprep.subr.mxu0 0.0
  %385 = vmatpush1.msra.mxu0 0.0
  %386 = vmatprep.subr.mxu0 0.0
  %387 = vmatpush1.msra.mxu0 0.0
  %388 = vmatprep.subr.mxu0 0.0
  %389 = vmatpush1.msra.mxu0 0.0
  %390 = vmatprep.subr.mxu0 0.0
  %391 = vmatpush1.msra.mxu0 0.0
  %392 = vmatprep.subr.mxu0 0.0
  %393 = vmatpush1.msra.mxu0 0.0
  %394 = vmatprep.subr.mxu0 0.0
  %395 = vmatpush1.msra.mxu0 0.0
  %396 = vmatprep.subr.mxu0 0.0
  %397 = vmatpush1.msra.mxu0 0.0
  %398 = vmatprep.subr.mxu0 0.0
  %399 = vmatpush1.msra.mxu0 0.0
  %400 = vmatprep.subr.mxu0 0.0
  %401 = vmatpush1.msra.mxu0 0.0
  %402 = vmatprep.subr.mxu0 0.0
  %403 = vmatpush1.msra.mxu0 0.0
  %404 = vmatprep.mubr.f32.mxu0 0.0
  %405 = vmatmul.mubr.f32.gmra.mrb[0].mxu0 %v335
  %v406 = vpop.f32.mrb[0].mxu0
  %v407 = vadd.f32 %v331, %v406
  %v408 = vpop.f32.mrb[0].mxu0
  %409 = vmatprep.mubr.f32.mxu0 0.0
  %410 = vmatmul.mubr.f32.gmra.mrb[0].mxu0 %v338
  %v411 = vpop.f32.mrb[0].mxu0
  %v412 = vadd.f32 %v331, %v411
  %v413 = vpop.f32.mrb[0].mxu0
  %414 = vdwg.mxu0
  %vm415 = vcmask 7168
  %416 = vst.msk [vmem:[%s7] sm:$0xff] %vm415, %v407
  %417 = vst.msk [vmem:[%s7 + $0x8] sm:$0xff] %vm415, %v412
  %s418 = scalar_lea.vmem %s0, 16
  %v419 = vld [vmem:[%s418] sm:$0xff]
  %v420 = vld [vmem:[%s418 + $0x8] sm:$0xff]
  %s421 = scalar_lea.vmem %s1, 16
  %v422 = vld [vmem:[%s421] sm:$0xff]
  %v423 = vld [vmem:[%s421 + $0x8] sm:$0xff]
  %v424 = vsel %vm31, %v419, 0.0
  %425 = vadd.xlane.f32.xlu0 %v424
  %v426 = vpop.xlane.xlu0 %425
  %v427 = vsel %vm31, %v420, 0.0
  %428 = vadd.xlane.f32.xlu0 %v427
  %v429 = vpop.xlane.xlu0 %428
  %v430 = vmax.f32 %v426, 1.0
  %v431 = vmax.f32 %v429, 1.0
  %v432 = vrcp.pop %v430
  %v433 = vmul.f32 1.0, %v432
  %v434 = vrcp.pop %v431
  %v435 = vmul.f32 1.0, %v434
  %v437 = vsel %vm31, %v419, 0
  %v440 = vsel %vm31, %v420, 0
  %442 = vmatprep.subr.mxu0 0.0
  %443 = vmatpush1.msra.mxu0 %v422
  %444 = vmatprep.subr.mxu0 0.0
  %445 = vmatpush1.msra.mxu0 %v423
  %446 = vmatprep.subr.mxu0 0.0
  %447 = vmatpush1.msra.mxu0 0.0
  %448 = vmatprep.subr.mxu0 0.0
  %449 = vmatpush1.msra.mxu0 0.0
  %450 = vmatprep.subr.mxu0 0.0
  %451 = vmatpush1.msra.mxu0 0.0
  %452 = vmatprep.subr.mxu0 0.0
  %453 = vmatpush1.msra.mxu0 0.0
  %454 = vmatprep.subr.mxu0 0.0
  %455 = vmatpush1.msra.mxu0 0.0
  %456 = vmatprep.subr.mxu0 0.0
  %457 = vmatpush1.msra.mxu0 0.0
  %458 = vmatprep.subr.mxu0 0.0
  %459 = vmatpush1.msra.mxu0 0.0
  %460 = vmatprep.subr.mxu0 0.0
  %461 = vmatpush1.msra.mxu0 0.0
  %462 = vmatprep.subr.mxu0 0.0
  %463 = vmatpush1.msra.mxu0 0.0
  %464 = vmatprep.subr.mxu0 0.0
  %465 = vmatpush1.msra.mxu0 0.0
  %466 = vmatprep.subr.mxu0 0.0
  %467 = vmatpush1.msra.mxu0 0.0
  %468 = vmatprep.subr.mxu0 0.0
  %469 = vmatpush1.msra.mxu0 0.0
  %470 = vmatprep.subr.mxu0 0.0
  %471 = vmatpush1.msra.mxu0 0.0
  %472 = vmatprep.subr.mxu0 0.0
  %473 = vmatpush1.msra.mxu0 0.0
  %474 = vmatprep.subr.mxu0 0.0
  %475 = vmatpush1.msra.mxu0 0.0
  %476 = vmatprep.subr.mxu0 0.0
  %477 = vmatpush1.msra.mxu0 0.0
  %478 = vmatprep.subr.mxu0 0.0
  %479 = vmatpush1.msra.mxu0 0.0
  %480 = vmatprep.subr.mxu0 0.0
  %481 = vmatpush1.msra.mxu0 0.0
  %482 = vmatprep.subr.mxu0 0.0
  %483 = vmatpush1.msra.mxu0 0.0
  %484 = vmatprep.subr.mxu0 0.0
  %485 = vmatpush1.msra.mxu0 0.0
  %486 = vmatprep.subr.mxu0 0.0
  %487 = vmatpush1.msra.mxu0 0.0
  %488 = vmatprep.subr.mxu0 0.0
  %489 = vmatpush1.msra.mxu0 0.0
  %490 = vmatprep.subr.mxu0 0.0
  %491 = vmatpush1.msra.mxu0 0.0
  %492 = vmatprep.subr.mxu0 0.0
  %493 = vmatpush1.msra.mxu0 0.0
  %494 = vmatprep.subr.mxu0 0.0
  %495 = vmatpush1.msra.mxu0 0.0
  %496 = vmatprep.subr.mxu0 0.0
  %497 = vmatpush1.msra.mxu0 0.0
  %498 = vmatprep.subr.mxu0 0.0
  %499 = vmatpush1.msra.mxu0 0.0
  %500 = vmatprep.subr.mxu0 0.0
  %501 = vmatpush1.msra.mxu0 0.0
  %502 = vmatprep.subr.mxu0 0.0
  %503 = vmatpush1.msra.mxu0 0.0
  %504 = vmatprep.subr.mxu0 0.0
  %505 = vmatpush1.msra.mxu0 0.0
  %506 = vmatprep.mubr.f32.mxu0 0.0
  %507 = vmatmul.mubr.f32.gmra.mrb[0].mxu0 %v437
  %v508 = vpop.f32.mrb[0].mxu0
  %v509 = vadd.f32 0.0, %v508
  %v510 = vpop.f32.mrb[0].mxu0
  %511 = vmatprep.mubr.f32.mxu0 0.0
  %512 = vmatmul.mubr.f32.gmra.mrb[0].mxu0 %v440
  %v513 = vpop.f32.mrb[0].mxu0
  %v514 = vadd.f32 0.0, %v513
  %v515 = vpop.f32.mrb[0].mxu0
  %516 = vdwg.mxu0
  %v517 = vmul.f32 %v509, %v433
  %v518 = vmul.f32 %v514, %v435
  %521 = vrot.lane.b32.xlu0 %v422, 8
  %v522 = vpop.permute.xlu0 %521
  %523 = vrot.lane.b32.xlu0 %v423, 8
  %v524 = vpop.permute.xlu0 %523
  %v527 = vsel %vm135, %v517, %v522
  %v528 = vsel %vm135, %v518, %v524
  %v529 = vld [vmem:[%s2] sm:$0xff]
  %v530 = vld [vmem:[%s2 + $0x8] sm:$0xff]
  %v531 = vld [vmem:[%s3] sm:$0x1]
  %v533 = vlaneseq
  %v534 = vshrl.u32 %v533, 7
  %v535 = vsub.s32 0, %v534
  %v536 = vrot.slane %v531, %v535
  %v539 = vsel %vm31, %v527, 0
  %v542 = vsel %vm31, %v528, 0
  %544 = vmatprep.subr.mxu0 0.0
  %545 = vmatpush1.msra.mxu0 %v529
  %546 = vmatprep.subr.mxu0 0.0
  %547 = vmatpush1.msra.mxu0 %v530
  %548 = vmatprep.subr.mxu0 0.0
  %549 = vmatpush1.msra.mxu0 0.0
  %550 = vmatprep.subr.mxu0 0.0
  %551 = vmatpush1.msra.mxu0 0.0
  %552 = vmatprep.subr.mxu0 0.0
  %553 = vmatpush1.msra.mxu0 0.0
  %554 = vmatprep.subr.mxu0 0.0
  %555 = vmatpush1.msra.mxu0 0.0
  %556 = vmatprep.subr.mxu0 0.0
  %557 = vmatpush1.msra.mxu0 0.0
  %558 = vmatprep.subr.mxu0 0.0
  %559 = vmatpush1.msra.mxu0 0.0
  %560 = vmatprep.subr.mxu0 0.0
  %561 = vmatpush1.msra.mxu0 0.0
  %562 = vmatprep.subr.mxu0 0.0
  %563 = vmatpush1.msra.mxu0 0.0
  %564 = vmatprep.subr.mxu0 0.0
  %565 = vmatpush1.msra.mxu0 0.0
  %566 = vmatprep.subr.mxu0 0.0
  %567 = vmatpush1.msra.mxu0 0.0
  %568 = vmatprep.subr.mxu0 0.0
  %569 = vmatpush1.msra.mxu0 0.0
  %570 = vmatprep.subr.mxu0 0.0
  %571 = vmatpush1.msra.mxu0 0.0
  %572 = vmatprep.subr.mxu0 0.0
  %573 = vmatpush1.msra.mxu0 0.0
  %574 = vmatprep.subr.mxu0 0.0
  %575 = vmatpush1.msra.mxu0 0.0
  %576 = vmatprep.subr.mxu0 0.0
  %577 = vmatpush1.msra.mxu0 0.0
  %578 = vmatprep.subr.mxu0 0.0
  %579 = vmatpush1.msra.mxu0 0.0
  %580 = vmatprep.subr.mxu0 0.0
  %581 = vmatpush1.msra.mxu0 0.0
  %582 = vmatprep.subr.mxu0 0.0
  %583 = vmatpush1.msra.mxu0 0.0
  %584 = vmatprep.subr.mxu0 0.0
  %585 = vmatpush1.msra.mxu0 0.0
  %586 = vmatprep.subr.mxu0 0.0
  %587 = vmatpush1.msra.mxu0 0.0
  %588 = vmatprep.subr.mxu0 0.0
  %589 = vmatpush1.msra.mxu0 0.0
  %590 = vmatprep.subr.mxu0 0.0
  %591 = vmatpush1.msra.mxu0 0.0
  %592 = vmatprep.subr.mxu0 0.0
  %593 = vmatpush1.msra.mxu0 0.0
  %594 = vmatprep.subr.mxu0 0.0
  %595 = vmatpush1.msra.mxu0 0.0
  %596 = vmatprep.subr.mxu0 0.0
  %597 = vmatpush1.msra.mxu0 0.0
  %598 = vmatprep.subr.mxu0 0.0
  %599 = vmatpush1.msra.mxu0 0.0
  %600 = vmatprep.subr.mxu0 0.0
  %601 = vmatpush1.msra.mxu0 0.0
  %602 = vmatprep.subr.mxu0 0.0
  %603 = vmatpush1.msra.mxu0 0.0
  %604 = vmatprep.subr.mxu0 0.0
  %605 = vmatpush1.msra.mxu0 0.0
  %606 = vmatprep.subr.mxu0 0.0
  %607 = vmatpush1.msra.mxu0 0.0
  %608 = vmatprep.mubr.f32.mxu0 0.0
  %609 = vmatmul.mubr.f32.gmra.mrb[0].mxu0 %v539
  %v610 = vpop.f32.mrb[0].mxu0
  %v611 = vadd.f32 %v536, %v610
  %v612 = vpop.f32.mrb[0].mxu0
  %613 = vmatprep.mubr.f32.mxu0 0.0
  %614 = vmatmul.mubr.f32.gmra.mrb[0].mxu0 %v542
  %v615 = vpop.f32.mrb[0].mxu0
  %v616 = vadd.f32 %v536, %v615
  %v617 = vpop.f32.mrb[0].mxu0
  %618 = vdwg.mxu0
  %v619 = vmax.f32 %v611, 0.0
  %v620 = vmax.f32 %v616, 0.0
  %s621 = scalar_lea.vmem %s6, 16
  %622 = vst.msk [vmem:[%s621] sm:$0xff] %vm230, %v619
  %623 = vst.msk [vmem:[%s621 + $0x8] sm:$0xff] %vm230, %v620
  %624 = vmatprep.subr.mxu0 0.0
  %625 = vmatpush1.msra.mxu0 %v619
  %626 = vmatprep.subr.mxu0 0.0
  %627 = vmatpush1.msra.mxu0 %v620
  %628 = vmatprep.subr.mxu0 0.0
  %629 = vmatpush1.msra.mxu0 0.0
  %630 = vmatprep.subr.mxu0 0.0
  %631 = vmatpush1.msra.mxu0 0.0
  %632 = vmatprep.subr.mxu0 0.0
  %633 = vmatpush1.msra.mxu0 0.0
  %634 = vmatprep.subr.mxu0 0.0
  %635 = vmatpush1.msra.mxu0 0.0
  %636 = vmatprep.subr.mxu0 0.0
  %637 = vmatpush1.msra.mxu0 0.0
  %638 = vmatprep.subr.mxu0 0.0
  %639 = vmatpush1.msra.mxu0 0.0
  %640 = vmatprep.subr.mxu0 0.0
  %641 = vmatpush1.msra.mxu0 0.0
  %642 = vmatprep.subr.mxu0 0.0
  %643 = vmatpush1.msra.mxu0 0.0
  %644 = vmatprep.subr.mxu0 0.0
  %645 = vmatpush1.msra.mxu0 0.0
  %646 = vmatprep.subr.mxu0 0.0
  %647 = vmatpush1.msra.mxu0 0.0
  %648 = vmatprep.subr.mxu0 0.0
  %649 = vmatpush1.msra.mxu0 0.0
  %650 = vmatprep.subr.mxu0 0.0
  %651 = vmatpush1.msra.mxu0 0.0
  %652 = vmatprep.subr.mxu0 0.0
  %653 = vmatpush1.msra.mxu0 0.0
  %654 = vmatprep.subr.mxu0 0.0
  %655 = vmatpush1.msra.mxu0 0.0
  %656 = vmatprep.subr.mxu0 0.0
  %657 = vmatpush1.msra.mxu0 0.0
  %658 = vmatprep.subr.mxu0 0.0
  %659 = vmatpush1.msra.mxu0 0.0
  %660 = vmatprep.subr.mxu0 0.0
  %661 = vmatpush1.msra.mxu0 0.0
  %662 = vmatprep.subr.mxu0 0.0
  %663 = vmatpush1.msra.mxu0 0.0
  %664 = vmatprep.subr.mxu0 0.0
  %665 = vmatpush1.msra.mxu0 0.0
  %666 = vmatprep.subr.mxu0 0.0
  %667 = vmatpush1.msra.mxu0 0.0
  %668 = vmatprep.subr.mxu0 0.0
  %669 = vmatpush1.msra.mxu0 0.0
  %670 = vmatprep.subr.mxu0 0.0
  %671 = vmatpush1.msra.mxu0 0.0
  %672 = vmatprep.subr.mxu0 0.0
  %673 = vmatpush1.msra.mxu0 0.0
  %674 = vmatprep.subr.mxu0 0.0
  %675 = vmatpush1.msra.mxu0 0.0
  %676 = vmatprep.subr.mxu0 0.0
  %677 = vmatpush1.msra.mxu0 0.0
  %678 = vmatprep.subr.mxu0 0.0
  %679 = vmatpush1.msra.mxu0 0.0
  %680 = vmatprep.subr.mxu0 0.0
  %681 = vmatpush1.msra.mxu0 0.0
  %682 = vmatprep.subr.mxu0 0.0
  %683 = vmatpush1.msra.mxu0 0.0
  %684 = vmatprep.subr.mxu0 0.0
  %685 = vmatpush1.msra.mxu0 0.0
  %686 = vmatprep.subr.mxu0 0.0
  %687 = vmatpush1.msra.mxu0 0.0
  %688 = vmatprep.mubr.f32.mxu0 0.0
  %689 = vmatmul.mubr.f32.gmra.mrb[0].mxu0 %v437
  %v690 = vpop.f32.mrb[0].mxu0
  %v691 = vadd.f32 0.0, %v690
  %v692 = vpop.f32.mrb[0].mxu0
  %693 = vmatprep.mubr.f32.mxu0 0.0
  %694 = vmatmul.mubr.f32.gmra.mrb[0].mxu0 %v440
  %v695 = vpop.f32.mrb[0].mxu0
  %v696 = vadd.f32 0.0, %v695
  %v697 = vpop.f32.mrb[0].mxu0
  %698 = vdwg.mxu0
  %701 = vrot.lane.b32.xlu0 %v619, 32
  %v702 = vpop.permute.xlu0 %701
  %703 = vrot.lane.b32.xlu0 %v620, 32
  %v704 = vpop.permute.xlu0 %703
  %v707 = vsel %vm230, %v691, %v702
  %v708 = vsel %vm230, %v696, %v704
  %v709 = vld [vmem:[%s4] sm:$0xff]
  %v710 = vld [vmem:[%s4 + $0x8] sm:$0xff]
  %v711 = vld [vmem:[%s4 + $0x10] sm:$0xff]
  %v712 = vld [vmem:[%s4 + $0x18] sm:$0xff]
  %v713 = vld [vmem:[%s4 + $0x20] sm:$0xff]
  %v714 = vld [vmem:[%s4 + $0x28] sm:$0xff]
  %v715 = vld [vmem:[%s4 + $0x30] sm:$0xff]
  %v716 = vld [vmem:[%s4 + $0x38] sm:$0xff]
  %v717 = vld [vmem:[#allocation2] sm:$0x1]
  %v719 = vlaneseq
  %v720 = vshrl.u32 %v719, 7
  %v721 = vsub.s32 0, %v720
  %v722 = vrot.slane %v717, %v721
  %v725 = vsel %vm333, %v707, 0
  %v728 = vsel %vm333, %v708, 0
  %730 = vmatprep.subr.mxu0 0.0
  %731 = vmatpush1.msra.mxu0 %v709
  %732 = vmatprep.subr.mxu0 0.0
  %733 = vmatpush1.msra.mxu0 %v710
  %734 = vmatprep.subr.mxu0 0.0
  %735 = vmatpush1.msra.mxu0 %v711
  %736 = vmatprep.subr.mxu0 0.0
  %737 = vmatpush1.msra.mxu0 %v712
  %738 = vmatprep.subr.mxu0 0.0
  %739 = vmatpush1.msra.mxu0 %v713
  %740 = vmatprep.subr.mxu0 0.0
  %741 = vmatpush1.msra.mxu0 %v714
  %742 = vmatprep.subr.mxu0 0.0
  %743 = vmatpush1.msra.mxu0 %v715
  %744 = vmatprep.subr.mxu0 0.0
  %745 = vmatpush1.msra.mxu0 %v716
  %746 = vmatprep.subr.mxu0 0.0
  %747 = vmatpush1.msra.mxu0 0.0
  %748 = vmatprep.subr.mxu0 0.0
  %749 = vmatpush1.msra.mxu0 0.0
  %750 = vmatprep.subr.mxu0 0.0
  %751 = vmatpush1.msra.mxu0 0.0
  %752 = vmatprep.subr.mxu0 0.0
  %753 = vmatpush1.msra.mxu0 0.0
  %754 = vmatprep.subr.mxu0 0.0
  %755 = vmatpush1.msra.mxu0 0.0
  %756 = vmatprep.subr.mxu0 0.0
  %757 = vmatpush1.msra.mxu0 0.0
  %758 = vmatprep.subr.mxu0 0.0
  %759 = vmatpush1.msra.mxu0 0.0
  %760 = vmatprep.subr.mxu0 0.0
  %761 = vmatpush1.msra.mxu0 0.0
  %762 = vmatprep.subr.mxu0 0.0
  %763 = vmatpush1.msra.mxu0 0.0
  %764 = vmatprep.subr.mxu0 0.0
  %765 = vmatpush1.msra.mxu0 0.0
  %766 = vmatprep.subr.mxu0 0.0
  %767 = vmatpush1.msra.mxu0 0.0
  %768 = vmatprep.subr.mxu0 0.0
  %769 = vmatpush1.msra.mxu0 0.0
  %770 = vmatprep.subr.mxu0 0.0
  %771 = vmatpush1.msra.mxu0 0.0
  %772 = vmatprep.subr.mxu0 0.0
  %773 = vmatpush1.msra.mxu0 0.0
  %774 = vmatprep.subr.mxu0 0.0
  %775 = vmatpush1.msra.mxu0 0.0
  %776 = vmatprep.subr.mxu0 0.0
  %777 = vmatpush1.msra.mxu0 0.0
  %778 = vmatprep.subr.mxu0 0.0
  %779 = vmatpush1.msra.mxu0 0.0
  %780 = vmatprep.subr.mxu0 0.0
  %781 = vmatpush1.msra.mxu0 0.0
  %782 = vmatprep.subr.mxu0 0.0
  %783 = vmatpush1.msra.mxu0 0.0
  %784 = vmatprep.subr.mxu0 0.0
  %785 = vmatpush1.msra.mxu0 0.0
  %786 = vmatprep.subr.mxu0 0.0
  %787 = vmatpush1.msra.mxu0 0.0
  %788 = vmatprep.subr.mxu0 0.0
  %789 = vmatpush1.msra.mxu0 0.0
  %790 = vmatprep.subr.mxu0 0.0
  %791 = vmatpush1.msra.mxu0 0.0
  %792 = vmatprep.subr.mxu0 0.0
  %793 = vmatpush1.msra.mxu0 0.0
  %794 = vmatprep.mubr.f32.mxu0 0.0
  %795 = vmatmul.mubr.f32.gmra.mrb[0].mxu0 %v725
  %v796 = vpop.f32.mrb[0].mxu0
  %v797 = vadd.f32 %v722, %v796
  %v798 = vpop.f32.mrb[0].mxu0
  %799 = vmatprep.mubr.f32.mxu0 0.0
  %800 = vmatmul.mubr.f32.gmra.mrb[0].mxu0 %v728
  %v801 = vpop.f32.mrb[0].mxu0
  %v802 = vadd.f32 %v722, %v801
  %v803 = vpop.f32.mrb[0].mxu0
  %804 = vdwg.mxu0
  %s805 = scalar_lea.vmem %s7, 16
  %806 = vst.msk [vmem:[%s805] sm:$0xff] %vm415, %v797
  %807 = vst.msk [vmem:[%s805 + $0x8] sm:$0xff] %vm415, %v802
  // Predicated region
  $region26: #{net_forward.4} parent=0 // pred_check
    _
  $region27: #{net_forward.4} parent=0 // pred_check_branch
    %809 = sbr.rel (0) target = $region29
  $region28: #{net_forward.4} parent=0 // pred_region
    _
  $region29: #{net_forward.4} parent=0 // pred_fallthru
    _
  // Predicated region
  $region30: #{net_forward.4} parent=0 // pred_check
    _
  $region31: #{net_forward.4} parent=0 // pred_check_branch
    %811 = sbr.rel (0) target = $region33
  $region32: #{net_forward.4} parent=0 // pred_region
    _
  $region33: #{net_forward.4} parent=0 // pred_fallthru
    _
  // Predicated region
  $region34: #{net_forward.4} parent=0 // pred_check
    _
  $region35: #{net_forward.4} parent=0 // pred_check_branch
    %813 = sbr.rel (0) target = $region37
  $region36: #{net_forward.4} parent=0 // pred_region
    _
  $region37: #{net_forward.4} parent=0 // pred_fallthru
    _
  // Predicated region
  $region38: #{net_forward.4} parent=0 // pred_check
    _
  $region39: #{net_forward.4} parent=0 // pred_check_branch
    %815 = sbr.rel (0) target = $region41
  $region40: #{net_forward.4} parent=0 // pred_region
    _
  $region41: #{net_forward.4} parent=0 // pred_fallthru
    _

// kernel: net_forward.5
$region0: #{net_forward.5}
  #allocation0 [shape = 'u32[]', space=smem, size = 0x4, offset = 0x4, fixed_abs, tag = 'smem constant byte address 0x4 - core index']
  #allocation1 [shape = 'u32[144,128]{1,0:T(1,128)}', space=vmem, size = 0x12000, scoped, tag = 'internal scratch']
  #allocation2 [shape = 'f32[1,1]{1,0:T(1,128)S(1)}', space=vmem, size = 0x200, scoped, tag = 'scoped memory for net_forward.5']
  %s0 = inlined_call_operand.vmem [shape: f32[2,8,8], index: 0, kind: input, shape index: {}]
  %s1 = inlined_call_operand.vmem [shape: f32[2,8,32], index: 1, kind: input, shape index: {}]
  %s2 = inlined_call_operand.vmem [shape: f32[64,32], index: 2, kind: input, shape index: {}]
  %s3 = inlined_call_operand.vmem [shape: f32[1,32], index: 3, kind: input, shape index: {}]
  %s4 = inlined_call_operand.vmem [shape: f32[64,1], index: 4, kind: input, shape index: {}]
  %s5 = inlined_call_operand.<no memory space> [shape: f32[1,1], index: 5, kind: input, shape index: {}]
  %s6 = inlined_call_operand.vmem [shape: f32[2,8,32], index: 6, kind: output, shape index: {0}]
  %s7 = inlined_call_operand.vmem [shape: f32[2,8,1], index: 7, kind: output, shape index: {1}]
  %s8 = inlined_call_operand.vmem [shape: f32[2,1,32], index: 8, kind: output, shape index: {2}]
  %s9 = inlined_call_operand.vmem [shape: f32[2,1,32], index: 9, kind: output, shape index: {3}]
  %10 = xla_tuple %s6, %s7, %s8, %s9
  %s11 = sld [smem:[#allocation0]]
  $region58: #{net_forward.5} parent=0
    _
  %s13 = ssub.s32 1, %s11
  %s14 = scalar_select 0, %s13, %s11
  %v15 = vstv %s5
  %16 = vst [vmem:[#allocation2] sm:$0x1] %v15
  // Predicated region
  $region2: #{net_forward.5} parent=0 // pred_check
    _
  $region3: #{net_forward.5} parent=0 // pred_check_branch
    %18 = sbr.rel (0) target = $region5
  $region4: #{net_forward.5} parent=0 // pred_region
    _
  $region5: #{net_forward.5} parent=0 // pred_fallthru
    _
  // Predicated region
  $region6: #{net_forward.5} parent=0 // pred_check
    _
  $region7: #{net_forward.5} parent=0 // pred_check_branch
    %20 = sbr.rel (0) target = $region9
  $region8: #{net_forward.5} parent=0 // pred_region
    _
  $region9: #{net_forward.5} parent=0 // pred_fallthru
    _
  // Predicated region
  $region10: #{net_forward.5} parent=0 // pred_check
    _
  $region11: #{net_forward.5} parent=0 // pred_check_branch
    %22 = sbr.rel (0) target = $region13
  $region12: #{net_forward.5} parent=0 // pred_region
    _
  $region13: #{net_forward.5} parent=0 // pred_fallthru
    _
  // Predicated region
  $region14: #{net_forward.5} parent=0 // pred_check
    _
  $region15: #{net_forward.5} parent=0 // pred_check_branch
    %24 = sbr.rel (0) target = $region17
  $region16: #{net_forward.5} parent=0 // pred_region
    _
  $region17: #{net_forward.5} parent=0 // pred_fallthru
    _
  // Predicated region
  $region18: #{net_forward.5} parent=0 // pred_check
    _
  $region19: #{net_forward.5} parent=0 // pred_check_branch
    %26 = sbr.rel (0) target = $region21
  $region20: #{net_forward.5} parent=0 // pred_region
    _
  $region21: #{net_forward.5} parent=0 // pred_fallthru
    _
  // Predicated region
  $region22: #{net_forward.5} parent=0 // pred_check
    _
  $region23: #{net_forward.5} parent=0 // pred_check_branch
    %28 = sbr.rel (0) target = $region25
  $region24: #{net_forward.5} parent=0 // pred_region
    _
  $region25: #{net_forward.5} parent=0 // pred_fallthru
    _
  %v29 = vld [vmem:[%s0] sm:$0xff]
  %v30 = vld [vmem:[%s1] sm:$0xff]
  %vm31 = vcmask 261120
  %v32 = vsel %vm31, %v30, -inf
  %v33 = vrot.slane %v32, 4
  %v34 = vmax.f32 %v32, %v33
  %v35 = vrot.slane %v34, 2
  %v36 = vmax.f32 %v34, %v35
  %v37 = vrot.slane %v36, 1
  %v38 = vmax.f32 %v36, %v37
  %vm39 = vcmask 253952
  %40 = vst.msk [vmem:[%s8] sm:$0x1] %vm39, %v38
  %v41 = vsel %vm31, %v30, 0.0
  %v42 = vrot.slane %v41, 4
  %v43 = vadd.f32 %v41, %v42
  %v44 = vrot.slane %v43, 2
  %v45 = vadd.f32 %v43, %v44
  %v46 = vrot.slane %v45, 1
  %v47 = vadd.f32 %v45, %v46
  %v48 = vrcp.pop 8.0
  %v49 = vmul.f32 %v47, %v48
  %50 = vst.msk [vmem:[%s9] sm:$0x1] %vm39, %v49
  %vm51 = vcmask 64512
  %v52 = vsel %vm51, %v29, 0.0
  %53 = vadd.xlane.f32.xlu0 %v52
  %v54 = vpop.xlane.xlu0 %53
  %v55 = vmax.f32 %v54, 1.0
  %v56 = vrcp.pop %v55
  %v57 = vmul.f32 1.0, %v56
  %v59 = vsel %vm51, %v29, 0
  %61 = vmatprep.subr.mxu0 0.0
  %62 = vmatpush1.msra.mxu0 %v30
  %63 = vmatprep.subr.mxu0 0.0
  %64 = vmatpush1.msra.mxu0 0.0
  %65 = vmatprep.subr.mxu0 0.0
  %66 = vmatpush1.msra.mxu0 0.0
  %67 = vmatprep.subr.mxu0 0.0
  %68 = vmatpush1.msra.mxu0 0.0
  %69 = vmatprep.subr.mxu0 0.0
  %70 = vmatpush1.msra.mxu0 0.0
  %71 = vmatprep.subr.mxu0 0.0
  %72 = vmatpush1.msra.mxu0 0.0
  %73 = vmatprep.subr.mxu0 0.0
  %74 = vmatpush1.msra.mxu0 0.0
  %75 = vmatprep.subr.mxu0 0.0
  %76 = vmatpush1.msra.mxu0 0.0
  %77 = vmatprep.subr.mxu0 0.0
  %78 = vmatpush1.msra.mxu0 0.0
  %79 = vmatprep.subr.mxu0 0.0
  %80 = vmatpush1.msra.mxu0 0.0
  %81 = vmatprep.subr.mxu0 0.0
  %82 = vmatpush1.msra.mxu0 0.0
  %83 = vmatprep.subr.mxu0 0.0
  %84 = vmatpush1.msra.mxu0 0.0
  %85 = vmatprep.subr.mxu0 0.0
  %86 = vmatpush1.msra.mxu0 0.0
  %87 = vmatprep.subr.mxu0 0.0
  %88 = vmatpush1.msra.mxu0 0.0
  %89 = vmatprep.subr.mxu0 0.0
  %90 = vmatpush1.msra.mxu0 0.0
  %91 = vmatprep.subr.mxu0 0.0
  %92 = vmatpush1.msra.mxu0 0.0
  %93 = vmatprep.subr.mxu0 0.0
  %94 = vmatpush1.msra.mxu0 0.0
  %95 = vmatprep.subr.mxu0 0.0
  %96 = vmatpush1.msra.mxu0 0.0
  %97 = vmatprep.subr.mxu0 0.0
  %98 = vmatpush1.msra.mxu0 0.0
  %99 = vmatprep.subr.mxu0 0.0
  %100 = vmatpush1.msra.mxu0 0.0
  %101 = vmatprep.subr.mxu0 0.0
  %102 = vmatpush1.msra.mxu0 0.0
  %103 = vmatprep.subr.mxu0 0.0
  %104 = vmatpush1.msra.mxu0 0.0
  %105 = vmatprep.subr.mxu0 0.0
  %106 = vmatpush1.msra.mxu0 0.0
  %107 = vmatprep.subr.mxu0 0.0
  %108 = vmatpush1.msra.mxu0 0.0
  %109 = vmatprep.subr.mxu0 0.0
  %110 = vmatpush1.msra.mxu0 0.0
  %111 = vmatprep.subr.mxu0 0.0
  %112 = vmatpush1.msra.mxu0 0.0
  %113 = vmatprep.subr.mxu0 0.0
  %114 = vmatpush1.msra.mxu0 0.0
  %115 = vmatprep.subr.mxu0 0.0
  %116 = vmatpush1.msra.mxu0 0.0
  %117 = vmatprep.subr.mxu0 0.0
  %118 = vmatpush1.msra.mxu0 0.0
  %119 = vmatprep.subr.mxu0 0.0
  %120 = vmatpush1.msra.mxu0 0.0
  %121 = vmatprep.subr.mxu0 0.0
  %122 = vmatpush1.msra.mxu0 0.0
  %123 = vmatprep.subr.mxu0 0.0
  %124 = vmatpush1.msra.mxu0 0.0
  %125 = vmatprep.mubr.f32.mxu0 0.0
  %126 = vmatmul.mubr.f32.gmra.mrb[0].mxu0 %v59
  %v127 = vpop.f32.mrb[0].mxu0
  %v128 = vadd.f32 0.0, %v127
  %v129 = vpop.f32.mrb[0].mxu0
  %130 = vdwg.mxu0
  %v131 = vmul.f32 %v128, %v57
  %133 = vrot.lane.b32.xlu0 %v30, 32
  %v134 = vpop.permute.xlu0 %133
  %v136 = vsel %vm31, %v131, %v134
  %v137 = vld [vmem:[%s2] sm:$0xff]
  %v138 = vld [vmem:[%s2 + $0x8] sm:$0xff]
  %v139 = vld [vmem:[%s2 + $0x10] sm:$0xff]
  %v140 = vld [vmem:[%s2 + $0x18] sm:$0xff]
  %v141 = vld [vmem:[%s2 + $0x20] sm:$0xff]
  %v142 = vld [vmem:[%s2 + $0x28] sm:$0xff]
  %v143 = vld [vmem:[%s2 + $0x30] sm:$0xff]
  %v144 = vld [vmem:[%s2 + $0x38] sm:$0xff]
  %v145 = vld [vmem:[%s3] sm:$0x1]
  %v147 = vlaneseq
  %v148 = vshrl.u32 %v147, 7
  %v149 = vsub.s32 0, %v148
  %v150 = vrot.slane %v145, %v149
  %vm152 = vcmask 523264
  %v154 = vsel %vm152, %v136, 0
  %156 = vmatprep.subr.mxu0 0.0
  %157 = vmatpush1.msra.mxu0 %v137
  %158 = vmatprep.subr.mxu0 0.0
  %159 = vmatpush1.msra.mxu0 %v138
  %160 = vmatprep.subr.mxu0 0.0
  %161 = vmatpush1.msra.mxu0 %v139
  %162 = vmatprep.subr.mxu0 0.0
  %163 = vmatpush1.msra.mxu0 %v140
  %164 = vmatprep.subr.mxu0 0.0
  %165 = vmatpush1.msra.mxu0 %v141
  %166 = vmatprep.subr.mxu0 0.0
  %167 = vmatpush1.msra.mxu0 %v142
  %168 = vmatprep.subr.mxu0 0.0
  %169 = vmatpush1.msra.mxu0 %v143
  %170 = vmatprep.subr.mxu0 0.0
  %171 = vmatpush1.msra.mxu0 %v144
  %172 = vmatprep.subr.mxu0 0.0
  %173 = vmatpush1.msra.mxu0 0.0
  %174 = vmatprep.subr.mxu0 0.0
  %175 = vmatpush1.msra.mxu0 0.0
  %176 = vmatprep.subr.mxu0 0.0
  %177 = vmatpush1.msra.mxu0 0.0
  %178 = vmatprep.subr.mxu0 0.0
  %179 = vmatpush1.msra.mxu0 0.0
  %180 = vmatprep.subr.mxu0 0.0
  %181 = vmatpush1.msra.mxu0 0.0
  %182 = vmatprep.subr.mxu0 0.0
  %183 = vmatpush1.msra.mxu0 0.0
  %184 = vmatprep.subr.mxu0 0.0
  %185 = vmatpush1.msra.mxu0 0.0
  %186 = vmatprep.subr.mxu0 0.0
  %187 = vmatpush1.msra.mxu0 0.0
  %188 = vmatprep.subr.mxu0 0.0
  %189 = vmatpush1.msra.mxu0 0.0
  %190 = vmatprep.subr.mxu0 0.0
  %191 = vmatpush1.msra.mxu0 0.0
  %192 = vmatprep.subr.mxu0 0.0
  %193 = vmatpush1.msra.mxu0 0.0
  %194 = vmatprep.subr.mxu0 0.0
  %195 = vmatpush1.msra.mxu0 0.0
  %196 = vmatprep.subr.mxu0 0.0
  %197 = vmatpush1.msra.mxu0 0.0
  %198 = vmatprep.subr.mxu0 0.0
  %199 = vmatpush1.msra.mxu0 0.0
  %200 = vmatprep.subr.mxu0 0.0
  %201 = vmatpush1.msra.mxu0 0.0
  %202 = vmatprep.subr.mxu0 0.0
  %203 = vmatpush1.msra.mxu0 0.0
  %204 = vmatprep.subr.mxu0 0.0
  %205 = vmatpush1.msra.mxu0 0.0
  %206 = vmatprep.subr.mxu0 0.0
  %207 = vmatpush1.msra.mxu0 0.0
  %208 = vmatprep.subr.mxu0 0.0
  %209 = vmatpush1.msra.mxu0 0.0
  %210 = vmatprep.subr.mxu0 0.0
  %211 = vmatpush1.msra.mxu0 0.0
  %212 = vmatprep.subr.mxu0 0.0
  %213 = vmatpush1.msra.mxu0 0.0
  %214 = vmatprep.subr.mxu0 0.0
  %215 = vmatpush1.msra.mxu0 0.0
  %216 = vmatprep.subr.mxu0 0.0
  %217 = vmatpush1.msra.mxu0 0.0
  %218 = vmatprep.subr.mxu0 0.0
  %219 = vmatpush1.msra.mxu0 0.0
  %220 = vmatprep.mubr.f32.mxu0 0.0
  %221 = vmatmul.mubr.f32.gmra.mrb[0].mxu0 %v154
  %v222 = vpop.f32.mrb[0].mxu0
  %v223 = vadd.f32 %v150, %v222
  %v224 = vpop.f32.mrb[0].mxu0
  %225 = vdwg.mxu0
  %v226 = vmax.f32 %v223, 0.0
  %227 = vst.msk [vmem:[%s6] sm:$0xff] %vm31, %v226
  %228 = vmatprep.subr.mxu0 0.0
  %229 = vmatpush1.msra.mxu0 %v226
  %230 = vmatprep.subr.mxu0 0.0
  %231 = vmatpush1.msra.mxu0 0.0
  %232 = vmatprep.subr.mxu0 0.0
  %233 = vmatpush1.msra.mxu0 0.0
  %234 = vmatprep.subr.mxu0 0.0
  %235 = vmatpush1.msra.mxu0 0.0
  %236 = vmatprep.subr.mxu0 0.0
  %237 = vmatpush1.msra.mxu0 0.0
  %238 = vmatprep.subr.mxu0 0.0
  %239 = vmatpush1.msra.mxu0 0.0
  %240 = vmatprep.subr.mxu0 0.0
  %241 = vmatpush1.msra.mxu0 0.0
  %242 = vmatprep.subr.mxu0 0.0
  %243 = vmatpush1.msra.mxu0 0.0
  %244 = vmatprep.subr.mxu0 0.0
  %245 = vmatpush1.msra.mxu0 0.0
  %246 = vmatprep.subr.mxu0 0.0
  %247 = vmatpush1.msra.mxu0 0.0
  %248 = vmatprep.subr.mxu0 0.0
  %249 = vmatpush1.msra.mxu0 0.0
  %250 = vmatprep.subr.mxu0 0.0
  %251 = vmatpush1.msra.mxu0 0.0
  %252 = vmatprep.subr.mxu0 0.0
  %253 = vmatpush1.msra.mxu0 0.0
  %254 = vmatprep.subr.mxu0 0.0
  %255 = vmatpush1.msra.mxu0 0.0
  %256 = vmatprep.subr.mxu0 0.0
  %257 = vmatpush1.msra.mxu0 0.0
  %258 = vmatprep.subr.mxu0 0.0
  %259 = vmatpush1.msra.mxu0 0.0
  %260 = vmatprep.subr.mxu0 0.0
  %261 = vmatpush1.msra.mxu0 0.0
  %262 = vmatprep.subr.mxu0 0.0
  %263 = vmatpush1.msra.mxu0 0.0
  %264 = vmatprep.subr.mxu0 0.0
  %265 = vmatpush1.msra.mxu0 0.0
  %266 = vmatprep.subr.mxu0 0.0
  %267 = vmatpush1.msra.mxu0 0.0
  %268 = vmatprep.subr.mxu0 0.0
  %269 = vmatpush1.msra.mxu0 0.0
  %270 = vmatprep.subr.mxu0 0.0
  %271 = vmatpush1.msra.mxu0 0.0
  %272 = vmatprep.subr.mxu0 0.0
  %273 = vmatpush1.msra.mxu0 0.0
  %274 = vmatprep.subr.mxu0 0.0
  %275 = vmatpush1.msra.mxu0 0.0
  %276 = vmatprep.subr.mxu0 0.0
  %277 = vmatpush1.msra.mxu0 0.0
  %278 = vmatprep.subr.mxu0 0.0
  %279 = vmatpush1.msra.mxu0 0.0
  %280 = vmatprep.subr.mxu0 0.0
  %281 = vmatpush1.msra.mxu0 0.0
  %282 = vmatprep.subr.mxu0 0.0
  %283 = vmatpush1.msra.mxu0 0.0
  %284 = vmatprep.subr.mxu0 0.0
  %285 = vmatpush1.msra.mxu0 0.0
  %286 = vmatprep.subr.mxu0 0.0
  %287 = vmatpush1.msra.mxu0 0.0
  %288 = vmatprep.subr.mxu0 0.0
  %289 = vmatpush1.msra.mxu0 0.0
  %290 = vmatprep.subr.mxu0 0.0
  %291 = vmatpush1.msra.mxu0 0.0
  %292 = vmatprep.mubr.f32.mxu0 0.0
  %293 = vmatmul.mubr.f32.gmra.mrb[0].mxu0 %v59
  %v294 = vpop.f32.mrb[0].mxu0
  %v295 = vadd.f32 0.0, %v294
  %v296 = vpop.f32.mrb[0].mxu0
  %297 = vdwg.mxu0
  %299 = vrot.lane.b32.xlu0 %v226, 32
  %v300 = vpop.permute.xlu0 %299
  %v302 = vsel %vm31, %v295, %v300
  %v303 = vld [vmem:[%s4] sm:$0xff]
  %v304 = vld [vmem:[%s4 + $0x8] sm:$0xff]
  %v305 = vld [vmem:[%s4 + $0x10] sm:$0xff]
  %v306 = vld [vmem:[%s4 + $0x18] sm:$0xff]
  %v307 = vld [vmem:[%s4 + $0x20] sm:$0xff]
  %v308 = vld [vmem:[%s4 + $0x28] sm:$0xff]
  %v309 = vld [vmem:[%s4 + $0x30] sm:$0xff]
  %v310 = vld [vmem:[%s4 + $0x38] sm:$0xff]
  %v311 = vld [vmem:[#allocation2] sm:$0x1]
  %v313 = vlaneseq
  %v314 = vshrl.u32 %v313, 7
  %v315 = vsub.s32 0, %v314
  %v316 = vrot.slane %v311, %v315
  %v319 = vsel %vm152, %v302, 0
  %321 = vmatprep.subr.mxu0 0.0
  %322 = vmatpush1.msra.mxu0 %v303
  %323 = vmatprep.subr.mxu0 0.0
  %324 = vmatpush1.msra.mxu0 %v304
  %325 = vmatprep.subr.mxu0 0.0
  %326 = vmatpush1.msra.mxu0 %v305
  %327 = vmatprep.subr.mxu0 0.0
  %328 = vmatpush1.msra.mxu0 %v306
  %329 = vmatprep.subr.mxu0 0.0
  %330 = vmatpush1.msra.mxu0 %v307
  %331 = vmatprep.subr.mxu0 0.0
  %332 = vmatpush1.msra.mxu0 %v308
  %333 = vmatprep.subr.mxu0 0.0
  %334 = vmatpush1.msra.mxu0 %v309
  %335 = vmatprep.subr.mxu0 0.0
  %336 = vmatpush1.msra.mxu0 %v310
  %337 = vmatprep.subr.mxu0 0.0
  %338 = vmatpush1.msra.mxu0 0.0
  %339 = vmatprep.subr.mxu0 0.0
  %340 = vmatpush1.msra.mxu0 0.0
  %341 = vmatprep.subr.mxu0 0.0
  %342 = vmatpush1.msra.mxu0 0.0
  %343 = vmatprep.subr.mxu0 0.0
  %344 = vmatpush1.msra.mxu0 0.0
  %345 = vmatprep.subr.mxu0 0.0
  %346 = vmatpush1.msra.mxu0 0.0
  %347 = vmatprep.subr.mxu0 0.0
  %348 = vmatpush1.msra.mxu0 0.0
  %349 = vmatprep.subr.mxu0 0.0
  %350 = vmatpush1.msra.mxu0 0.0
  %351 = vmatprep.subr.mxu0 0.0
  %352 = vmatpush1.msra.mxu0 0.0
  %353 = vmatprep.subr.mxu0 0.0
  %354 = vmatpush1.msra.mxu0 0.0
  %355 = vmatprep.subr.mxu0 0.0
  %356 = vmatpush1.msra.mxu0 0.0
  %357 = vmatprep.subr.mxu0 0.0
  %358 = vmatpush1.msra.mxu0 0.0
  %359 = vmatprep.subr.mxu0 0.0
  %360 = vmatpush1.msra.mxu0 0.0
  %361 = vmatprep.subr.mxu0 0.0
  %362 = vmatpush1.msra.mxu0 0.0
  %363 = vmatprep.subr.mxu0 0.0
  %364 = vmatpush1.msra.mxu0 0.0
  %365 = vmatprep.subr.mxu0 0.0
  %366 = vmatpush1.msra.mxu0 0.0
  %367 = vmatprep.subr.mxu0 0.0
  %368 = vmatpush1.msra.mxu0 0.0
  %369 = vmatprep.subr.mxu0 0.0
  %370 = vmatpush1.msra.mxu0 0.0
  %371 = vmatprep.subr.mxu0 0.0
  %372 = vmatpush1.msra.mxu0 0.0
  %373 = vmatprep.subr.mxu0 0.0
  %374 = vmatpush1.msra.mxu0 0.0
  %375 = vmatprep.subr.mxu0 0.0
  %376 = vmatpush1.msra.mxu0 0.0
  %377 = vmatprep.subr.mxu0 0.0
  %378 = vmatpush1.msra.mxu0 0.0
  %379 = vmatprep.subr.mxu0 0.0
  %380 = vmatpush1.msra.mxu0 0.0
  %381 = vmatprep.subr.mxu0 0.0
  %382 = vmatpush1.msra.mxu0 0.0
  %383 = vmatprep.subr.mxu0 0.0
  %384 = vmatpush1.msra.mxu0 0.0
  %385 = vmatprep.mubr.f32.mxu0 0.0
  %386 = vmatmul.mubr.f32.gmra.mrb[0].mxu0 %v319
  %v387 = vpop.f32.mrb[0].mxu0
  %v388 = vadd.f32 %v316, %v387
  %v389 = vpop.f32.mrb[0].mxu0
  %390 = vdwg.mxu0
  %vm391 = vcmask 7168
  %392 = vst.msk [vmem:[%s7] sm:$0xff] %vm391, %v388
  %s393 = scalar_lea.vmem %s0, 8
  %v394 = vld [vmem:[%s393] sm:$0xff]
  %s395 = scalar_lea.vmem %s1, 8
  %v396 = vld [vmem:[%s395] sm:$0xff]
  %v397 = vsel %vm31, %v396, -inf
  %v398 = vrot.slane %v397, 4
  %v399 = vmax.f32 %v397, %v398
  %v400 = vrot.slane %v399, 2
  %v401 = vmax.f32 %v399, %v400
  %v402 = vrot.slane %v401, 1
  %v403 = vmax.f32 %v401, %v402
  %s404 = scalar_lea.vmem %s8, 1
  %405 = vst.msk [vmem:[%s404] sm:$0x1] %vm39, %v403
  %v406 = vsel %vm31, %v396, 0.0
  %v407 = vrot.slane %v406, 4
  %v408 = vadd.f32 %v406, %v407
  %v409 = vrot.slane %v408, 2
  %v410 = vadd.f32 %v408, %v409
  %v411 = vrot.slane %v410, 1
  %v412 = vadd.f32 %v410, %v411
  %v413 = vmul.f32 %v412, %v48
  %s414 = scalar_lea.vmem %s9, 1
  %415 = vst.msk [vmem:[%s414] sm:$0x1] %vm39, %v413
  %v416 = vsel %vm51, %v394, 0.0
  %417 = vadd.xlane.f32.xlu0 %v416
  %v418 = vpop.xlane.xlu0 %417
  %v419 = vmax.f32 %v418, 1.0
  %v420 = vrcp.pop %v419
  %v421 = vmul.f32 1.0, %v420
  %v423 = vsel %vm51, %v394, 0
  %425 = vmatprep.subr.mxu0 0.0
  %426 = vmatpush1.msra.mxu0 %v396
  %427 = vmatprep.subr.mxu0 0.0
  %428 = vmatpush1.msra.mxu0 0.0
  %429 = vmatprep.subr.mxu0 0.0
  %430 = vmatpush1.msra.mxu0 0.0
  %431 = vmatprep.subr.mxu0 0.0
  %432 = vmatpush1.msra.mxu0 0.0
  %433 = vmatprep.subr.mxu0 0.0
  %434 = vmatpush1.msra.mxu0 0.0
  %435 = vmatprep.subr.mxu0 0.0
  %436 = vmatpush1.msra.mxu0 0.0
  %437 = vmatprep.subr.mxu0 0.0
  %438 = vmatpush1.msra.mxu0 0.0
  %439 = vmatprep.subr.mxu0 0.0
  %440 = vmatpush1.msra.mxu0 0.0
  %441 = vmatprep.subr.mxu0 0.0
  %442 = vmatpush1.msra.mxu0 0.0
  %443 = vmatprep.subr.mxu0 0.0
  %444 = vmatpush1.msra.mxu0 0.0
  %445 = vmatprep.subr.mxu0 0.0
  %446 = vmatpush1.msra.mxu0 0.0
  %447 = vmatprep.subr.mxu0 0.0
  %448 = vmatpush1.msra.mxu0 0.0
  %449 = vmatprep.subr.mxu0 0.0
  %450 = vmatpush1.msra.mxu0 0.0
  %451 = vmatprep.subr.mxu0 0.0
  %452 = vmatpush1.msra.mxu0 0.0
  %453 = vmatprep.subr.mxu0 0.0
  %454 = vmatpush1.msra.mxu0 0.0
  %455 = vmatprep.subr.mxu0 0.0
  %456 = vmatpush1.msra.mxu0 0.0
  %457 = vmatprep.subr.mxu0 0.0
  %458 = vmatpush1.msra.mxu0 0.0
  %459 = vmatprep.subr.mxu0 0.0
  %460 = vmatpush1.msra.mxu0 0.0
  %461 = vmatprep.subr.mxu0 0.0
  %462 = vmatpush1.msra.mxu0 0.0
  %463 = vmatprep.subr.mxu0 0.0
  %464 = vmatpush1.msra.mxu0 0.0
  %465 = vmatprep.subr.mxu0 0.0
  %466 = vmatpush1.msra.mxu0 0.0
  %467 = vmatprep.subr.mxu0 0.0
  %468 = vmatpush1.msra.mxu0 0.0
  %469 = vmatprep.subr.mxu0 0.0
  %470 = vmatpush1.msra.mxu0 0.0
  %471 = vmatprep.subr.mxu0 0.0
  %472 = vmatpush1.msra.mxu0 0.0
  %473 = vmatprep.subr.mxu0 0.0
  %474 = vmatpush1.msra.mxu0 0.0
  %475 = vmatprep.subr.mxu0 0.0
  %476 = vmatpush1.msra.mxu0 0.0
  %477 = vmatprep.subr.mxu0 0.0
  %478 = vmatpush1.msra.mxu0 0.0
  %479 = vmatprep.subr.mxu0 0.0
  %480 = vmatpush1.msra.mxu0 0.0
  %481 = vmatprep.subr.mxu0 0.0
  %482 = vmatpush1.msra.mxu0 0.0
  %483 = vmatprep.subr.mxu0 0.0
  %484 = vmatpush1.msra.mxu0 0.0
  %485 = vmatprep.subr.mxu0 0.0
  %486 = vmatpush1.msra.mxu0 0.0
  %487 = vmatprep.subr.mxu0 0.0
  %488 = vmatpush1.msra.mxu0 0.0
  %489 = vmatprep.mubr.f32.mxu0 0.0
  %490 = vmatmul.mubr.f32.gmra.mrb[0].mxu0 %v423
  %v491 = vpop.f32.mrb[0].mxu0
  %v492 = vadd.f32 0.0, %v491
  %v493 = vpop.f32.mrb[0].mxu0
  %494 = vdwg.mxu0
  %v495 = vmul.f32 %v492, %v421
  %497 = vrot.lane.b32.xlu0 %v396, 32
  %v498 = vpop.permute.xlu0 %497
  %v500 = vsel %vm31, %v495, %v498
  %v501 = vld [vmem:[%s2] sm:$0xff]
  %v502 = vld [vmem:[%s2 + $0x8] sm:$0xff]
  %v503 = vld [vmem:[%s2 + $0x10] sm:$0xff]
  %v504 = vld [vmem:[%s2 + $0x18] sm:$0xff]
  %v505 = vld [vmem:[%s2 + $0x20] sm:$0xff]
  %v506 = vld [vmem:[%s2 + $0x28] sm:$0xff]
  %v507 = vld [vmem:[%s2 + $0x30] sm:$0xff]
  %v508 = vld [vmem:[%s2 + $0x38] sm:$0xff]
  %v509 = vld [vmem:[%s3] sm:$0x1]
  %v511 = vlaneseq
  %v512 = vshrl.u32 %v511, 7
  %v513 = vsub.s32 0, %v512
  %v514 = vrot.slane %v509, %v513
  %v517 = vsel %vm152, %v500, 0
  %519 = vmatprep.subr.mxu0 0.0
  %520 = vmatpush1.msra.mxu0 %v501
  %521 = vmatprep.subr.mxu0 0.0
  %522 = vmatpush1.msra.mxu0 %v502
  %523 = vmatprep.subr.mxu0 0.0
  %524 = vmatpush1.msra.mxu0 %v503
  %525 = vmatprep.subr.mxu0 0.0
  %526 = vmatpush1.msra.mxu0 %v504
  %527 = vmatprep.subr.mxu0 0.0
  %528 = vmatpush1.msra.mxu0 %v505
  %529 = vmatprep.subr.mxu0 0.0
  %530 = vmatpush1.msra.mxu0 %v506
  %531 = vmatprep.subr.mxu0 0.0
  %532 = vmatpush1.msra.mxu0 %v507
  %533 = vmatprep.subr.mxu0 0.0
  %534 = vmatpush1.msra.mxu0 %v508
  %535 = vmatprep.subr.mxu0 0.0
  %536 = vmatpush1.msra.mxu0 0.0
  %537 = vmatprep.subr.mxu0 0.0
  %538 = vmatpush1.msra.mxu0 0.0
  %539 = vmatprep.subr.mxu0 0.0
  %540 = vmatpush1.msra.mxu0 0.0
  %541 = vmatprep.subr.mxu0 0.0
  %542 = vmatpush1.msra.mxu0 0.0
  %543 = vmatprep.subr.mxu0 0.0
  %544 = vmatpush1.msra.mxu0 0.0
  %545 = vmatprep.subr.mxu0 0.0
  %546 = vmatpush1.msra.mxu0 0.0
  %547 = vmatprep.subr.mxu0 0.0
  %548 = vmatpush1.msra.mxu0 0.0
  %549 = vmatprep.subr.mxu0 0.0
  %550 = vmatpush1.msra.mxu0 0.0
  %551 = vmatprep.subr.mxu0 0.0
  %552 = vmatpush1.msra.mxu0 0.0
  %553 = vmatprep.subr.mxu0 0.0
  %554 = vmatpush1.msra.mxu0 0.0
  %555 = vmatprep.subr.mxu0 0.0
  %556 = vmatpush1.msra.mxu0 0.0
  %557 = vmatprep.subr.mxu0 0.0
  %558 = vmatpush1.msra.mxu0 0.0
  %559 = vmatprep.subr.mxu0 0.0
  %560 = vmatpush1.msra.mxu0 0.0
  %561 = vmatprep.subr.mxu0 0.0
  %562 = vmatpush1.msra.mxu0 0.0
  %563 = vmatprep.subr.mxu0 0.0
  %564 = vmatpush1.msra.mxu0 0.0
  %565 = vmatprep.subr.mxu0 0.0
  %566 = vmatpush1.msra.mxu0 0.0
  %567 = vmatprep.subr.mxu0 0.0
  %568 = vmatpush1.msra.mxu0 0.0
  %569 = vmatprep.subr.mxu0 0.0
  %570 = vmatpush1.msra.mxu0 0.0
  %571 = vmatprep.subr.mxu0 0.0
  %572 = vmatpush1.msra.mxu0 0.0
  %573 = vmatprep.subr.mxu0 0.0
  %574 = vmatpush1.msra.mxu0 0.0
  %575 = vmatprep.subr.mxu0 0.0
  %576 = vmatpush1.msra.mxu0 0.0
  %577 = vmatprep.subr.mxu0 0.0
  %578 = vmatpush1.msra.mxu0 0.0
  %579 = vmatprep.subr.mxu0 0.0
  %580 = vmatpush1.msra.mxu0 0.0
  %581 = vmatprep.subr.mxu0 0.0
  %582 = vmatpush1.msra.mxu0 0.0
  %583 = vmatprep.mubr.f32.mxu0 0.0
  %584 = vmatmul.mubr.f32.gmra.mrb[0].mxu0 %v517
  %v585 = vpop.f32.mrb[0].mxu0
  %v586 = vadd.f32 %v514, %v585
  %v587 = vpop.f32.mrb[0].mxu0
  %588 = vdwg.mxu0
  %v589 = vmax.f32 %v586, 0.0
  %s590 = scalar_lea.vmem %s6, 8
  %591 = vst.msk [vmem:[%s590] sm:$0xff] %vm31, %v589
  %592 = vmatprep.subr.mxu0 0.0
  %593 = vmatpush1.msra.mxu0 %v589
  %594 = vmatprep.subr.mxu0 0.0
  %595 = vmatpush1.msra.mxu0 0.0
  %596 = vmatprep.subr.mxu0 0.0
  %597 = vmatpush1.msra.mxu0 0.0
  %598 = vmatprep.subr.mxu0 0.0
  %599 = vmatpush1.msra.mxu0 0.0
  %600 = vmatprep.subr.mxu0 0.0
  %601 = vmatpush1.msra.mxu0 0.0
  %602 = vmatprep.subr.mxu0 0.0
  %603 = vmatpush1.msra.mxu0 0.0
  %604 = vmatprep.subr.mxu0 0.0
  %605 = vmatpush1.msra.mxu0 0.0
  %606 = vmatprep.subr.mxu0 0.0
  %607 = vmatpush1.msra.mxu0 0.0
  %608 = vmatprep.subr.mxu0 0.0
  %609 = vmatpush1.msra.mxu0 0.0
  %610 = vmatprep.subr.mxu0 0.0
  %611 = vmatpush1.msra.mxu0 0.0
  %612 = vmatprep.subr.mxu0 0.0
  %613 = vmatpush1.msra.mxu0 0.0
  %614 = vmatprep.subr.mxu0 0.0
  %615 = vmatpush1.msra.mxu0 0.0
  %616 = vmatprep.subr.mxu0 0.0
  %617 = vmatpush1.msra.mxu0 0.0
  %618 = vmatprep.subr.mxu0 0.0
  %619 = vmatpush1.msra.mxu0 0.0
  %620 = vmatprep.subr.mxu0 0.0
  %621 = vmatpush1.msra.mxu0 0.0
  %622 = vmatprep.subr.mxu0 0.0
  %623 = vmatpush1.msra.mxu0 0.0
  %624 = vmatprep.subr.mxu0 0.0
  %625 = vmatpush1.msra.mxu0 0.0
  %626 = vmatprep.subr.mxu0 0.0
  %627 = vmatpush1.msra.mxu0 0.0
  %628 = vmatprep.subr.mxu0 0.0
  %629 = vmatpush1.msra.mxu0 0.0
  %630 = vmatprep.subr.mxu0 0.0
  %631 = vmatpush1.msra.mxu0 0.0
  %632 = vmatprep.subr.mxu0 0.0
  %633 = vmatpush1.msra.mxu0 0.0
  %634 = vmatprep.subr.mxu0 0.0
  %635 = vmatpush1.msra.mxu0 0.0
  %636 = vmatprep.subr.mxu0 0.0
  %637 = vmatpush1.msra.mxu0 0.0
  %638 = vmatprep.subr.mxu0 0.0
  %639 = vmatpush1.msra.mxu0 0.0
  %640 = vmatprep.subr.mxu0 0.0
  %641 = vmatpush1.msra.mxu0 0.0
  %642 = vmatprep.subr.mxu0 0.0
  %643 = vmatpush1.msra.mxu0 0.0
  %644 = vmatprep.subr.mxu0 0.0
  %645 = vmatpush1.msra.mxu0 0.0
  %646 = vmatprep.subr.mxu0 0.0
  %647 = vmatpush1.msra.mxu0 0.0
  %648 = vmatprep.subr.mxu0 0.0
  %649 = vmatpush1.msra.mxu0 0.0
  %650 = vmatprep.subr.mxu0 0.0
  %651 = vmatpush1.msra.mxu0 0.0
  %652 = vmatprep.subr.mxu0 0.0
  %653 = vmatpush1.msra.mxu0 0.0
  %654 = vmatprep.subr.mxu0 0.0
  %655 = vmatpush1.msra.mxu0 0.0
  %656 = vmatprep.mubr.f32.mxu0 0.0
  %657 = vmatmul.mubr.f32.gmra.mrb[0].mxu0 %v423
  %v658 = vpop.f32.mrb[0].mxu0
  %v659 = vadd.f32 0.0, %v658
  %v660 = vpop.f32.mrb[0].mxu0
  %661 = vdwg.mxu0
  %663 = vrot.lane.b32.xlu0 %v589, 32
  %v664 = vpop.permute.xlu0 %663
  %v666 = vsel %vm31, %v659, %v664
  %v667 = vld [vmem:[%s4] sm:$0xff]
  %v668 = vld [vmem:[%s4 + $0x8] sm:$0xff]
  %v669 = vld [vmem:[%s4 + $0x10] sm:$0xff]
  %v670 = vld [vmem:[%s4 + $0x18] sm:$0xff]
  %v671 = vld [vmem:[%s4 + $0x20] sm:$0xff]
  %v672 = vld [vmem:[%s4 + $0x28] sm:$0xff]
  %v673 = vld [vmem:[%s4 + $0x30] sm:$0xff]
  %v674 = vld [vmem:[%s4 + $0x38] sm:$0xff]
  %v675 = vld [vmem:[#allocation2] sm:$0x1]
  %v677 = vlaneseq
  %v678 = vshrl.u32 %v677, 7
  %v679 = vsub.s32 0, %v678
  %v680 = vrot.slane %v675, %v679
  %v683 = vsel %vm152, %v666, 0
  %685 = vmatprep.subr.mxu0 0.0
  %686 = vmatpush1.msra.mxu0 %v667
  %687 = vmatprep.subr.mxu0 0.0
  %688 = vmatpush1.msra.mxu0 %v668
  %689 = vmatprep.subr.mxu0 0.0
  %690 = vmatpush1.msra.mxu0 %v669
  %691 = vmatprep.subr.mxu0 0.0
  %692 = vmatpush1.msra.mxu0 %v670
  %693 = vmatprep.subr.mxu0 0.0
  %694 = vmatpush1.msra.mxu0 %v671
  %695 = vmatprep.subr.mxu0 0.0
  %696 = vmatpush1.msra.mxu0 %v672
  %697 = vmatprep.subr.mxu0 0.0
  %698 = vmatpush1.msra.mxu0 %v673
  %699 = vmatprep.subr.mxu0 0.0
  %700 = vmatpush1.msra.mxu0 %v674
  %701 = vmatprep.subr.mxu0 0.0
  %702 = vmatpush1.msra.mxu0 0.0
  %703 = vmatprep.subr.mxu0 0.0
  %704 = vmatpush1.msra.mxu0 0.0
  %705 = vmatprep.subr.mxu0 0.0
  %706 = vmatpush1.msra.mxu0 0.0
  %707 = vmatprep.subr.mxu0 0.0
  %708 = vmatpush1.msra.mxu0 0.0
  %709 = vmatprep.subr.mxu0 0.0
  %710 = vmatpush1.msra.mxu0 0.0
  %711 = vmatprep.subr.mxu0 0.0
  %712 = vmatpush1.msra.mxu0 0.0
  %713 = vmatprep.subr.mxu0 0.0
  %714 = vmatpush1.msra.mxu0 0.0
  %715 = vmatprep.subr.mxu0 0.0
  %716 = vmatpush1.msra.mxu0 0.0
  %717 = vmatprep.subr.mxu0 0.0
  %718 = vmatpush1.msra.mxu0 0.0
  %719 = vmatprep.subr.mxu0 0.0
  %720 = vmatpush1.msra.mxu0 0.0
  %721 = vmatprep.subr.mxu0 0.0
  %722 = vmatpush1.msra.mxu0 0.0
  %723 = vmatprep.subr.mxu0 0.0
  %724 = vmatpush1.msra.mxu0 0.0
  %725 = vmatprep.subr.mxu0 0.0
  %726 = vmatpush1.msra.mxu0 0.0
  %727 = vmatprep.subr.mxu0 0.0
  %728 = vmatpush1.msra.mxu0 0.0
  %729 = vmatprep.subr.mxu0 0.0
  %730 = vmatpush1.msra.mxu0 0.0
  %731 = vmatprep.subr.mxu0 0.0
  %732 = vmatpush1.msra.mxu0 0.0
  %733 = vmatprep.subr.mxu0 0.0
  %734 = vmatpush1.msra.mxu0 0.0
  %735 = vmatprep.subr.mxu0 0.0
  %736 = vmatpush1.msra.mxu0 0.0
  %737 = vmatprep.subr.mxu0 0.0
  %738 = vmatpush1.msra.mxu0 0.0
  %739 = vmatprep.subr.mxu0 0.0
  %740 = vmatpush1.msra.mxu0 0.0
  %741 = vmatprep.subr.mxu0 0.0
  %742 = vmatpush1.msra.mxu0 0.0
  %743 = vmatprep.subr.mxu0 0.0
  %744 = vmatpush1.msra.mxu0 0.0
  %745 = vmatprep.subr.mxu0 0.0
  %746 = vmatpush1.msra.mxu0 0.0
  %747 = vmatprep.subr.mxu0 0.0
  %748 = vmatpush1.msra.mxu0 0.0
  %749 = vmatprep.mubr.f32.mxu0 0.0
  %750 = vmatmul.mubr.f32.gmra.mrb[0].mxu0 %v683
  %v751 = vpop.f32.mrb[0].mxu0
  %v752 = vadd.f32 %v680, %v751
  %v753 = vpop.f32.mrb[0].mxu0
  %754 = vdwg.mxu0
  %s755 = scalar_lea.vmem %s7, 8
  %756 = vst.msk [vmem:[%s755] sm:$0xff] %vm391, %v752
  // Predicated region
  $region26: #{net_forward.5} parent=0 // pred_check
    _
  $region27: #{net_forward.5} parent=0 // pred_check_branch
    %758 = sbr.rel (0) target = $region29
  $region28: #{net_forward.5} parent=0 // pred_region
    _
  $region29: #{net_forward.5} parent=0 // pred_fallthru
    _
  // Predicated region
  $region30: #{net_forward.5} parent=0 // pred_check
    _
  $region31: #{net_forward.5} parent=0 // pred_check_branch
    %760 = sbr.rel (0) target = $region33
  $region32: #{net_forward.5} parent=0 // pred_region
    _
  $region33: #{net_forward.5} parent=0 // pred_fallthru
    _
  // Predicated region
  $region34: #{net_forward.5} parent=0 // pred_check
    _
  $region35: #{net_forward.5} parent=0 // pred_check_branch
    %762 = sbr.rel (0) target = $region37
  $region36: #{net_forward.5} parent=0 // pred_region
    _
  $region37: #{net_forward.5} parent=0 // pred_fallthru
    _
  // Predicated region
  $region38: #{net_forward.5} parent=0 // pred_check
    _
  $region39: #{net_forward.5} parent=0 // pred_check_branch
    %764 = sbr.rel (0) target = $region41
  $region40: #{net_forward.5} parent=0 // pred_region
    _
  $region41: #{net_forward.5} parent=0 // pred_fallthru
    _
  // Predicated region
  $region42: #{net_forward.5} parent=0 // pred_check
    _
  $region43: #{net_forward.5} parent=0 // pred_check_branch
    %766 = sbr.rel (0) target = $region45
  $region44: #{net_forward.5} parent=0 // pred_region
    _
  $region45: #{net_forward.5} parent=0 // pred_fallthru
    _
  // Predicated region
  $region46: #{net_forward.5} parent=0 // pred_check
    _
  $region47: #{net_forward.5} parent=0 // pred_check_branch
    %768 = sbr.rel (0) target = $region49
  $region48: #{net_forward.5} parent=0 // pred_region
    _
  $region49: #{net_forward.5} parent=0 // pred_fallthru
    _
  // Predicated region
  $region50: #{net_forward.5} parent=0 // pred_check
    _
  $region51: #{net_forward.5} parent=0 // pred_check_branch
    %770 = sbr.rel (0) target = $region53
  $region52: #{net_forward.5} parent=0 // pred_region
    _
  $region53: #{net_forward.5} parent=0 // pred_fallthru
    _
  // Predicated region
  $region54: #{net_forward.5} parent=0 // pred_check
    _
  $region55: #{net_forward.5} parent=0 // pred_check_branch
    %772 = sbr.rel (0) target = $region57
  $region56: #{net_forward.5} parent=0 // pred_region
    _
  $region57: #{net_forward.5} parent=0 // pred_fallthru
    _

// kernel: net_forward.6
$region0: #{net_forward.6}
  #allocation0 [shape = 'u32[]', space=smem, size = 0x4, offset = 0x4, fixed_abs, tag = 'smem constant byte address 0x4 - core index']
  #allocation1 [shape = 'u32[144,128]{1,0:T(1,128)}', space=vmem, size = 0x12000, scoped, tag = 'internal scratch']
  #allocation2 [shape = 'f32[1,1]{1,0:T(1,128)S(1)}', space=vmem, size = 0x200, scoped, tag = 'scoped memory for net_forward.6']
  %s0 = inlined_call_operand.vmem [shape: f32[2,4,4], index: 0, kind: input, shape index: {}]
  %s1 = inlined_call_operand.vmem [shape: f32[2,4,32], index: 1, kind: input, shape index: {}]
  %s2 = inlined_call_operand.vmem [shape: f32[64,32], index: 2, kind: input, shape index: {}]
  %s3 = inlined_call_operand.vmem [shape: f32[1,32], index: 3, kind: input, shape index: {}]
  %s4 = inlined_call_operand.vmem [shape: f32[64,1], index: 4, kind: input, shape index: {}]
  %s5 = inlined_call_operand.<no memory space> [shape: f32[1,1], index: 5, kind: input, shape index: {}]
  %s6 = inlined_call_operand.vmem [shape: f32[2,4,32], index: 6, kind: output, shape index: {0}]
  %s7 = inlined_call_operand.vmem [shape: f32[2,4,1], index: 7, kind: output, shape index: {1}]
  %s8 = inlined_call_operand.vmem [shape: f32[2,1,32], index: 8, kind: output, shape index: {2}]
  %s9 = inlined_call_operand.vmem [shape: f32[2,1,32], index: 9, kind: output, shape index: {3}]
  %10 = xla_tuple %s6, %s7, %s8, %s9
  %s11 = sld [smem:[#allocation0]]
  $region58: #{net_forward.6} parent=0
    _
  %s13 = ssub.s32 1, %s11
  %s14 = scalar_select 0, %s13, %s11
  %v15 = vstv %s5
  %16 = vst [vmem:[#allocation2] sm:$0x1] %v15
  // Predicated region
  $region2: #{net_forward.6} parent=0 // pred_check
    _
  $region3: #{net_forward.6} parent=0 // pred_check_branch
    %18 = sbr.rel (0) target = $region5
  $region4: #{net_forward.6} parent=0 // pred_region
    _
  $region5: #{net_forward.6} parent=0 // pred_fallthru
    _
  // Predicated region
  $region6: #{net_forward.6} parent=0 // pred_check
    _
  $region7: #{net_forward.6} parent=0 // pred_check_branch
    %20 = sbr.rel (0) target = $region9
  $region8: #{net_forward.6} parent=0 // pred_region
    _
  $region9: #{net_forward.6} parent=0 // pred_fallthru
    _
  // Predicated region
  $region10: #{net_forward.6} parent=0 // pred_check
    _
  $region11: #{net_forward.6} parent=0 // pred_check_branch
    %22 = sbr.rel (0) target = $region13
  $region12: #{net_forward.6} parent=0 // pred_region
    _
  $region13: #{net_forward.6} parent=0 // pred_fallthru
    _
  // Predicated region
  $region14: #{net_forward.6} parent=0 // pred_check
    _
  $region15: #{net_forward.6} parent=0 // pred_check_branch
    %24 = sbr.rel (0) target = $region17
  $region16: #{net_forward.6} parent=0 // pred_region
    _
  $region17: #{net_forward.6} parent=0 // pred_fallthru
    _
  // Predicated region
  $region18: #{net_forward.6} parent=0 // pred_check
    _
  $region19: #{net_forward.6} parent=0 // pred_check_branch
    %26 = sbr.rel (0) target = $region21
  $region20: #{net_forward.6} parent=0 // pred_region
    _
  $region21: #{net_forward.6} parent=0 // pred_fallthru
    _
  // Predicated region
  $region22: #{net_forward.6} parent=0 // pred_check
    _
  $region23: #{net_forward.6} parent=0 // pred_check_branch
    %28 = sbr.rel (0) target = $region25
  $region24: #{net_forward.6} parent=0 // pred_region
    _
  $region25: #{net_forward.6} parent=0 // pred_fallthru
    _
  %v29 = vld [vmem:[%s0] sm:$0xf]
  %v30 = vld [vmem:[%s1] sm:$0xf]
  %vm31 = vcmask 257024
  %v32 = vsel %vm31, %v30, -inf
  %v33 = vrot.slane %v32, 4
  %v34 = vmax.f32 %v32, %v33
  %v35 = vrot.slane %v34, 2
  %v36 = vmax.f32 %v34, %v35
  %v37 = vrot.slane %v36, 1
  %v38 = vmax.f32 %v36, %v37
  %vm39 = vcmask 253952
  %40 = vst.msk [vmem:[%s8] sm:$0x1] %vm39, %v38
  %v41 = vsel %vm31, %v30, 0.0
  %v42 = vrot.slane %v41, 4
  %v43 = vadd.f32 %v41, %v42
  %v44 = vrot.slane %v43, 2
  %v45 = vadd.f32 %v43, %v44
  %v46 = vrot.slane %v45, 1
  %v47 = vadd.f32 %v45, %v46
  %v48 = vrcp.pop 4.0
  %v49 = vmul.f32 %v47, %v48
  %50 = vst.msk [vmem:[%s9] sm:$0x1] %vm39, %v49
  %vm51 = vcmask 27648
  %v52 = vsel %vm51, %v29, 0.0
  %53 = vadd.xlane.f32.xlu0 %v52
  %v54 = vpop.xlane.xlu0 %53
  %v55 = vmax.f32 %v54, 1.0
  %v56 = vrcp.pop %v55
  %v57 = vmul.f32 1.0, %v56
  %vm58 = vcmask 31744
  %v60 = vsel %vm58, %v29, 0
  %vm62 = vcmask 1043456
  %v64 = vsel %vm62, %v30, 0
  %66 = vmatprep.subr.mxu0 0.0
  %67 = vmatpush1.msra.mxu0 %v64
  %68 = vmatprep.subr.mxu0 0.0
  %69 = vmatpush1.msra.mxu0 0.0
  %70 = vmatprep.subr.mxu0 0.0
  %71 = vmatpush1.msra.mxu0 0.0
  %72 = vmatprep.subr.mxu0 0.0
  %73 = vmatpush1.msra.mxu0 0.0
  %74 = vmatprep.subr.mxu0 0.0
  %75 = vmatpush1.msra.mxu0 0.0
  %76 = vmatprep.subr.mxu0 0.0
  %77 = vmatpush1.msra.mxu0 0.0
  %78 = vmatprep.subr.mxu0 0.0
  %79 = vmatpush1.msra.mxu0 0.0
  %80 = vmatprep.subr.mxu0 0.0
  %81 = vmatpush1.msra.mxu0 0.0
  %82 = vmatprep.subr.mxu0 0.0
  %83 = vmatpush1.msra.mxu0 0.0
  %84 = vmatprep.subr.mxu0 0.0
  %85 = vmatpush1.msra.mxu0 0.0
  %86 = vmatprep.subr.mxu0 0.0
  %87 = vmatpush1.msra.mxu0 0.0
  %88 = vmatprep.subr.mxu0 0.0
  %89 = vmatpush1.msra.mxu0 0.0
  %90 = vmatprep.subr.mxu0 0.0
  %91 = vmatpush1.msra.mxu0 0.0
  %92 = vmatprep.subr.mxu0 0.0
  %93 = vmatpush1.msra.mxu0 0.0
  %94 = vmatprep.subr.mxu0 0.0
  %95 = vmatpush1.msra.mxu0 0.0
  %96 = vmatprep.subr.mxu0 0.0
  %97 = vmatpush1.msra.mxu0 0.0
  %98 = vmatprep.subr.mxu0 0.0
  %99 = vmatpush1.msra.mxu0 0.0
  %100 = vmatprep.subr.mxu0 0.0
  %101 = vmatpush1.msra.mxu0 0.0
  %102 = vmatprep.subr.mxu0 0.0
  %103 = vmatpush1.msra.mxu0 0.0
  %104 = vmatprep.subr.mxu0 0.0
  %105 = vmatpush1.msra.mxu0 0.0
  %106 = vmatprep.subr.mxu0 0.0
  %107 = vmatpush1.msra.mxu0 0.0
  %108 = vmatprep.subr.mxu0 0.0
  %109 = vmatpush1.msra.mxu0 0.0
  %110 = vmatprep.subr.mxu0 0.0
  %111 = vmatpush1.msra.mxu0 0.0
  %112 = vmatprep.subr.mxu0 0.0
  %113 = vmatpush1.msra.mxu0 0.0
  %114 = vmatprep.subr.mxu0 0.0
  %115 = vmatpush1.msra.mxu0 0.0
  %116 = vmatprep.subr.mxu0 0.0
  %117 = vmatpush1.msra.mxu0 0.0
  %118 = vmatprep.subr.mxu0 0.0
  %119 = vmatpush1.msra.mxu0 0.0
  %120 = vmatprep.subr.mxu0 0.0
  %121 = vmatpush1.msra.mxu0 0.0
  %122 = vmatprep.subr.mxu0 0.0
  %123 = vmatpush1.msra.mxu0 0.0
  %124 = vmatprep.subr.mxu0 0.0
  %125 = vmatpush1.msra.mxu0 0.0
  %126 = vmatprep.subr.mxu0 0.0
  %127 = vmatpush1.msra.mxu0 0.0
  %128 = vmatprep.subr.mxu0 0.0
  %129 = vmatpush1.msra.mxu0 0.0
  %130 = vmatprep.mubr.f32.mxu0 0.0
  %131 = vmatmul.mubr.f32.gmra.mrb[0].mxu0 %v60
  %v132 = vpop.f32.mrb[0].mxu0
  %v133 = vadd.f32 0.0, %v132
  %v134 = vpop.f32.mrb[0].mxu0
  %135 = vdwg.mxu0
  %v136 = vmul.f32 %v133, %v57
  %137 = vrot.lane.b32.xlu0 %v30, 32
  %v138 = vpop.permute.xlu0 %137
  %vm140 = vcmask 261120
  %v141 = vsel %vm140, %v136, %v138
  %v142 = vld [vmem:[%s2] sm:$0xff]
  %v143 = vld [vmem:[%s2 + $0x8] sm:$0xff]
  %v144 = vld [vmem:[%s2 + $0x10] sm:$0xff]
  %v145 = vld [vmem:[%s2 + $0x18] sm:$0xff]
  %v146 = vld [vmem:[%s2 + $0x20] sm:$0xff]
  %v147 = vld [vmem:[%s2 + $0x28] sm:$0xff]
  %v148 = vld [vmem:[%s2 + $0x30] sm:$0xff]
  %v149 = vld [vmem:[%s2 + $0x38] sm:$0xff]
  %v150 = vld [vmem:[%s3] sm:$0x1]
  %v152 = vlaneseq
  %v153 = vshrl.u32 %v152, 7
  %v154 = vsub.s32 0, %v153
  %v155 = vrot.slane %v150, %v154
  %vm157 = vcmask 523264
  %v159 = vsel %vm157, %v141, 0
  %161 = vmatprep.subr.mxu0 0.0
  %162 = vmatpush1.msra.mxu0 %v142
  %163 = vmatprep.subr.mxu0 0.0
  %164 = vmatpush1.msra.mxu0 %v143
  %165 = vmatprep.subr.mxu0 0.0
  %166 = vmatpush1.msra.mxu0 %v144
  %167 = vmatprep.subr.mxu0 0.0
  %168 = vmatpush1.msra.mxu0 %v145
  %169 = vmatprep.subr.mxu0 0.0
  %170 = vmatpush1.msra.mxu0 %v146
  %171 = vmatprep.subr.mxu0 0.0
  %172 = vmatpush1.msra.mxu0 %v147
  %173 = vmatprep.subr.mxu0 0.0
  %174 = vmatpush1.msra.mxu0 %v148
  %175 = vmatprep.subr.mxu0 0.0
  %176 = vmatpush1.msra.mxu0 %v149
  %177 = vmatprep.subr.mxu0 0.0
  %178 = vmatpush1.msra.mxu0 0.0
  %179 = vmatprep.subr.mxu0 0.0
  %180 = vmatpush1.msra.mxu0 0.0
  %181 = vmatprep.subr.mxu0 0.0
  %182 = vmatpush1.msra.mxu0 0.0
  %183 = vmatprep.subr.mxu0 0.0
  %184 = vmatpush1.msra.mxu0 0.0
  %185 = vmatprep.subr.mxu0 0.0
  %186 = vmatpush1.msra.mxu0 0.0
  %187 = vmatprep.subr.mxu0 0.0
  %188 = vmatpush1.msra.mxu0 0.0
  %189 = vmatprep.subr.mxu0 0.0
  %190 = vmatpush1.msra.mxu0 0.0
  %191 = vmatprep.subr.mxu0 0.0
  %192 = vmatpush1.msra.mxu0 0.0
  %193 = vmatprep.subr.mxu0 0.0
  %194 = vmatpush1.msra.mxu0 0.0
  %195 = vmatprep.subr.mxu0 0.0
  %196 = vmatpush1.msra.mxu0 0.0
  %197 = vmatprep.subr.mxu0 0.0
  %198 = vmatpush1.msra.mxu0 0.0
  %199 = vmatprep.subr.mxu0 0.0
  %200 = vmatpush1.msra.mxu0 0.0
  %201 = vmatprep.subr.mxu0 0.0
  %202 = vmatpush1.msra.mxu0 0.0
  %203 = vmatprep.subr.mxu0 0.0
  %204 = vmatpush1.msra.mxu0 0.0
  %205 = vmatprep.subr.mxu0 0.0
  %206 = vmatpush1.msra.mxu0 0.0
  %207 = vmatprep.subr.mxu0 0.0
  %208 = vmatpush1.msra.mxu0 0.0
  %209 = vmatprep.subr.mxu0 0.0
  %210 = vmatpush1.msra.mxu0 0.0
  %211 = vmatprep.subr.mxu0 0.0
  %212 = vmatpush1.msra.mxu0 0.0
  %213 = vmatprep.subr.mxu0 0.0
  %214 = vmatpush1.msra.mxu0 0.0
  %215 = vmatprep.subr.mxu0 0.0
  %216 = vmatpush1.msra.mxu0 0.0
  %217 = vmatprep.subr.mxu0 0.0
  %218 = vmatpush1.msra.mxu0 0.0
  %219 = vmatprep.subr.mxu0 0.0
  %220 = vmatpush1.msra.mxu0 0.0
  %221 = vmatprep.subr.mxu0 0.0
  %222 = vmatpush1.msra.mxu0 0.0
  %223 = vmatprep.subr.mxu0 0.0
  %224 = vmatpush1.msra.mxu0 0.0
  %225 = vmatprep.mubr.f32.mxu0 0.0
  %226 = vmatmul.mubr.f32.gmra.mrb[0].mxu0 %v159
  %v227 = vpop.f32.mrb[0].mxu0
  %v228 = vadd.f32 %v155, %v227
  %v229 = vpop.f32.mrb[0].mxu0
  %230 = vdwg.mxu0
  %v231 = vmax.f32 %v228, 0.0
  %232 = vst.msk [vmem:[%s6] sm:$0xf] %vm31, %v231
  %v234 = vsel %vm62, %v231, 0
  %236 = vmatprep.subr.mxu0 0.0
  %237 = vmatpush1.msra.mxu0 %v234
  %238 = vmatprep.subr.mxu0 0.0
  %239 = vmatpush1.msra.mxu0 0.0
  %240 = vmatprep.subr.mxu0 0.0
  %241 = vmatpush1.msra.mxu0 0.0
  %242 = vmatprep.subr.mxu0 0.0
  %243 = vmatpush1.msra.mxu0 0.0
  %244 = vmatprep.subr.mxu0 0.0
  %245 = vmatpush1.msra.mxu0 0.0
  %246 = vmatprep.subr.mxu0 0.0
  %247 = vmatpush1.msra.mxu0 0.0
  %248 = vmatprep.subr.mxu0 0.0
  %249 = vmatpush1.msra.mxu0 0.0
  %250 = vmatprep.subr.mxu0 0.0
  %251 = vmatpush1.msra.mxu0 0.0
  %252 = vmatprep.subr.mxu0 0.0
  %253 = vmatpush1.msra.mxu0 0.0
  %254 = vmatprep.subr.mxu0 0.0
  %255 = vmatpush1.msra.mxu0 0.0
  %256 = vmatprep.subr.mxu0 0.0
  %257 = vmatpush1.msra.mxu0 0.0
  %258 = vmatprep.subr.mxu0 0.0
  %259 = vmatpush1.msra.mxu0 0.0
  %260 = vmatprep.subr.mxu0 0.0
  %261 = vmatpush1.msra.mxu0 0.0
  %262 = vmatprep.subr.mxu0 0.0
  %263 = vmatpush1.msra.mxu0 0.0
  %264 = vmatprep.subr.mxu0 0.0
  %265 = vmatpush1.msra.mxu0 0.0
  %266 = vmatprep.subr.mxu0 0.0
  %267 = vmatpush1.msra.mxu0 0.0
  %268 = vmatprep.subr.mxu0 0.0
  %269 = vmatpush1.msra.mxu0 0.0
  %270 = vmatprep.subr.mxu0 0.0
  %271 = vmatpush1.msra.mxu0 0.0
  %272 = vmatprep.subr.mxu0 0.0
  %273 = vmatpush1.msra.mxu0 0.0
  %274 = vmatprep.subr.mxu0 0.0
  %275 = vmatpush1.msra.mxu0 0.0
  %276 = vmatprep.subr.mxu0 0.0
  %277 = vmatpush1.msra.mxu0 0.0
  %278 = vmatprep.subr.mxu0 0.0
  %279 = vmatpush1.msra.mxu0 0.0
  %280 = vmatprep.subr.mxu0 0.0
  %281 = vmatpush1.msra.mxu0 0.0
  %282 = vmatprep.subr.mxu0 0.0
  %283 = vmatpush1.msra.mxu0 0.0
  %284 = vmatprep.subr.mxu0 0.0
  %285 = vmatpush1.msra.mxu0 0.0
  %286 = vmatprep.subr.mxu0 0.0
  %287 = vmatpush1.msra.mxu0 0.0
  %288 = vmatprep.subr.mxu0 0.0
  %289 = vmatpush1.msra.mxu0 0.0
  %290 = vmatprep.subr.mxu0 0.0
  %291 = vmatpush1.msra.mxu0 0.0
  %292 = vmatprep.subr.mxu0 0.0
  %293 = vmatpush1.msra.mxu0 0.0
  %294 = vmatprep.subr.mxu0 0.0
  %295 = vmatpush1.msra.mxu0 0.0
  %296 = vmatprep.subr.mxu0 0.0
  %297 = vmatpush1.msra.mxu0 0.0
  %298 = vmatprep.subr.mxu0 0.0
  %299 = vmatpush1.msra.mxu0 0.0
  %300 = vmatprep.mubr.f32.mxu0 0.0
  %301 = vmatmul.mubr.f32.gmra.mrb[0].mxu0 %v60
  %v302 = vpop.f32.mrb[0].mxu0
  %v303 = vadd.f32 0.0, %v302
  %v304 = vpop.f32.mrb[0].mxu0
  %305 = vdwg.mxu0
  %306 = vrot.lane.b32.xlu0 %v231, 32
  %v307 = vpop.permute.xlu0 %306
  %v309 = vsel %vm140, %v303, %v307
  %v310 = vld [vmem:[%s4] sm:$0xff]
  %v311 = vld [vmem:[%s4 + $0x8] sm:$0xff]
  %v312 = vld [vmem:[%s4 + $0x10] sm:$0xff]
  %v313 = vld [vmem:[%s4 + $0x18] sm:$0xff]
  %v314 = vld [vmem:[%s4 + $0x20] sm:$0xff]
  %v315 = vld [vmem:[%s4 + $0x28] sm:$0xff]
  %v316 = vld [vmem:[%s4 + $0x30] sm:$0xff]
  %v317 = vld [vmem:[%s4 + $0x38] sm:$0xff]
  %v318 = vld [vmem:[#allocation2] sm:$0x1]
  %v320 = vlaneseq
  %v321 = vshrl.u32 %v320, 7
  %v322 = vsub.s32 0, %v321
  %v323 = vrot.slane %v318, %v322
  %v326 = vsel %vm157, %v309, 0
  %328 = vmatprep.subr.mxu0 0.0
  %329 = vmatpush1.msra.mxu0 %v310
  %330 = vmatprep.subr.mxu0 0.0
  %331 = vmatpush1.msra.mxu0 %v311
  %332 = vmatprep.subr.mxu0 0.0
  %333 = vmatpush1.msra.mxu0 %v312
  %334 = vmatprep.subr.mxu0 0.0
  %335 = vmatpush1.msra.mxu0 %v313
  %336 = vmatprep.subr.mxu0 0.0
  %337 = vmatpush1.msra.mxu0 %v314
  %338 = vmatprep.subr.mxu0 0.0
  %339 = vmatpush1.msra.mxu0 %v315
  %340 = vmatprep.subr.mxu0 0.0
  %341 = vmatpush1.msra.mxu0 %v316
  %342 = vmatprep.subr.mxu0 0.0
  %343 = vmatpush1.msra.mxu0 %v317
  %344 = vmatprep.subr.mxu0 0.0
  %345 = vmatpush1.msra.mxu0 0.0
  %346 = vmatprep.subr.mxu0 0.0
  %347 = vmatpush1.msra.mxu0 0.0
  %348 = vmatprep.subr.mxu0 0.0
  %349 = vmatpush1.msra.mxu0 0.0
  %350 = vmatprep.subr.mxu0 0.0
  %351 = vmatpush1.msra.mxu0 0.0
  %352 = vmatprep.subr.mxu0 0.0
  %353 = vmatpush1.msra.mxu0 0.0
  %354 = vmatprep.subr.mxu0 0.0
  %355 = vmatpush1.msra.mxu0 0.0
  %356 = vmatprep.subr.mxu0 0.0
  %357 = vmatpush1.msra.mxu0 0.0
  %358 = vmatprep.subr.mxu0 0.0
  %359 = vmatpush1.msra.mxu0 0.0
  %360 = vmatprep.subr.mxu0 0.0
  %361 = vmatpush1.msra.mxu0 0.0
  %362 = vmatprep.subr.mxu0 0.0
  %363 = vmatpush1.msra.mxu0 0.0
  %364 = vmatprep.subr.mxu0 0.0
  %365 = vmatpush1.msra.mxu0 0.0
  %366 = vmatprep.subr.mxu0 0.0
  %367 = vmatpush1.msra.mxu0 0.0
  %368 = vmatprep.subr.mxu0 0.0
  %369 = vmatpush1.msra.mxu0 0.0
  %370 = vmatprep.subr.mxu0 0.0
  %371 = vmatpush1.msra.mxu0 0.0
  %372 = vmatprep.subr.mxu0 0.0
  %373 = vmatpush1.msra.mxu0 0.0
  %374 = vmatprep.subr.mxu0 0.0
  %375 = vmatpush1.msra.mxu0 0.0
  %376 = vmatprep.subr.mxu0 0.0
  %377 = vmatpush1.msra.mxu0 0.0
  %378 = vmatprep.subr.mxu0 0.0
  %379 = vmatpush1.msra.mxu0 0.0
  %380 = vmatprep.subr.mxu0 0.0
  %381 = vmatpush1.msra.mxu0 0.0
  %382 = vmatprep.subr.mxu0 0.0
  %383 = vmatpush1.msra.mxu0 0.0
  %384 = vmatprep.subr.mxu0 0.0
  %385 = vmatpush1.msra.mxu0 0.0
  %386 = vmatprep.subr.mxu0 0.0
  %387 = vmatpush1.msra.mxu0 0.0
  %388 = vmatprep.subr.mxu0 0.0
  %389 = vmatpush1.msra.mxu0 0.0
  %390 = vmatprep.subr.mxu0 0.0
  %391 = vmatpush1.msra.mxu0 0.0
  %392 = vmatprep.mubr.f32.mxu0 0.0
  %393 = vmatmul.mubr.f32.gmra.mrb[0].mxu0 %v326
  %v394 = vpop.f32.mrb[0].mxu0
  %v395 = vadd.f32 %v323, %v394
  %v396 = vpop.f32.mrb[0].mxu0
  %397 = vdwg.mxu0
  %vm398 = vcmask 3072
  %399 = vst.msk [vmem:[%s7] sm:$0xf] %vm398, %v395
  %s400 = scalar_lea.vmem %s0, 4
  %v401 = vld [vmem:[%s400] sm:$0xf]
  %s402 = scalar_lea.vmem %s1, 4
  %v403 = vld [vmem:[%s402] sm:$0xf]
  %v404 = vsel %vm31, %v403, -inf
  %v405 = vrot.slane %v404, 4
  %v406 = vmax.f32 %v404, %v405
  %v407 = vrot.slane %v406, 2
  %v408 = vmax.f32 %v406, %v407
  %v409 = vrot.slane %v408, 1
  %v410 = vmax.f32 %v408, %v409
  %s411 = scalar_lea.vmem %s8, 1
  %412 = vst.msk [vmem:[%s411] sm:$0x1] %vm39, %v410
  %v413 = vsel %vm31, %v403, 0.0
  %v414 = vrot.slane %v413, 4
  %v415 = vadd.f32 %v413, %v414
  %v416 = vrot.slane %v415, 2
  %v417 = vadd.f32 %v415, %v416
  %v418 = vrot.slane %v417, 1
  %v419 = vadd.f32 %v417, %v418
  %v420 = vmul.f32 %v419, %v48
  %s421 = scalar_lea.vmem %s9, 1
  %422 = vst.msk [vmem:[%s421] sm:$0x1] %vm39, %v420
  %v423 = vsel %vm51, %v401, 0.0
  %424 = vadd.xlane.f32.xlu0 %v423
  %v425 = vpop.xlane.xlu0 %424
  %v426 = vmax.f32 %v425, 1.0
  %v427 = vrcp.pop %v426
  %v428 = vmul.f32 1.0, %v427
  %v430 = vsel %vm58, %v401, 0
  %v433 = vsel %vm62, %v403, 0
  %435 = vmatprep.subr.mxu0 0.0
  %436 = vmatpush1.msra.mxu0 %v433
  %437 = vmatprep.subr.mxu0 0.0
  %438 = vmatpush1.msra.mxu0 0.0
  %439 = vmatprep.subr.mxu0 0.0
  %440 = vmatpush1.msra.mxu0 0.0
  %441 = vmatprep.subr.mxu0 0.0
  %442 = vmatpush1.msra.mxu0 0.0
  %443 = vmatprep.subr.mxu0 0.0
  %444 = vmatpush1.msra.mxu0 0.0
  %445 = vmatprep.subr.mxu0 0.0
  %446 = vmatpush1.msra.mxu0 0.0
  %447 = vmatprep.subr.mxu0 0.0
  %448 = vmatpush1.msra.mxu0 0.0
  %449 = vmatprep.subr.mxu0 0.0
  %450 = vmatpush1.msra.mxu0 0.0
  %451 = vmatprep.subr.mxu0 0.0
  %452 = vmatpush1.msra.mxu0 0.0
  %453 = vmatprep.subr.mxu0 0.0
  %454 = vmatpush1.msra.mxu0 0.0
  %455 = vmatprep.subr.mxu0 0.0
  %456 = vmatpush1.msra.mxu0 0.0
  %457 = vmatprep.subr.mxu0 0.0
  %458 = vmatpush1.msra.mxu0 0.0
  %459 = vmatprep.subr.mxu0 0.0
  %460 = vmatpush1.msra.mxu0 0.0
  %461 = vmatprep.subr.mxu0 0.0
  %462 = vmatpush1.msra.mxu0 0.0
  %463 = vmatprep.subr.mxu0 0.0
  %464 = vmatpush1.msra.mxu0 0.0
  %465 = vmatprep.subr.mxu0 0.0
  %466 = vmatpush1.msra.mxu0 0.0
  %467 = vmatprep.subr.mxu0 0.0
  %468 = vmatpush1.msra.mxu0 0.0
  %469 = vmatprep.subr.mxu0 0.0
  %470 = vmatpush1.msra.mxu0 0.0
  %471 = vmatprep.subr.mxu0 0.0
  %472 = vmatpush1.msra.mxu0 0.0
  %473 = vmatprep.subr.mxu0 0.0
  %474 = vmatpush1.msra.mxu0 0.0
  %475 = vmatprep.subr.mxu0 0.0
  %476 = vmatpush1.msra.mxu0 0.0
  %477 = vmatprep.subr.mxu0 0.0
  %478 = vmatpush1.msra.mxu0 0.0
  %479 = vmatprep.subr.mxu0 0.0
  %480 = vmatpush1.msra.mxu0 0.0
  %481 = vmatprep.subr.mxu0 0.0
  %482 = vmatpush1.msra.mxu0 0.0
  %483 = vmatprep.subr.mxu0 0.0
  %484 = vmatpush1.msra.mxu0 0.0
  %485 = vmatprep.subr.mxu0 0.0
  %486 = vmatpush1.msra.mxu0 0.0
  %487 = vmatprep.subr.mxu0 0.0
  %488 = vmatpush1.msra.mxu0 0.0
  %489 = vmatprep.subr.mxu0 0.0
  %490 = vmatpush1.msra.mxu0 0.0
  %491 = vmatprep.subr.mxu0 0.0
  %492 = vmatpush1.msra.mxu0 0.0
  %493 = vmatprep.subr.mxu0 0.0
  %494 = vmatpush1.msra.mxu0 0.0
  %495 = vmatprep.subr.mxu0 0.0
  %496 = vmatpush1.msra.mxu0 0.0
  %497 = vmatprep.subr.mxu0 0.0
  %498 = vmatpush1.msra.mxu0 0.0
  %499 = vmatprep.mubr.f32.mxu0 0.0
  %500 = vmatmul.mubr.f32.gmra.mrb[0].mxu0 %v430
  %v501 = vpop.f32.mrb[0].mxu0
  %v502 = vadd.f32 0.0, %v501
  %v503 = vpop.f32.mrb[0].mxu0
  %504 = vdwg.mxu0
  %v505 = vmul.f32 %v502, %v428
  %506 = vrot.lane.b32.xlu0 %v403, 32
  %v507 = vpop.permute.xlu0 %506
  %v509 = vsel %vm140, %v505, %v507
  %v510 = vld [vmem:[%s2] sm:$0xff]
  %v511 = vld [vmem:[%s2 + $0x8] sm:$0xff]
  %v512 = vld [vmem:[%s2 + $0x10] sm:$0xff]
  %v513 = vld [vmem:[%s2 + $0x18] sm:$0xff]
  %v514 = vld [vmem:[%s2 + $0x20] sm:$0xff]
  %v515 = vld [vmem:[%s2 + $0x28] sm:$0xff]
  %v516 = vld [vmem:[%s2 + $0x30] sm:$0xff]
  %v517 = vld [vmem:[%s2 + $0x38] sm:$0xff]
  %v518 = vld [vmem:[%s3] sm:$0x1]
  %v520 = vlaneseq
  %v521 = vshrl.u32 %v520, 7
  %v522 = vsub.s32 0, %v521
  %v523 = vrot.slane %v518, %v522
  %v526 = vsel %vm157, %v509, 0
  %528 = vmatprep.subr.mxu0 0.0
  %529 = vmatpush1.msra.mxu0 %v510
  %530 = vmatprep.subr.mxu0 0.0
  %531 = vmatpush1.msra.mxu0 %v511
  %532 = vmatprep.subr.mxu0 0.0
  %533 = vmatpush1.msra.mxu0 %v512
  %534 = vmatprep.subr.mxu0 0.0
  %535 = vmatpush1.msra.mxu0 %v513
  %536 = vmatprep.subr.mxu0 0.0
  %537 = vmatpush1.msra.mxu0 %v514
  %538 = vmatprep.subr.mxu0 0.0
  %539 = vmatpush1.msra.mxu0 %v515
  %540 = vmatprep.subr.mxu0 0.0
  %541 = vmatpush1.msra.mxu0 %v516
  %542 = vmatprep.subr.mxu0 0.0
  %543 = vmatpush1.msra.mxu0 %v517
  %544 = vmatprep.subr.mxu0 0.0
  %545 = vmatpush1.msra.mxu0 0.0
  %546 = vmatprep.subr.mxu0 0.0
  %547 = vmatpush1.msra.mxu0 0.0
  %548 = vmatprep.subr.mxu0 0.0
  %549 = vmatpush1.msra.mxu0 0.0
  %550 = vmatprep.subr.mxu0 0.0
  %551 = vmatpush1.msra.mxu0 0.0
  %552 = vmatprep.subr.mxu0 0.0
  %553 = vmatpush1.msra.mxu0 0.0
  %554 = vmatprep.subr.mxu0 0.0
  %555 = vmatpush1.msra.mxu0 0.0
  %556 = vmatprep.subr.mxu0 0.0
  %557 = vmatpush1.msra.mxu0 0.0
  %558 = vmatprep.subr.mxu0 0.0
  %559 = vmatpush1.msra.mxu0 0.0
  %560 = vmatprep.subr.mxu0 0.0
  %561 = vmatpush1.msra.mxu0 0.0
  %562 = vmatprep.subr.mxu0 0.0
  %563 = vmatpush1.msra.mxu0 0.0
  %564 = vmatprep.subr.mxu0 0.0
  %565 = vmatpush1.msra.mxu0 0.0
  %566 = vmatprep.subr.mxu0 0.0
  %567 = vmatpush1.msra.mxu0 0.0
  %568 = vmatprep.subr.mxu0 0.0
  %569 = vmatpush1.msra.mxu0 0.0
  %570 = vmatprep.subr.mxu0 0.0
  %571 = vmatpush1.msra.mxu0 0.0
  %572 = vmatprep.subr.mxu0 0.0
  %573 = vmatpush1.msra.mxu0 0.0
  %574 = vmatprep.subr.mxu0 0.0
  %575 = vmatpush1.msra.mxu0 0.0
  %576 = vmatprep.subr.mxu0 0.0
  %577 = vmatpush1.msra.mxu0 0.0
  %578 = vmatprep.subr.mxu0 0.0
  %579 = vmatpush1.msra.mxu0 0.0
  %580 = vmatprep.subr.mxu0 0.0
  %581 = vmatpush1.msra.mxu0 0.0
  %582 = vmatprep.subr.mxu0 0.0
  %583 = vmatpush1.msra.mxu0 0.0
  %584 = vmatprep.subr.mxu0 0.0
  %585 = vmatpush1.msra.mxu0 0.0
  %586 = vmatprep.subr.mxu0 0.0
  %587 = vmatpush1.msra.mxu0 0.0
  %588 = vmatprep.subr.mxu0 0.0
  %589 = vmatpush1.msra.mxu0 0.0
  %590 = vmatprep.subr.mxu0 0.0
  %591 = vmatpush1.msra.mxu0 0.0
  %592 = vmatprep.mubr.f32.mxu0 0.0
  %593 = vmatmul.mubr.f32.gmra.mrb[0].mxu0 %v526
  %v594 = vpop.f32.mrb[0].mxu0
  %v595 = vadd.f32 %v523, %v594
  %v596 = vpop.f32.mrb[0].mxu0
  %597 = vdwg.mxu0
  %v598 = vmax.f32 %v595, 0.0
  %s599 = scalar_lea.vmem %s6, 4
  %600 = vst.msk [vmem:[%s599] sm:$0xf] %vm31, %v598
  %v602 = vsel %vm62, %v598, 0
  %604 = vmatprep.subr.mxu0 0.0
  %605 = vmatpush1.msra.mxu0 %v602
  %606 = vmatprep.subr.mxu0 0.0
  %607 = vmatpush1.msra.mxu0 0.0
  %608 = vmatprep.subr.mxu0 0.0
  %609 = vmatpush1.msra.mxu0 0.0
  %610 = vmatprep.subr.mxu0 0.0
  %611 = vmatpush1.msra.mxu0 0.0
  %612 = vmatprep.subr.mxu0 0.0
  %613 = vmatpush1.msra.mxu0 0.0
  %614 = vmatprep.subr.mxu0 0.0
  %615 = vmatpush1.msra.mxu0 0.0
  %616 = vmatprep.subr.mxu0 0.0
  %617 = vmatpush1.msra.mxu0 0.0
  %618 = vmatprep.subr.mxu0 0.0
  %619 = vmatpush1.msra.mxu0 0.0
  %620 = vmatprep.subr.mxu0 0.0
  %621 = vmatpush1.msra.mxu0 0.0
  %622 = vmatprep.subr.mxu0 0.0
  %623 = vmatpush1.msra.mxu0 0.0
  %624 = vmatprep.subr.mxu0 0.0
  %625 = vmatpush1.msra.mxu0 0.0
  %626 = vmatprep.subr.mxu0 0.0
  %627 = vmatpush1.msra.mxu0 0.0
  %628 = vmatprep.subr.mxu0 0.0
  %629 = vmatpush1.msra.mxu0 0.0
  %630 = vmatprep.subr.mxu0 0.0
  %631 = vmatpush1.msra.mxu0 0.0
  %632 = vmatprep.subr.mxu0 0.0
  %633 = vmatpush1.msra.mxu0 0.0
  %634 = vmatprep.subr.mxu0 0.0
  %635 = vmatpush1.msra.mxu0 0.0
  %636 = vmatprep.subr.mxu0 0.0
  %637 = vmatpush1.msra.mxu0 0.0
  %638 = vmatprep.subr.mxu0 0.0
  %639 = vmatpush1.msra.mxu0 0.0
  %640 = vmatprep.subr.mxu0 0.0
  %641 = vmatpush1.msra.mxu0 0.0
  %642 = vmatprep.subr.mxu0 0.0
  %643 = vmatpush1.msra.mxu0 0.0
  %644 = vmatprep.subr.mxu0 0.0
  %645 = vmatpush1.msra.mxu0 0.0
  %646 = vmatprep.subr.mxu0 0.0
  %647 = vmatpush1.msra.mxu0 0.0
  %648 = vmatprep.subr.mxu0 0.0
  %649 = vmatpush1.msra.mxu0 0.0
  %650 = vmatprep.subr.mxu0 0.0
  %651 = vmatpush1.msra.mxu0 0.0
  %652 = vmatprep.subr.mxu0 0.0
  %653 = vmatpush1.msra.mxu0 0.0
  %654 = vmatprep.subr.mxu0 0.0
  %655 = vmatpush1.msra.mxu0 0.0
  %656 = vmatprep.subr.mxu0 0.0
  %657 = vmatpush1.msra.mxu0 0.0
  %658 = vmatprep.subr.mxu0 0.0
  %659 = vmatpush1.msra.mxu0 0.0
  %660 = vmatprep.subr.mxu0 0.0
  %661 = vmatpush1.msra.mxu0 0.0
  %662 = vmatprep.subr.mxu0 0.0
  %663 = vmatpush1.msra.mxu0 0.0
  %664 = vmatprep.subr.mxu0 0.0
  %665 = vmatpush1.msra.mxu0 0.0
  %666 = vmatprep.subr.mxu0 0.0
  %667 = vmatpush1.msra.mxu0 0.0
  %668 = vmatprep.mubr.f32.mxu0 0.0
  %669 = vmatmul.mubr.f32.gmra.mrb[0].mxu0 %v430
  %v670 = vpop.f32.mrb[0].mxu0
  %v671 = vadd.f32 0.0, %v670
  %v672 = vpop.f32.mrb[0].mxu0
  %673 = vdwg.mxu0
  %674 = vrot.lane.b32.xlu0 %v598, 32
  %v675 = vpop.permute.xlu0 %674
  %v677 = vsel %vm140, %v671, %v675
  %v678 = vld [vmem:[%s4] sm:$0xff]
  %v679 = vld [vmem:[%s4 + $0x8] sm:$0xff]
  %v680 = vld [vmem:[%s4 + $0x10] sm:$0xff]
  %v681 = vld [vmem:[%s4 + $0x18] sm:$0xff]
  %v682 = vld [vmem:[%s4 + $0x20] sm:$0xff]
  %v683 = vld [vmem:[%s4 + $0x28] sm:$0xff]
  %v684 = vld [vmem:[%s4 + $0x30] sm:$0xff]
  %v685 = vld [vmem:[%s4 + $0x38] sm:$0xff]
  %v686 = vld [vmem:[#allocation2] sm:$0x1]
  %v688 = vlaneseq
  %v689 = vshrl.u32 %v688, 7
  %v690 = vsub.s32 0, %v689
  %v691 = vrot.slane %v686, %v690
  %v694 = vsel %vm157, %v677, 0
  %696 = vmatprep.subr.mxu0 0.0
  %697 = vmatpush1.msra.mxu0 %v678
  %698 = vmatprep.subr.mxu0 0.0
  %699 = vmatpush1.msra.mxu0 %v679
  %700 = vmatprep.subr.mxu0 0.0
  %701 = vmatpush1.msra.mxu0 %v680
  %702 = vmatprep.subr.mxu0 0.0
  %703 = vmatpush1.msra.mxu0 %v681
  %704 = vmatprep.subr.mxu0 0.0
  %705 = vmatpush1.msra.mxu0 %v682
  %706 = vmatprep.subr.mxu0 0.0
  %707 = vmatpush1.msra.mxu0 %v683
  %708 = vmatprep.subr.mxu0 0.0
  %709 = vmatpush1.msra.mxu0 %v684
  %710 = vmatprep.subr.mxu0 0.0
  %711 = vmatpush1.msra.mxu0 %v685
  %712 = vmatprep.subr.mxu0 0.0
  %713 = vmatpush1.msra.mxu0 0.0
  %714 = vmatprep.subr.mxu0 0.0
  %715 = vmatpush1.msra.mxu0 0.0
  %716 = vmatprep.subr.mxu0 0.0
  %717 = vmatpush1.msra.mxu0 0.0
  %718 = vmatprep.subr.mxu0 0.0
  %719 = vmatpush1.msra.mxu0 0.0
  %720 = vmatprep.subr.mxu0 0.0
  %721 = vmatpush1.msra.mxu0 0.0
  %722 = vmatprep.subr.mxu0 0.0
  %723 = vmatpush1.msra.mxu0 0.0
  %724 = vmatprep.subr.mxu0 0.0
  %725 = vmatpush1.msra.mxu0 0.0
  %726 = vmatprep.subr.mxu0 0.0
  %727 = vmatpush1.msra.mxu0 0.0
  %728 = vmatprep.subr.mxu0 0.0
  %729 = vmatpush1.msra.mxu0 0.0
  %730 = vmatprep.subr.mxu0 0.0
  %731 = vmatpush1.msra.mxu0 0.0
  %732 = vmatprep.subr.mxu0 0.0
  %733 = vmatpush1.msra.mxu0 0.0
  %734 = vmatprep.subr.mxu0 0.0
  %735 = vmatpush1.msra.mxu0 0.0
  %736 = vmatprep.subr.mxu0 0.0
  %737 = vmatpush1.msra.mxu0 0.0
  %738 = vmatprep.subr.mxu0 0.0
  %739 = vmatpush1.msra.mxu0 0.0
  %740 = vmatprep.subr.mxu0 0.0
  %741 = vmatpush1.msra.mxu0 0.0
  %742 = vmatprep.subr.mxu0 0.0
  %743 = vmatpush1.msra.mxu0 0.0
  %744 = vmatprep.subr.mxu0 0.0
  %745 = vmatpush1.msra.mxu0 0.0
  %746 = vmatprep.subr.mxu0 0.0
  %747 = vmatpush1.msra.mxu0 0.0
  %748 = vmatprep.subr.mxu0 0.0
  %749 = vmatpush1.msra.mxu0 0.0
  %750 = vmatprep.subr.mxu0 0.0
  %751 = vmatpush1.msra.mxu0 0.0
  %752 = vmatprep.subr.mxu0 0.0
  %753 = vmatpush1.msra.mxu0 0.0
  %754 = vmatprep.subr.mxu0 0.0
  %755 = vmatpush1.msra.mxu0 0.0
  %756 = vmatprep.subr.mxu0 0.0
  %757 = vmatpush1.msra.mxu0 0.0
  %758 = vmatprep.subr.mxu0 0.0
  %759 = vmatpush1.msra.mxu0 0.0
  %760 = vmatprep.mubr.f32.mxu0 0.0
  %761 = vmatmul.mubr.f32.gmra.mrb[0].mxu0 %v694
  %v762 = vpop.f32.mrb[0].mxu0
  %v763 = vadd.f32 %v691, %v762
  %v764 = vpop.f32.mrb[0].mxu0
  %765 = vdwg.mxu0
  %s766 = scalar_lea.vmem %s7, 4
  %767 = vst.msk [vmem:[%s766] sm:$0xf] %vm398, %v763
  // Predicated region
  $region26: #{net_forward.6} parent=0 // pred_check
    _
  $region27: #{net_forward.6} parent=0 // pred_check_branch
    %769 = sbr.rel (0) target = $region29
  $region28: #{net_forward.6} parent=0 // pred_region
    _
  $region29: #{net_forward.6} parent=0 // pred_fallthru
    _
  // Predicated region
  $region30: #{net_forward.6} parent=0 // pred_check
    _
  $region31: #{net_forward.6} parent=0 // pred_check_branch
    %771 = sbr.rel (0) target = $region33
  $region32: #{net_forward.6} parent=0 // pred_region
    _
  $region33: #{net_forward.6} parent=0 // pred_fallthru
    _
  // Predicated region
  $region34: #{net_forward.6} parent=0 // pred_check
    _
  $region35: #{net_forward.6} parent=0 // pred_check_branch
    %773 = sbr.rel (0) target = $region37
  $region36: #{net_forward.6} parent=0 // pred_region
    _
  $region37: #{net_forward.6} parent=0 // pred_fallthru
    _
  // Predicated region
  $region38: #{net_forward.6} parent=0 // pred_check
    _
  $region39: #{net_forward.6} parent=0 // pred_check_branch
    %775 = sbr.rel (0) target = $region41
  $region40: #{net_forward.6} parent=0 // pred_region
    _
  $region41: #{net_forward.6} parent=0 // pred_fallthru
    _
  // Predicated region
  $region42: #{net_forward.6} parent=0 // pred_check
    _
  $region43: #{net_forward.6} parent=0 // pred_check_branch
    %777 = sbr.rel (0) target = $region45
  $region44: #{net_forward.6} parent=0 // pred_region
    _
  $region45: #{net_forward.6} parent=0 // pred_fallthru
    _
  // Predicated region
  $region46: #{net_forward.6} parent=0 // pred_check
    _
  $region47: #{net_forward.6} parent=0 // pred_check_branch
    %779 = sbr.rel (0) target = $region49
  $region48: #{net_forward.6} parent=0 // pred_region
    _
  $region49: #{net_forward.6} parent=0 // pred_fallthru
    _
  // Predicated region
  $region50: #{net_forward.6} parent=0 // pred_check
    _
  $region51: #{net_forward.6} parent=0 // pred_check_branch
    %781 = sbr.rel (0) target = $region53
  $region52: #{net_forward.6} parent=0 // pred_region
    _
  $region53: #{net_forward.6} parent=0 // pred_fallthru
    _
  // Predicated region
  $region54: #{net_forward.6} parent=0 // pred_check
    _
  $region55: #{net_forward.6} parent=0 // pred_check_branch
    %783 = sbr.rel (0) target = $region57
  $region56: #{net_forward.6} parent=0 // pred_region
    _
  $region57: #{net_forward.6} parent=0 // pred_fallthru
    _

// kernel: net_forward.7
$region0: #{net_forward.7}
  #allocation0 [shape = 'u32[]', space=smem, size = 0x4, offset = 0x4, fixed_abs, tag = 'smem constant byte address 0x4 - core index']
  #allocation1 [shape = 'u32[144,128]{1,0:T(1,128)}', space=vmem, size = 0x12000, scoped, tag = 'internal scratch']
  #allocation2 [shape = 'f32[1,1]{1,0:T(1,128)S(1)}', space=vmem, size = 0x200, scoped, tag = 'scoped memory for net_forward.7']
  %s0 = inlined_call_operand.vmem [shape: f32[2,2,32], index: 0, kind: input, shape index: {}]
  %s1 = inlined_call_operand.vmem [shape: f32[2,32], index: 1, kind: input, shape index: {}]
  %s2 = inlined_call_operand.vmem [shape: f32[2,32], index: 2, kind: input, shape index: {}]
  %s3 = inlined_call_operand.vmem [shape: f32[2,32], index: 3, kind: input, shape index: {}]
  %s4 = inlined_call_operand.vmem [shape: f32[2,32], index: 4, kind: input, shape index: {}]
  %s5 = inlined_call_operand.vmem [shape: f32[32,32], index: 5, kind: input, shape index: {}]
  %s6 = inlined_call_operand.vmem [shape: f32[32,32], index: 6, kind: input, shape index: {}]
  %s7 = inlined_call_operand.vmem [shape: f32[1,32], index: 7, kind: input, shape index: {}]
  %s8 = inlined_call_operand.vmem [shape: f32[32,16], index: 8, kind: input, shape index: {}]
  %s9 = inlined_call_operand.vmem [shape: f32[1,16], index: 9, kind: input, shape index: {}]
  %s10 = inlined_call_operand.vmem [shape: f32[16,1], index: 10, kind: input, shape index: {}]
  %s11 = inlined_call_operand.<no memory space> [shape: f32[1,1], index: 11, kind: input, shape index: {}]
  %s12 = inlined_call_operand.vmem [shape: f32[2,1], index: 12, kind: output, shape index: {}]
  %s13 = sld [smem:[#allocation0]]
  $region58: #{net_forward.7} parent=0
    _
  %s15 = ssub.s32 1, %s13
  %s16 = scalar_select 0, %s15, %s13
  %v17 = vstv %s11
  %18 = vst [vmem:[#allocation2] sm:$0x1] %v17
  // Predicated region
  $region2: #{net_forward.7} parent=0 // pred_check
    _
  $region3: #{net_forward.7} parent=0 // pred_check_branch
    %20 = sbr.rel (0) target = $region5
  $region4: #{net_forward.7} parent=0 // pred_region
    _
  $region5: #{net_forward.7} parent=0 // pred_fallthru
    _
  // Predicated region
  $region6: #{net_forward.7} parent=0 // pred_check
    _
  $region7: #{net_forward.7} parent=0 // pred_check_branch
    %22 = sbr.rel (0) target = $region9
  $region8: #{net_forward.7} parent=0 // pred_region
    _
  $region9: #{net_forward.7} parent=0 // pred_fallthru
    _
  // Predicated region
  $region10: #{net_forward.7} parent=0 // pred_check
    _
  $region11: #{net_forward.7} parent=0 // pred_check_branch
    %24 = sbr.rel (0) target = $region13
  $region12: #{net_forward.7} parent=0 // pred_region
    _
  $region13: #{net_forward.7} parent=0 // pred_fallthru
    _
  // Predicated region
  $region14: #{net_forward.7} parent=0 // pred_check
    _
  $region15: #{net_forward.7} parent=0 // pred_check_branch
    %26 = sbr.rel (0) target = $region17
  $region16: #{net_forward.7} parent=0 // pred_region
    _
  $region17: #{net_forward.7} parent=0 // pred_fallthru
    _
  // Predicated region
  $region18: #{net_forward.7} parent=0 // pred_check
    _
  $region19: #{net_forward.7} parent=0 // pred_check_branch
    %28 = sbr.rel (0) target = $region21
  $region20: #{net_forward.7} parent=0 // pred_region
    _
  $region21: #{net_forward.7} parent=0 // pred_fallthru
    _
  // Predicated region
  $region22: #{net_forward.7} parent=0 // pred_check
    _
  $region23: #{net_forward.7} parent=0 // pred_check_branch
    %30 = sbr.rel (0) target = $region25
  $region24: #{net_forward.7} parent=0 // pred_region
    _
  $region25: #{net_forward.7} parent=0 // pred_fallthru
    _
  // Predicated region
  $region26: #{net_forward.7} parent=0 // pred_check
    _
  $region27: #{net_forward.7} parent=0 // pred_check_branch
    %32 = sbr.rel (0) target = $region29
  $region28: #{net_forward.7} parent=0 // pred_region
    _
  $region29: #{net_forward.7} parent=0 // pred_fallthru
    _
  // Predicated region
  $region30: #{net_forward.7} parent=0 // pred_check
    _
  $region31: #{net_forward.7} parent=0 // pred_check_branch
    %34 = sbr.rel (0) target = $region33
  $region32: #{net_forward.7} parent=0 // pred_region
    _
  $region33: #{net_forward.7} parent=0 // pred_fallthru
    _
  // Predicated region
  $region34: #{net_forward.7} parent=0 // pred_check
    _
  $region35: #{net_forward.7} parent=0 // pred_check_branch
    %36 = sbr.rel (0) target = $region37
  $region36: #{net_forward.7} parent=0 // pred_region
    _
  $region37: #{net_forward.7} parent=0 // pred_fallthru
    _
  // Predicated region
  $region38: #{net_forward.7} parent=0 // pred_check
    _
  $region39: #{net_forward.7} parent=0 // pred_check_branch
    %38 = sbr.rel (0) target = $region41
  $region40: #{net_forward.7} parent=0 // pred_region
    _
  $region41: #{net_forward.7} parent=0 // pred_fallthru
    _
  // Predicated region
  $region42: #{net_forward.7} parent=0 // pred_check
    _
  $region43: #{net_forward.7} parent=0 // pred_check_branch
    %40 = sbr.rel (0) target = $region45
  $region44: #{net_forward.7} parent=0 // pred_region
    _
  $region45: #{net_forward.7} parent=0 // pred_fallthru
    _
  // Predicated region
  $region46: #{net_forward.7} parent=0 // pred_check
    _
  $region47: #{net_forward.7} parent=0 // pred_check_branch
    %42 = sbr.rel (0) target = $region49
  $region48: #{net_forward.7} parent=0 // pred_region
    _
  $region49: #{net_forward.7} parent=0 // pred_fallthru
    _
  %v43 = vld [vmem:[%s0] sm:$0x3]
  %vm44 = vcmask 254976
  %v45 = vsel %vm44, %v43, -inf
  %v46 = vrot.slane %v45, 4
  %v47 = vmax.f32 %v45, %v46
  %v48 = vrot.slane %v47, 2
  %v49 = vmax.f32 %v47, %v48
  %v50 = vrot.slane %v49, 1
  %v51 = vmax.f32 %v49, %v50
  %v52 = vsel %vm44, %v43, 0.0
  %v53 = vrot.slane %v52, 4
  %v54 = vadd.f32 %v52, %v53
  %v55 = vrot.slane %v54, 2
  %v56 = vadd.f32 %v54, %v55
  %v57 = vrot.slane %v56, 1
  %v58 = vadd.f32 %v56, %v57
  %v59 = vrcp.pop 2.0
  %v60 = vmul.f32 %v58, %v59
  %s61 = scalar_lea.vmem %s0, 2
  %v62 = vld [vmem:[%s61] sm:$0x3]
  %v63 = vsel %vm44, %v62, -inf
  %v64 = vrot.slane %v63, 4
  %v65 = vmax.f32 %v63, %v64
  %v66 = vrot.slane %v65, 2
  %v67 = vmax.f32 %v65, %v66
  %v68 = vrot.slane %v67, 1
  %v69 = vmax.f32 %v67, %v68
  %v70 = vsel %vm44, %v62, 0.0
  %v71 = vrot.slane %v70, 4
  %v72 = vadd.f32 %v70, %v71
  %v73 = vrot.slane %v72, 2
  %v74 = vadd.f32 %v72, %v73
  %v75 = vrot.slane %v74, 1
  %v76 = vadd.f32 %v74, %v75
  %v77 = vmul.f32 %v76, %v59
  %vm78 = vcmask 1040384
  %v79 = vsel %vm78, %v51, %v69
  %v80 = vsel %vm78, %v60, %v77
  %v81 = vld [vmem:[%s1] sm:$0x3]
  %v82 = vld [vmem:[%s3] sm:$0x3]
  %v83 = vadd.f32 %v81, %v82
  %v84 = vadd.f32 %v83, %v79
  %v85 = vld [vmem:[%s2] sm:$0x3]
  %v86 = vld [vmem:[%s4] sm:$0x3]
  %v87 = vadd.f32 %v85, %v86
  %v88 = vadd.f32 %v87, %v80
  %v89 = vld [vmem:[%s5] sm:$0xff]
  %v90 = vld [vmem:[%s5 + $0x8] sm:$0xff]
  %v91 = vld [vmem:[%s5 + $0x10] sm:$0xff]
  %v92 = vld [vmem:[%s5 + $0x18] sm:$0xff]
  %v93 = vld [vmem:[%s6] sm:$0xff]
  %v94 = vld [vmem:[%s6 + $0x8] sm:$0xff]
  %v95 = vld [vmem:[%s6 + $0x10] sm:$0xff]
  %v96 = vld [vmem:[%s6 + $0x18] sm:$0xff]
  %vm97 = vcmask 261120
  %v99 = vsel %vm97, %v88, 0
  %101 = vmatprep.subr.mxu0 0.0
  %102 = vmatpush1.msra.mxu0 %v93
  %103 = vmatprep.subr.mxu0 0.0
  %104 = vmatpush1.msra.mxu0 %v94
  %105 = vmatprep.subr.mxu0 0.0
  %106 = vmatpush1.msra.mxu0 %v95
  %107 = vmatprep.subr.mxu0 0.0
  %108 = vmatpush1.msra.mxu0 %v96
  %109 = vmatprep.subr.mxu0 0.0
  %110 = vmatpush1.msra.mxu0 0.0
  %111 = vmatprep.subr.mxu0 0.0
  %112 = vmatpush1.msra.mxu0 0.0
  %113 = vmatprep.subr.mxu0 0.0
  %114 = vmatpush1.msra.mxu0 0.0
  %115 = vmatprep.subr.mxu0 0.0
  %116 = vmatpush1.msra.mxu0 0.0
  %117 = vmatprep.subr.mxu0 0.0
  %118 = vmatpush1.msra.mxu0 0.0
  %119 = vmatprep.subr.mxu0 0.0
  %120 = vmatpush1.msra.mxu0 0.0
  %121 = vmatprep.subr.mxu0 0.0
  %122 = vmatpush1.msra.mxu0 0.0
  %123 = vmatprep.subr.mxu0 0.0
  %124 = vmatpush1.msra.mxu0 0.0
  %125 = vmatprep.subr.mxu0 0.0
  %126 = vmatpush1.msra.mxu0 0.0
  %127 = vmatprep.subr.mxu0 0.0
  %128 = vmatpush1.msra.mxu0 0.0
  %129 = vmatprep.subr.mxu0 0.0
  %130 = vmatpush1.msra.mxu0 0.0
  %131 = vmatprep.subr.mxu0 0.0
  %132 = vmatpush1.msra.mxu0 0.0
  %133 = vmatprep.subr.mxu0 0.0
  %134 = vmatpush1.msra.mxu0 0.0
  %135 = vmatprep.subr.mxu0 0.0
  %136 = vmatpush1.msra.mxu0 0.0
  %137 = vmatprep.subr.mxu0 0.0
  %138 = vmatpush1.msra.mxu0 0.0
  %139 = vmatprep.subr.mxu0 0.0
  %140 = vmatpush1.msra.mxu0 0.0
  %141 = vmatprep.subr.mxu0 0.0
  %142 = vmatpush1.msra.mxu0 0.0
  %143 = vmatprep.subr.mxu0 0.0
  %144 = vmatpush1.msra.mxu0 0.0
  %145 = vmatprep.subr.mxu0 0.0
  %146 = vmatpush1.msra.mxu0 0.0
  %147 = vmatprep.subr.mxu0 0.0
  %148 = vmatpush1.msra.mxu0 0.0
  %149 = vmatprep.subr.mxu0 0.0
  %150 = vmatpush1.msra.mxu0 0.0
  %151 = vmatprep.subr.mxu0 0.0
  %152 = vmatpush1.msra.mxu0 0.0
  %153 = vmatprep.subr.mxu0 0.0
  %154 = vmatpush1.msra.mxu0 0.0
  %155 = vmatprep.subr.mxu0 0.0
  %156 = vmatpush1.msra.mxu0 0.0
  %157 = vmatprep.subr.mxu0 0.0
  %158 = vmatpush1.msra.mxu0 0.0
  %159 = vmatprep.subr.mxu0 0.0
  %160 = vmatpush1.msra.mxu0 0.0
  %161 = vmatprep.subr.mxu0 0.0
  %162 = vmatpush1.msra.mxu0 0.0
  %163 = vmatprep.subr.mxu0 0.0
  %164 = vmatpush1.msra.mxu0 0.0
  %165 = vmatprep.mubr.f32.mxu0 0.0
  %166 = vmatmul.mubr.f32.gmra.mrb[0].mxu0 %v99
  %v167 = vpop.f32.mrb[0].mxu0
  %v168 = vadd.f32 0.0, %v167
  %v169 = vpop.f32.mrb[0].mxu0
  %170 = vdwg.mxu0
  %v172 = vsel %vm97, %v84, 0
  %174 = vmatprep.subr.mxu0 0.0
  %175 = vmatpush1.msra.mxu0 %v89
  %176 = vmatprep.subr.mxu0 0.0
  %177 = vmatpush1.msra.mxu0 %v90
  %178 = vmatprep.subr.mxu0 0.0
  %179 = vmatpush1.msra.mxu0 %v91
  %180 = vmatprep.subr.mxu0 0.0
  %181 = vmatpush1.msra.mxu0 %v92
  %182 = vmatprep.subr.mxu0 0.0
  %183 = vmatpush1.msra.mxu0 0.0
  %184 = vmatprep.subr.mxu0 0.0
  %185 = vmatpush1.msra.mxu0 0.0
  %186 = vmatprep.subr.mxu0 0.0
  %187 = vmatpush1.msra.mxu0 0.0
  %188 = vmatprep.subr.mxu0 0.0
  %189 = vmatpush1.msra.mxu0 0.0
  %190 = vmatprep.subr.mxu0 0.0
  %191 = vmatpush1.msra.mxu0 0.0
  %192 = vmatprep.subr.mxu0 0.0
  %193 = vmatpush1.msra.mxu0 0.0
  %194 = vmatprep.subr.mxu0 0.0
  %195 = vmatpush1.msra.mxu0 0.0
  %196 = vmatprep.subr.mxu0 0.0
  %197 = vmatpush1.msra.mxu0 0.0
  %198 = vmatprep.subr.mxu0 0.0
  %199 = vmatpush1.msra.mxu0 0.0
  %200 = vmatprep.subr.mxu0 0.0
  %201 = vmatpush1.msra.mxu0 0.0
  %202 = vmatprep.subr.mxu0 0.0
  %203 = vmatpush1.msra.mxu0 0.0
  %204 = vmatprep.subr.mxu0 0.0
  %205 = vmatpush1.msra.mxu0 0.0
  %206 = vmatprep.subr.mxu0 0.0
  %207 = vmatpush1.msra.mxu0 0.0
  %208 = vmatprep.subr.mxu0 0.0
  %209 = vmatpush1.msra.mxu0 0.0
  %210 = vmatprep.subr.mxu0 0.0
  %211 = vmatpush1.msra.mxu0 0.0
  %212 = vmatprep.subr.mxu0 0.0
  %213 = vmatpush1.msra.mxu0 0.0
  %214 = vmatprep.subr.mxu0 0.0
  %215 = vmatpush1.msra.mxu0 0.0
  %216 = vmatprep.subr.mxu0 0.0
  %217 = vmatpush1.msra.mxu0 0.0
  %218 = vmatprep.subr.mxu0 0.0
  %219 = vmatpush1.msra.mxu0 0.0
  %220 = vmatprep.subr.mxu0 0.0
  %221 = vmatpush1.msra.mxu0 0.0
  %222 = vmatprep.subr.mxu0 0.0
  %223 = vmatpush1.msra.mxu0 0.0
  %224 = vmatprep.subr.mxu0 0.0
  %225 = vmatpush1.msra.mxu0 0.0
  %226 = vmatprep.subr.mxu0 0.0
  %227 = vmatpush1.msra.mxu0 0.0
  %228 = vmatprep.subr.mxu0 0.0
  %229 = vmatpush1.msra.mxu0 0.0
  %230 = vmatprep.subr.mxu0 0.0
  %231 = vmatpush1.msra.mxu0 0.0
  %232 = vmatprep.subr.mxu0 0.0
  %233 = vmatpush1.msra.mxu0 0.0
  %234 = vmatprep.subr.mxu0 0.0
  %235 = vmatpush1.msra.mxu0 0.0
  %236 = vmatprep.subr.mxu0 0.0
  %237 = vmatpush1.msra.mxu0 0.0
  %238 = vmatprep.mubr.f32.mxu0 0.0
  %239 = vmatmul.mubr.f32.gmra.mrb[0].mxu0 %v172
  %v240 = vpop.f32.mrb[0].mxu0
  %v241 = vadd.f32 %v168, %v240
  %v242 = vpop.f32.mrb[0].mxu0
  %243 = vdwg.mxu0
  %v244 = vld [vmem:[%s7] sm:$0x1]
  %v246 = vlaneseq
  %v247 = vshrl.u32 %v246, 7
  %v248 = vsub.s32 0, %v247
  %v249 = vrot.slane %v244, %v248
  %v251 = vadd.f32 %v241, %v249
  %v252 = vmax.f32 %v251, 0.0
  %v253 = vld [vmem:[%s8] sm:$0xff]
  %v254 = vld [vmem:[%s8 + $0x8] sm:$0xff]
  %v255 = vld [vmem:[%s8 + $0x10] sm:$0xff]
  %v256 = vld [vmem:[%s8 + $0x18] sm:$0xff]
  %v257 = vld [vmem:[%s9] sm:$0x1]
  %v259 = vlaneseq
  %v260 = vshrl.u32 %v259, 7
  %v261 = vsub.s32 0, %v260
  %v262 = vrot.slane %v257, %v261
  %v265 = vsel %vm97, %v252, 0
  %267 = vmatprep.subr.mxu0 0.0
  %268 = vmatpush1.msra.mxu0 %v253
  %269 = vmatprep.subr.mxu0 0.0
  %270 = vmatpush1.msra.mxu0 %v254
  %271 = vmatprep.subr.mxu0 0.0
  %272 = vmatpush1.msra.mxu0 %v255
  %273 = vmatprep.subr.mxu0 0.0
  %274 = vmatpush1.msra.mxu0 %v256
  %275 = vmatprep.subr.mxu0 0.0
  %276 = vmatpush1.msra.mxu0 0.0
  %277 = vmatprep.subr.mxu0 0.0
  %278 = vmatpush1.msra.mxu0 0.0
  %279 = vmatprep.subr.mxu0 0.0
  %280 = vmatpush1.msra.mxu0 0.0
  %281 = vmatprep.subr.mxu0 0.0
  %282 = vmatpush1.msra.mxu0 0.0
  %283 = vmatprep.subr.mxu0 0.0
  %284 = vmatpush1.msra.mxu0 0.0
  %285 = vmatprep.subr.mxu0 0.0
  %286 = vmatpush1.msra.mxu0 0.0
  %287 = vmatprep.subr.mxu0 0.0
  %288 = vmatpush1.msra.mxu0 0.0
  %289 = vmatprep.subr.mxu0 0.0
  %290 = vmatpush1.msra.mxu0 0.0
  %291 = vmatprep.subr.mxu0 0.0
  %292 = vmatpush1.msra.mxu0 0.0
  %293 = vmatprep.subr.mxu0 0.0
  %294 = vmatpush1.msra.mxu0 0.0
  %295 = vmatprep.subr.mxu0 0.0
  %296 = vmatpush1.msra.mxu0 0.0
  %297 = vmatprep.subr.mxu0 0.0
  %298 = vmatpush1.msra.mxu0 0.0
  %299 = vmatprep.subr.mxu0 0.0
  %300 = vmatpush1.msra.mxu0 0.0
  %301 = vmatprep.subr.mxu0 0.0
  %302 = vmatpush1.msra.mxu0 0.0
  %303 = vmatprep.subr.mxu0 0.0
  %304 = vmatpush1.msra.mxu0 0.0
  %305 = vmatprep.subr.mxu0 0.0
  %306 = vmatpush1.msra.mxu0 0.0
  %307 = vmatprep.subr.mxu0 0.0
  %308 = vmatpush1.msra.mxu0 0.0
  %309 = vmatprep.subr.mxu0 0.0
  %310 = vmatpush1.msra.mxu0 0.0
  %311 = vmatprep.subr.mxu0 0.0
  %312 = vmatpush1.msra.mxu0 0.0
  %313 = vmatprep.subr.mxu0 0.0
  %314 = vmatpush1.msra.mxu0 0.0
  %315 = vmatprep.subr.mxu0 0.0
  %316 = vmatpush1.msra.mxu0 0.0
  %317 = vmatprep.subr.mxu0 0.0
  %318 = vmatpush1.msra.mxu0 0.0
  %319 = vmatprep.subr.mxu0 0.0
  %320 = vmatpush1.msra.mxu0 0.0
  %321 = vmatprep.subr.mxu0 0.0
  %322 = vmatpush1.msra.mxu0 0.0
  %323 = vmatprep.subr.mxu0 0.0
  %324 = vmatpush1.msra.mxu0 0.0
  %325 = vmatprep.subr.mxu0 0.0
  %326 = vmatpush1.msra.mxu0 0.0
  %327 = vmatprep.subr.mxu0 0.0
  %328 = vmatpush1.msra.mxu0 0.0
  %329 = vmatprep.subr.mxu0 0.0
  %330 = vmatpush1.msra.mxu0 0.0
  %331 = vmatprep.mubr.f32.mxu0 0.0
  %332 = vmatmul.mubr.f32.gmra.mrb[0].mxu0 %v265
  %v333 = vpop.f32.mrb[0].mxu0
  %v334 = vadd.f32 %v262, %v333
  %v335 = vpop.f32.mrb[0].mxu0
  %336 = vdwg.mxu0
  %v337 = vmax.f32 %v334, 0.0
  %v338 = vld [vmem:[%s10] sm:$0xff]
  %v339 = vld [vmem:[%s10 + $0x8] sm:$0xff]
  %v340 = vld [vmem:[#allocation2] sm:$0x1]
  %v342 = vlaneseq
  %v343 = vshrl.u32 %v342, 7
  %v344 = vsub.s32 0, %v343
  %v345 = vrot.slane %v340, %v344
  %vm347 = vcmask 130048
  %v349 = vsel %vm347, %v337, 0
  %351 = vmatprep.subr.mxu0 0.0
  %352 = vmatpush1.msra.mxu0 %v338
  %353 = vmatprep.subr.mxu0 0.0
  %354 = vmatpush1.msra.mxu0 %v339
  %355 = vmatprep.subr.mxu0 0.0
  %356 = vmatpush1.msra.mxu0 0.0
  %357 = vmatprep.subr.mxu0 0.0
  %358 = vmatpush1.msra.mxu0 0.0
  %359 = vmatprep.subr.mxu0 0.0
  %360 = vmatpush1.msra.mxu0 0.0
  %361 = vmatprep.subr.mxu0 0.0
  %362 = vmatpush1.msra.mxu0 0.0
  %363 = vmatprep.subr.mxu0 0.0
  %364 = vmatpush1.msra.mxu0 0.0
  %365 = vmatprep.subr.mxu0 0.0
  %366 = vmatpush1.msra.mxu0 0.0
  %367 = vmatprep.subr.mxu0 0.0
  %368 = vmatpush1.msra.mxu0 0.0
  %369 = vmatprep.subr.mxu0 0.0
  %370 = vmatpush1.msra.mxu0 0.0
  %371 = vmatprep.subr.mxu0 0.0
  %372 = vmatpush1.msra.mxu0 0.0
  %373 = vmatprep.subr.mxu0 0.0
  %374 = vmatpush1.msra.mxu0 0.0
  %375 = vmatprep.subr.mxu0 0.0
  %376 = vmatpush1.msra.mxu0 0.0
  %377 = vmatprep.subr.mxu0 0.0
  %378 = vmatpush1.msra.mxu0 0.0
  %379 = vmatprep.subr.mxu0 0.0
  %380 = vmatpush1.msra.mxu0 0.0
  %381 = vmatprep.subr.mxu0 0.0
  %382 = vmatpush1.msra.mxu0 0.0
  %383 = vmatprep.subr.mxu0 0.0
  %384 = vmatpush1.msra.mxu0 0.0
  %385 = vmatprep.subr.mxu0 0.0
  %386 = vmatpush1.msra.mxu0 0.0
  %387 = vmatprep.subr.mxu0 0.0
  %388 = vmatpush1.msra.mxu0 0.0
  %389 = vmatprep.subr.mxu0 0.0
  %390 = vmatpush1.msra.mxu0 0.0
  %391 = vmatprep.subr.mxu0 0.0
  %392 = vmatpush1.msra.mxu0 0.0
  %393 = vmatprep.subr.mxu0 0.0
  %394 = vmatpush1.msra.mxu0 0.0
  %395 = vmatprep.subr.mxu0 0.0
  %396 = vmatpush1.msra.mxu0 0.0
  %397 = vmatprep.subr.mxu0 0.0
  %398 = vmatpush1.msra.mxu0 0.0
  %399 = vmatprep.subr.mxu0 0.0
  %400 = vmatpush1.msra.mxu0 0.0
  %401 = vmatprep.subr.mxu0 0.0
  %402 = vmatpush1.msra.mxu0 0.0
  %403 = vmatprep.subr.mxu0 0.0
  %404 = vmatpush1.msra.mxu0 0.0
  %405 = vmatprep.subr.mxu0 0.0
  %406 = vmatpush1.msra.mxu0 0.0
  %407 = vmatprep.subr.mxu0 0.0
  %408 = vmatpush1.msra.mxu0 0.0
  %409 = vmatprep.subr.mxu0 0.0
  %410 = vmatpush1.msra.mxu0 0.0
  %411 = vmatprep.subr.mxu0 0.0
  %412 = vmatpush1.msra.mxu0 0.0
  %413 = vmatprep.subr.mxu0 0.0
  %414 = vmatpush1.msra.mxu0 0.0
  %415 = vmatprep.mubr.f32.mxu0 0.0
  %416 = vmatmul.mubr.f32.gmra.mrb[0].mxu0 %v349
  %v417 = vpop.f32.mrb[0].mxu0
  %v418 = vadd.f32 %v345, %v417
  %v419 = vpop.f32.mrb[0].mxu0
  %420 = vdwg.mxu0
  %vm421 = vcmask 1024
  %422 = vst.msk [vmem:[%s12] sm:$0x3] %vm421, %v418
  // Predicated region
  $region50: #{net_forward.7} parent=0 // pred_check
    _
  $region51: #{net_forward.7} parent=0 // pred_check_branch
    %424 = sbr.rel (0) target = $region53
  $region52: #{net_forward.7} parent=0 // pred_region
    _
  $region53: #{net_forward.7} parent=0 // pred_fallthru
    _
  // Predicated region
  $region54: #{net_forward.7} parent=0 // pred_check
    _
  $region55: #{net_forward.7} parent=0 // pred_check_branch
    %426 = sbr.rel (0) target = $region57
  $region56: #{net_forward.7} parent=0 // pred_region
    _
  $region57: #{net_forward.7} parent=0 // pred_fallthru
    _

</llo_original>
